<compile_context>
chip_gen: v7x
topology: tpu7x:2x2x1
jax: 0.10.0
libtpu: 0.0.40
codegen_flags: <defaults>
</compile_context>

<pallas_src>
import math
import functools

import jax
import jax.numpy as jnp
from jax.experimental import pallas as pl
from jax.experimental.pallas import tpu as pltpu


# ----------------------------------------------------------------------------
# In-kernel helpers (operate on loaded jnp arrays, traced inside the kernel)
# ----------------------------------------------------------------------------
def _layernorm(x, gamma, beta, eps=1e-5):
    # PyTorch nn.LayerNorm over the last dim, biased variance, eps=1e-5.
    mu = jnp.mean(x, axis=-1, keepdims=True)
    var = jnp.mean((x - mu) ** 2, axis=-1, keepdims=True)
    return (x - mu) * jax.lax.rsqrt(var + eps) * gamma + beta


def _split_heads(x, bt, s, H, dh):
    # (bt*s, H*dh) -> (H*bt, s, dh); batch index of the result = h*bt + b.
    # Static lane slices + leading-dim reshapes + major-axis concat only.
    return jnp.concatenate(
        [x[:, h * dh:(h + 1) * dh].reshape(bt, s, dh) for h in range(H)],
        axis=0)


def _merge_heads(x, bt, s, H, dh):
    # (H*bt, s, dh) -> (bt*s, H*dh); inverse of _split_heads.
    return jnp.concatenate(
        [x[h * bt:(h + 1) * bt].reshape(bt * s, dh) for h in range(H)],
        axis=-1)


def _mha(q_rows, kv_rows, bias, wq, bq, wk, bk, wv, bv, wo, bo,
         *, bt, sq, skv, H, dq, dv, scale):
    """Multi-head attention with fused lane-dense projections.

    q_rows : (bt*sq, D)  bf16   kv_rows: (bt*skv, D) bf16
    bias   : additive f32, broadcastable against (H, bt, sq, skv)
    wq/wk  : (D, H*dq) bf16     bq/bk: (1, H*dq) f32
    wv     : (D, H*dv) bf16     bv   : (1, H*dv) f32
    wo     : (H*dv, D) bf16     bo   : (1, D)    f32
    """
    nq = bt * sq

    # Fused projections: single 2-D matmuls with N = H*dh output lanes.
    Q = (jnp.dot(q_rows, wq, preferred_element_type=jnp.float32) + bq) * scale
    K = jnp.dot(kv_rows, wk, preferred_element_type=jnp.float32) + bk
    V = jnp.dot(kv_rows, wv, preferred_element_type=jnp.float32) + bv

    # Head-major 3-D views (H*bt, s, dh) for the batched score/context einsums.
    Qh = _split_heads(Q.astype(jnp.bfloat16), bt, sq, H, dq)
    Kh = _split_heads(K.astype(jnp.bfloat16), bt, skv, H, dq)
    Vh = _split_heads(V.astype(jnp.bfloat16), bt, skv, H, dv)

    # Scores for all (head, batch) pairs in one batched matmul; bias added once.
    s = jnp.einsum('bqd,bkd->bqk', Qh, Kh,
                   preferred_element_type=jnp.float32)          # (H*bt, sq, skv)
    s = s.reshape(H, bt, sq, skv) + bias[None]                  # broadcast over H

    m = jnp.max(s, axis=-1, keepdims=True)
    e = jnp.exp(s - m)
    p = e * pl.reciprocal(jnp.sum(e, axis=-1, keepdims=True), approx=True)
    p = p.reshape(H * bt, sq, skv).astype(jnp.bfloat16)

    ctx = jnp.einsum('bqk,bkd->bqd', p, Vh,
                     preferred_element_type=jnp.float32)        # (H*bt, sq, dv)

    # Single fused output projection: (nq, H*dv) @ (H*dv, D).
    ctx = _merge_heads(ctx.astype(jnp.bfloat16), bt, sq, H, dv)  # (nq, H*dv)
    return jnp.dot(ctx, wo, preferred_element_type=jnp.float32) + bo


# ----------------------------------------------------------------------------
# Pallas kernel: full decoder block for a tile of `bt` batch elements
# ----------------------------------------------------------------------------
def decoder_block_kernel(
    x_ref, xmask_ref, mem_ref, memmask_ref,
    s_wq, s_bq, s_wk, s_bk, s_wv, s_bv, s_wo, s_bo,
    c_wq, c_bq, c_wk, c_bk, c_wv, c_bv, c_wo, c_bo,
    f_w1, f_b1, f_w2, f_b2,
    ln1_g, ln1_b, ln2_g, ln2_b,
    out_ref,
    *, num_heads, d_queries, d_values):
    bt, sq, D = x_ref.shape
    sm = mem_ref.shape[1]
    H, dq, dv = num_heads, d_queries, d_values
    scale = 1.0 / math.sqrt(d_queries)

    x_bf = x_ref[...].reshape(bt * sq, D)        # bf16 (bt*Sq, D)
    mem_bf = mem_ref[...].reshape(bt * sm, D)    # bf16 (bt*Sm, D)
    x = x_bf.astype(jnp.float32)                 # f32 for residual / LN

    neg = jnp.float32(-1e9)
    xmask = xmask_ref[...]                       # (bt, 1, Sq) 1.0 = valid
    memmask = memmask_ref[...]                   # (bt, 1, Sm)

    # Combined (padding & causal) additive biases -- one batched jnp.where each.
    row = jax.lax.broadcasted_iota(jnp.int32, (sq, sq), 0)
    col = jax.lax.broadcasted_iota(jnp.int32, (sq, sq), 1)
    causal_ok = row >= col                                       # (Sq, Sq)
    self_bias = jnp.where((xmask > 0.5) & causal_ok[None], 0.0, neg)  # (bt,Sq,Sq)
    cross_bias = jnp.where(memmask > 0.5, 0.0, neg)                   # (bt,1,Sm)

    # --- masked (causal) self-attention + dropout(identity) + residual + LN1
    h = _mha(x_bf, x_bf, self_bias,
             s_wq[...], s_bq[...], s_wk[...], s_bk[...],
             s_wv[...], s_bv[...], s_wo[...], s_bo[...],
             bt=bt, sq=sq, skv=sq, H=H, dq=dq, dv=dv, scale=scale)
    h = _layernorm(h + x, ln1_g[...], ln1_b[...])

    # --- cross-attention over memory + dropout(identity) + residual + LN2
    c = _mha(h.astype(jnp.bfloat16), mem_bf, cross_bias,
             c_wq[...], c_bq[...], c_wk[...], c_bk[...],
             c_wv[...], c_bv[...], c_wo[...], c_bo[...],
             bt=bt, sq=sq, skv=sm, H=H, dq=dq, dv=dv, scale=scale)
    c = _layernorm(c + h, ln2_g[...], ln2_b[...])

    # --- position-wise FFN + dropout(identity) + residual + LN2 (re-used,
    #     exactly as the reference module does; ln_3 is never applied)
    ff = jnp.dot(c.astype(jnp.bfloat16), f_w1[...],
                 preferred_element_type=jnp.float32) + f_b1[...]
    ff = jnp.maximum(ff, 0.0)
    ff = jnp.dot(ff.astype(jnp.bfloat16), f_w2[...],
                 preferred_element_type=jnp.float32) + f_b2[...]
    out = _layernorm(ff + c, ln2_g[...], ln2_b[...])

    out_ref[...] = out.reshape(bt, sq, D).astype(out_ref.dtype)


# ----------------------------------------------------------------------------
# Wrapper
# ----------------------------------------------------------------------------
def decoder_block(x, x_mask, mem, mem_mask, weights, *,
                  num_heads, d_queries, d_values, batch_block=None):
    B, Sq, D = x.shape
    _, Sm, _ = mem.shape

    bt = batch_block
    if bt is None:
        # Single-TensorCore chips (v5e/v6e): one fused grid step (no serial
        # loop overhead, full sublane fill).  Only split into 2 "parallel"
        # steps when the chip has two TensorCores (v7x).
        try:
            kind = jax.devices()[0].device_kind.lower()
        except Exception:  # pragma: no cover - defensive
            kind = ""
        if "v7" in kind and B % 2 == 0 and B >= 2:
            bt = B // 2
        else:
            bt = B
    assert B % bt == 0, "batch must be divisible by the batch tile"
    grid_b = B // bt

    xm = x_mask.reshape(B, 1, Sq).astype(jnp.float32)
    mm = mem_mask.reshape(B, 1, Sm).astype(jnp.float32)

    (s_wq, s_bq, s_wk, s_bk, s_wv, s_bv, s_wo, s_bo,
     c_wq, c_bq, c_wk, c_bk, c_wv, c_bv, c_wo, c_bo,
     f_w1, f_b1, f_w2, f_b2,
     ln1_g, ln1_b, ln2_g, ln2_b) = weights

    bf, f32 = jnp.bfloat16, jnp.float32
    params = [
        s_wq.astype(bf), s_bq.astype(f32), s_wk.astype(bf), s_bk.astype(f32),
        s_wv.astype(bf), s_bv.astype(f32), s_wo.astype(bf), s_bo.astype(f32),
        c_wq.astype(bf), c_bq.astype(f32), c_wk.astype(bf), c_bk.astype(f32),
        c_wv.astype(bf), c_bv.astype(f32), c_wo.astype(bf), c_bo.astype(f32),
        f_w1.astype(bf), f_b1.astype(f32), f_w2.astype(bf), f_b2.astype(f32),
        ln1_g.astype(f32), ln1_b.astype(f32), ln2_g.astype(f32), ln2_b.astype(f32),
    ]

    def batch_spec(shape, block0):
        nd = len(shape)
        return pl.BlockSpec((block0,) + tuple(shape[1:]),
                            lambda i, _nd=nd: (i,) + (0,) * (_nd - 1))

    def shared_spec(shape):
        nd = len(shape)
        return pl.BlockSpec(tuple(shape), lambda i, _nd=nd: (0,) * _nd)

    in_specs = ([batch_spec(x.shape, bt), batch_spec(xm.shape, bt),
                 batch_spec(mem.shape, bt), batch_spec(mm.shape, bt)]
                + [shared_spec(p.shape) for p in params])

    kernel = functools.partial(decoder_block_kernel,
                               num_heads=num_heads,
                               d_queries=d_queries,
                               d_values=d_values)

    return pl.pallas_call(
        kernel,
        out_shape=jax.ShapeDtypeStruct((B, Sq, D), jnp.float32),
        grid=(grid_b,),
        in_specs=in_specs,
        out_specs=batch_spec((B, Sq, D), bt),
        compiler_params=pltpu.CompilerParams(
            dimension_semantics=("parallel",),
            vmem_limit_bytes=48 * 1024 * 1024),
    )(x.astype(jnp.bfloat16), xm, mem.astype(jnp.bfloat16), mm, *params)


# ----------------------------------------------------------------------------
# Deterministic parameter init (fresh-init semantics, no checkpoint load)
# ----------------------------------------------------------------------------
def init_params(key, d_model, num_heads, d_queries, d_values, d_hidden):
    dq_total = num_heads * d_queries
    dv_total = num_heads * d_values

    shapes = [
        # self-attention: Wq, bq, Wk, bk, Wv, bv, Wo, bo
        (d_model, dq_total), (1, dq_total),
        (d_model, dq_total), (1, dq_total),
        (d_model, dv_total), (1, dv_total),
        (dv_total, d_model), (1, d_model),
        # cross-attention: Wq, bq, Wk, bk, Wv, bv, Wo, bo
        (d_model, dq_total), (1, dq_total),
        (d_model, dq_total), (1, dq_total),
        (d_model, dv_total), (1, dv_total),
        (dv_total, d_model), (1, d_model),
        # PFFN: W1, b1, W2, b2
        (d_model, d_hidden), (1, d_hidden),
        (d_hidden, d_model), (1, d_model),
    ]
    keys = jax.random.split(key, len(shapes))
    params = []
    for k, s in zip(keys, shapes):
        if s[0] == 1:   # bias
            params.append(0.01 * jax.random.normal(k, s, jnp.float32))
        else:           # weight, ~1/sqrt(fan_in) scale
            params.append(jax.random.normal(k, s, jnp.float32)
                          / math.sqrt(s[0]))
    # LayerNorm params (ln_1, ln_2) at PyTorch defaults: gamma=1, beta=0
    params += [jnp.ones((1, d_model), jnp.float32),
               jnp.zeros((1, d_model), jnp.float32),
               jnp.ones((1, d_model), jnp.float32),
               jnp.zeros((1, d_model), jnp.float32)]
    return params


# ----------------------------------------------------------------------------
if __name__ == "__main__":
    B, Sq, Sm = 4, 8, 8
    d_model, num_heads, d_queries, d_values, d_hidden = 32, 4, 8, 8, 64

    key = jax.random.PRNGKey(0)
    k_x, k_m, k_p = jax.random.split(key, 3)

    input_sequence = jax.random.normal(k_x, (B, Sq, d_model), jnp.float32)
    memory_sequence = jax.random.normal(k_m, (B, Sm, d_model), jnp.float32)

    # padding masks: 1.0 = valid token, 0.0 = pad (second batch element padded)
    input_padding_mask = jnp.ones((B, Sq), jnp.float32).at[1, -2:].set(0.0)
    memory_padding_mask = jnp.ones((B, Sm), jnp.float32).at[1, -3:].set(0.0)

    weights = init_params(k_p, d_model, num_heads, d_queries, d_values,
                          d_hidden)

    out = decoder_block(input_sequence, input_padding_mask,
                        memory_sequence, memory_padding_mask,
                        weights,
                        num_heads=num_heads,
                        d_queries=d_queries,
                        d_values=d_values)
    out = jax.block_until_ready(out)

    assert out.shape == (B, Sq, d_model)
    assert bool(jnp.all(jnp.isfinite(out)))
    print("KERNEL_OK")
</pallas_src>

<mosaic_0001>
module attributes {stable_mosaic.version = 11 : i64} {
  func.func @decoder_block_kernel(%arg0: i32, %arg1: memref<4x8x32xbf16, #tpu.memory_space<vmem>>, %arg2: memref<4x1x8xf32, #tpu.memory_space<vmem>>, %arg3: memref<4x8x32xbf16, #tpu.memory_space<vmem>>, %arg4: memref<4x1x8xf32, #tpu.memory_space<vmem>>, %arg5: memref<32x32xbf16, #tpu.memory_space<vmem>>, %arg6: memref<1x32xf32, #tpu.memory_space<vmem>>, %arg7: memref<32x32xbf16, #tpu.memory_space<vmem>>, %arg8: memref<1x32xf32, #tpu.memory_space<vmem>>, %arg9: memref<32x32xbf16, #tpu.memory_space<vmem>>, %arg10: memref<1x32xf32, #tpu.memory_space<vmem>>, %arg11: memref<32x32xbf16, #tpu.memory_space<vmem>>, %arg12: memref<1x32xf32, #tpu.memory_space<vmem>>, %arg13: memref<32x32xbf16, #tpu.memory_space<vmem>>, %arg14: memref<1x32xf32, #tpu.memory_space<vmem>>, %arg15: memref<32x32xbf16, #tpu.memory_space<vmem>>, %arg16: memref<1x32xf32, #tpu.memory_space<vmem>>, %arg17: memref<32x32xbf16, #tpu.memory_space<vmem>>, %arg18: memref<1x32xf32, #tpu.memory_space<vmem>>, %arg19: memref<32x32xbf16, #tpu.memory_space<vmem>>, %arg20: memref<1x32xf32, #tpu.memory_space<vmem>>, %arg21: memref<32x64xbf16, #tpu.memory_space<vmem>>, %arg22: memref<1x64xf32, #tpu.memory_space<vmem>>, %arg23: memref<64x32xbf16, #tpu.memory_space<vmem>>, %arg24: memref<1x32xf32, #tpu.memory_space<vmem>>, %arg25: memref<1x32xf32, #tpu.memory_space<vmem>>, %arg26: memref<1x32xf32, #tpu.memory_space<vmem>>, %arg27: memref<1x32xf32, #tpu.memory_space<vmem>>, %arg28: memref<1x32xf32, #tpu.memory_space<vmem>>, %arg29: memref<4x8x32xf32, #tpu.memory_space<vmem>>) attributes {dimension_semantics = [#tpu.dimension_semantics<parallel>], iteration_bounds = array<i64: 1>, scalar_prefetch = 0 : i64, scratch_operands = 0 : i64, tpu.core_type = #tpu.core_type<tc>, window_params = [{transform_indices = @transform_0, window_bounds = array<i64: 4, 8, 32>}, {transform_indices = @transform_1, window_bounds = array<i64: 4, 1, 8>}, {transform_indices = @transform_2, window_bounds = array<i64: 4, 8, 32>}, {transform_indices = @transform_3, window_bounds = array<i64: 4, 1, 8>}, {pipeline_mode = #tpu.pipeline_mode<synchronous>, transform_indices = @transform_4, window_bounds = array<i64: 32, 32>}, {pipeline_mode = #tpu.pipeline_mode<synchronous>, transform_indices = @transform_5, window_bounds = array<i64: 1, 32>}, {pipeline_mode = #tpu.pipeline_mode<synchronous>, transform_indices = @transform_6, window_bounds = array<i64: 32, 32>}, {pipeline_mode = #tpu.pipeline_mode<synchronous>, transform_indices = @transform_7, window_bounds = array<i64: 1, 32>}, {pipeline_mode = #tpu.pipeline_mode<synchronous>, transform_indices = @transform_8, window_bounds = array<i64: 32, 32>}, {pipeline_mode = #tpu.pipeline_mode<synchronous>, transform_indices = @transform_9, window_bounds = array<i64: 1, 32>}, {pipeline_mode = #tpu.pipeline_mode<synchronous>, transform_indices = @transform_10, window_bounds = array<i64: 32, 32>}, {pipeline_mode = #tpu.pipeline_mode<synchronous>, transform_indices = @transform_11, window_bounds = array<i64: 1, 32>}, {pipeline_mode = #tpu.pipeline_mode<synchronous>, transform_indices = @transform_12, window_bounds = array<i64: 32, 32>}, {pipeline_mode = #tpu.pipeline_mode<synchronous>, transform_indices = @transform_13, window_bounds = array<i64: 1, 32>}, {pipeline_mode = #tpu.pipeline_mode<synchronous>, transform_indices = @transform_14, window_bounds = array<i64: 32, 32>}, {pipeline_mode = #tpu.pipeline_mode<synchronous>, transform_indices = @transform_15, window_bounds = array<i64: 1, 32>}, {pipeline_mode = #tpu.pipeline_mode<synchronous>, transform_indices = @transform_16, window_bounds = array<i64: 32, 32>}, {pipeline_mode = #tpu.pipeline_mode<synchronous>, transform_indices = @transform_17, window_bounds = array<i64: 1, 32>}, {pipeline_mode = #tpu.pipeline_mode<synchronous>, transform_indices = @transform_18, window_bounds = array<i64: 32, 32>}, {pipeline_mode = #tpu.pipeline_mode<synchronous>, transform_indices = @transform_19, window_bounds = array<i64: 1, 32>}, {pipeline_mode = #tpu.pipeline_mode<synchronous>, transform_indices = @transform_20, window_bounds = array<i64: 32, 64>}, {pipeline_mode = #tpu.pipeline_mode<synchronous>, transform_indices = @transform_21, window_bounds = array<i64: 1, 64>}, {pipeline_mode = #tpu.pipeline_mode<synchronous>, transform_indices = @transform_22, window_bounds = array<i64: 64, 32>}, {pipeline_mode = #tpu.pipeline_mode<synchronous>, transform_indices = @transform_23, window_bounds = array<i64: 1, 32>}, {pipeline_mode = #tpu.pipeline_mode<synchronous>, transform_indices = @transform_24, window_bounds = array<i64: 1, 32>}, {pipeline_mode = #tpu.pipeline_mode<synchronous>, transform_indices = @transform_25, window_bounds = array<i64: 1, 32>}, {pipeline_mode = #tpu.pipeline_mode<synchronous>, transform_indices = @transform_26, window_bounds = array<i64: 1, 32>}, {pipeline_mode = #tpu.pipeline_mode<synchronous>, transform_indices = @transform_27, window_bounds = array<i64: 1, 32>}, {transform_indices = @transform_28, window_bounds = array<i64: 4, 8, 32>}]} {
    %c0 = arith.constant 0 : index
    %c0_0 = arith.constant 0 : index
    %c0_1 = arith.constant 0 : index
    %0 = vector.load %arg1[%c0, %c0_0, %c0_1] : memref<4x8x32xbf16, #tpu.memory_space<vmem>>, vector<4x8x32xbf16>
    %1 = vector.shape_cast %0 : vector<4x8x32xbf16> to vector<32x32xbf16>
    %c0_2 = arith.constant 0 : index
    %c0_3 = arith.constant 0 : index
    %c0_4 = arith.constant 0 : index
    %2 = vector.load %arg3[%c0_2, %c0_3, %c0_4] : memref<4x8x32xbf16, #tpu.memory_space<vmem>>, vector<4x8x32xbf16>
    %3 = vector.shape_cast %2 : vector<4x8x32xbf16> to vector<32x32xbf16>
    %4 = arith.extf %1 : vector<32x32xbf16> to vector<32x32xf32>
    %c0_5 = arith.constant 0 : index
    %c0_6 = arith.constant 0 : index
    %c0_7 = arith.constant 0 : index
    %5 = vector.load %arg2[%c0_5, %c0_6, %c0_7] : memref<4x1x8xf32, #tpu.memory_space<vmem>>, vector<4x1x8xf32>
    %c0_8 = arith.constant 0 : index
    %c0_9 = arith.constant 0 : index
    %c0_10 = arith.constant 0 : index
    %6 = vector.load %arg4[%c0_8, %c0_9, %c0_10] : memref<4x1x8xf32, #tpu.memory_space<vmem>>, vector<4x1x8xf32>
    %7 = tpu.iota {dimensions = array<i32: 0>} : vector<8x8xi32>
    %8 = tpu.iota {dimensions = array<i32: 1>} : vector<8x8xi32>
    %9 = arith.cmpi sge, %7, %8 : vector<8x8xi32>
    %cst = arith.constant 5.000000e-01 : f32
    %10 = vector.broadcast %cst : f32 to vector<4x1x8xf32>
    %11 = arith.cmpf ogt, %5, %10 : vector<4x1x8xf32>
    %12 = vector.shape_cast %9 : vector<8x8xi1> to vector<1x8x8xi1>
    %13 = vector.broadcast %11 : vector<4x1x8xi1> to vector<4x8x8xi1>
    %14 = vector.broadcast %12 : vector<1x8x8xi1> to vector<4x8x8xi1>
    %15 = arith.andi %13, %14 : vector<4x8x8xi1>
    %cst_11 = arith.constant 0.000000e+00 : f32
    %cst_12 = arith.constant -1.000000e+09 : f32
    %16 = vector.broadcast %cst_11 : f32 to vector<4x8x8xf32>
    %17 = vector.broadcast %cst_12 : f32 to vector<4x8x8xf32>
    %18 = arith.select %15, %16, %17 : vector<4x8x8xi1>, vector<4x8x8xf32>
    %cst_13 = arith.constant 5.000000e-01 : f32
    %19 = vector.broadcast %cst_13 : f32 to vector<4x1x8xf32>
    %20 = arith.cmpf ogt, %6, %19 : vector<4x1x8xf32>
    %cst_14 = arith.constant 0.000000e+00 : f32
    %cst_15 = arith.constant -1.000000e+09 : f32
    %21 = vector.broadcast %cst_14 : f32 to vector<4x1x8xf32>
    %22 = vector.broadcast %cst_15 : f32 to vector<4x1x8xf32>
    %23 = arith.select %20, %21, %22 : vector<4x1x8xi1>, vector<4x1x8xf32>
    %c0_16 = arith.constant 0 : index
    %c0_17 = arith.constant 0 : index
    %24 = vector.load %arg5[%c0_16, %c0_17] : memref<32x32xbf16, #tpu.memory_space<vmem>>, vector<32x32xbf16>
    %c0_18 = arith.constant 0 : index
    %c0_19 = arith.constant 0 : index
    %25 = vector.load %arg6[%c0_18, %c0_19] : memref<1x32xf32, #tpu.memory_space<vmem>>, vector<1x32xf32>
    %c0_20 = arith.constant 0 : index
    %c0_21 = arith.constant 0 : index
    %26 = vector.load %arg7[%c0_20, %c0_21] : memref<32x32xbf16, #tpu.memory_space<vmem>>, vector<32x32xbf16>
    %c0_22 = arith.constant 0 : index
    %c0_23 = arith.constant 0 : index
    %27 = vector.load %arg8[%c0_22, %c0_23] : memref<1x32xf32, #tpu.memory_space<vmem>>, vector<1x32xf32>
    %c0_24 = arith.constant 0 : index
    %c0_25 = arith.constant 0 : index
    %28 = vector.load %arg9[%c0_24, %c0_25] : memref<32x32xbf16, #tpu.memory_space<vmem>>, vector<32x32xbf16>
    %c0_26 = arith.constant 0 : index
    %c0_27 = arith.constant 0 : index
    %29 = vector.load %arg10[%c0_26, %c0_27] : memref<1x32xf32, #tpu.memory_space<vmem>>, vector<1x32xf32>
    %c0_28 = arith.constant 0 : index
    %c0_29 = arith.constant 0 : index
    %30 = vector.load %arg11[%c0_28, %c0_29] : memref<32x32xbf16, #tpu.memory_space<vmem>>, vector<32x32xbf16>
    %c0_30 = arith.constant 0 : index
    %c0_31 = arith.constant 0 : index
    %31 = vector.load %arg12[%c0_30, %c0_31] : memref<1x32xf32, #tpu.memory_space<vmem>>, vector<1x32xf32>
    %cst_32 = arith.constant dense<0.000000e+00> : vector<32x32xf32>
    %32 = tpu.matmul %1, %24, %cst_32 {dimension_numbers = #tpu.dot_dimension_numbers<[1], [0], [0], [1], [0, 0, 1, 1], [], []>} : vector<32x32xbf16>, vector<32x32xbf16>, vector<32x32xf32> -> vector<32x32xf32>
    %33 = vector.broadcast %25 : vector<1x32xf32> to vector<32x32xf32>
    %34 = arith.addf %32, %33 : vector<32x32xf32>
    %cst_33 = arith.constant 0.353553385 : f32
    %35 = vector.broadcast %cst_33 : f32 to vector<32x32xf32>
    %36 = arith.mulf %34, %35 : vector<32x32xf32>
    %cst_34 = arith.constant dense<0.000000e+00> : vector<32x32xf32>
    %37 = tpu.matmul %1, %26, %cst_34 {dimension_numbers = #tpu.dot_dimension_numbers<[1], [0], [0], [1], [0, 0, 1, 1], [], []>} : vector<32x32xbf16>, vector<32x32xbf16>, vector<32x32xf32> -> vector<32x32xf32>
    %38 = vector.broadcast %27 : vector<1x32xf32> to vector<32x32xf32>
    %39 = arith.addf %37, %38 : vector<32x32xf32>
    %cst_35 = arith.constant dense<0.000000e+00> : vector<32x32xf32>
    %40 = tpu.matmul %1, %28, %cst_35 {dimension_numbers = #tpu.dot_dimension_numbers<[1], [0], [0], [1], [0, 0, 1, 1], [], []>} : vector<32x32xbf16>, vector<32x32xbf16>, vector<32x32xf32> -> vector<32x32xf32>
    %41 = vector.broadcast %29 : vector<1x32xf32> to vector<32x32xf32>
    %42 = arith.addf %40, %41 : vector<32x32xf32>
    %43 = arith.truncf %36 : vector<32x32xf32> to vector<32x32xbf16>
    %44 = vector.extract_strided_slice %43 {offsets = [0, 0], sizes = [32, 8], strides = [1, 1]} : vector<32x32xbf16> to vector<32x8xbf16>
    %45 = vector.shape_cast %44 : vector<32x8xbf16> to vector<4x8x8xbf16>
    %46 = vector.extract_strided_slice %43 {offsets = [0, 8], sizes = [32, 8], strides = [1, 1]} : vector<32x32xbf16> to vector<32x8xbf16>
    %47 = vector.shape_cast %46 : vector<32x8xbf16> to vector<4x8x8xbf16>
    %48 = vector.extract_strided_slice %43 {offsets = [0, 16], sizes = [32, 8], strides = [1, 1]} : vector<32x32xbf16> to vector<32x8xbf16>
    %49 = vector.shape_cast %48 : vector<32x8xbf16> to vector<4x8x8xbf16>
    %50 = vector.extract_strided_slice %43 {offsets = [0, 24], sizes = [32, 8], strides = [1, 1]} : vector<32x32xbf16> to vector<32x8xbf16>
    %51 = vector.shape_cast %50 : vector<32x8xbf16> to vector<4x8x8xbf16>
    %52 = tpu.concatenate %45, %47, %49, %51 in 0 : vector<4x8x8xbf16>, vector<4x8x8xbf16>, vector<4x8x8xbf16>, vector<4x8x8xbf16> -> vector<16x8x8xbf16>
    %53 = arith.truncf %39 : vector<32x32xf32> to vector<32x32xbf16>
    %54 = vector.extract_strided_slice %53 {offsets = [0, 0], sizes = [32, 8], strides = [1, 1]} : vector<32x32xbf16> to vector<32x8xbf16>
    %55 = vector.shape_cast %54 : vector<32x8xbf16> to vector<4x8x8xbf16>
    %56 = vector.extract_strided_slice %53 {offsets = [0, 8], sizes = [32, 8], strides = [1, 1]} : vector<32x32xbf16> to vector<32x8xbf16>
    %57 = vector.shape_cast %56 : vector<32x8xbf16> to vector<4x8x8xbf16>
    %58 = vector.extract_strided_slice %53 {offsets = [0, 16], sizes = [32, 8], strides = [1, 1]} : vector<32x32xbf16> to vector<32x8xbf16>
    %59 = vector.shape_cast %58 : vector<32x8xbf16> to vector<4x8x8xbf16>
    %60 = vector.extract_strided_slice %53 {offsets = [0, 24], sizes = [32, 8], strides = [1, 1]} : vector<32x32xbf16> to vector<32x8xbf16>
    %61 = vector.shape_cast %60 : vector<32x8xbf16> to vector<4x8x8xbf16>
    %62 = tpu.concatenate %55, %57, %59, %61 in 0 : vector<4x8x8xbf16>, vector<4x8x8xbf16>, vector<4x8x8xbf16>, vector<4x8x8xbf16> -> vector<16x8x8xbf16>
    %63 = arith.truncf %42 : vector<32x32xf32> to vector<32x32xbf16>
    %64 = vector.extract_strided_slice %63 {offsets = [0, 0], sizes = [32, 8], strides = [1, 1]} : vector<32x32xbf16> to vector<32x8xbf16>
    %65 = vector.shape_cast %64 : vector<32x8xbf16> to vector<4x8x8xbf16>
    %66 = vector.extract_strided_slice %63 {offsets = [0, 8], sizes = [32, 8], strides = [1, 1]} : vector<32x32xbf16> to vector<32x8xbf16>
    %67 = vector.shape_cast %66 : vector<32x8xbf16> to vector<4x8x8xbf16>
    %68 = vector.extract_strided_slice %63 {offsets = [0, 16], sizes = [32, 8], strides = [1, 1]} : vector<32x32xbf16> to vector<32x8xbf16>
    %69 = vector.shape_cast %68 : vector<32x8xbf16> to vector<4x8x8xbf16>
    %70 = vector.extract_strided_slice %63 {offsets = [0, 24], sizes = [32, 8], strides = [1, 1]} : vector<32x32xbf16> to vector<32x8xbf16>
    %71 = vector.shape_cast %70 : vector<32x8xbf16> to vector<4x8x8xbf16>
    %72 = tpu.concatenate %65, %67, %69, %71 in 0 : vector<4x8x8xbf16>, vector<4x8x8xbf16>, vector<4x8x8xbf16>, vector<4x8x8xbf16> -> vector<16x8x8xbf16>
    "tpu.trace_start"() <{level = 10 : i32, message = "bqd,bkd->bqk"}> : () -> ()
    %cst_36 = arith.constant dense<0.000000e+00> : vector<16x8x8xf32>
    %73 = tpu.matmul %52, %62, %cst_36 {dimension_numbers = #tpu.dot_dimension_numbers<[2], [2], [1], [1], [0, 0, 0, 1, 1, 1], [0], [0]>} : vector<16x8x8xbf16>, vector<16x8x8xbf16>, vector<16x8x8xf32> -> vector<16x8x8xf32>
    "tpu.trace_stop"() : () -> ()
    %74 = vector.shape_cast %73 : vector<16x8x8xf32> to vector<4x4x8x8xf32>
    %75 = vector.shape_cast %18 : vector<4x8x8xf32> to vector<1x4x8x8xf32>
    %76 = vector.broadcast %75 : vector<1x4x8x8xf32> to vector<4x4x8x8xf32>
    %77 = arith.addf %74, %76 : vector<4x4x8x8xf32>
    %cst_37 = arith.constant dense<0xFF800000> : vector<4x4x8xf32>
    %78 = vector.multi_reduction <maximumf>, %77, %cst_37 [3] : vector<4x4x8x8xf32> to vector<4x4x8xf32>
    %79 = vector.shape_cast %78 : vector<4x4x8xf32> to vector<4x4x8x1xf32>
    %80 = vector.broadcast %79 : vector<4x4x8x1xf32> to vector<4x4x8x8xf32>
    %81 = arith.subf %77, %80 : vector<4x4x8x8xf32>
    %82 = math.exp %81 : vector<4x4x8x8xf32>
    %cst_38 = arith.constant dense<0.000000e+00> : vector<4x4x8xf32>
    %83 = vector.multi_reduction <add>, %82, %cst_38 [3] : vector<4x4x8x8xf32> to vector<4x4x8xf32>
    %84 = vector.shape_cast %83 : vector<4x4x8xf32> to vector<4x4x8x1xf32>
    %85 = tpu.reciprocal %84 {approx = true} : vector<4x4x8x1xf32> -> vector<4x4x8x1xf32>
    %86 = vector.broadcast %85 : vector<4x4x8x1xf32> to vector<4x4x8x8xf32>
    %87 = arith.mulf %82, %86 : vector<4x4x8x8xf32>
    %88 = vector.shape_cast %87 : vector<4x4x8x8xf32> to vector<16x8x8xf32>
    %89 = arith.truncf %88 : vector<16x8x8xf32> to vector<16x8x8xbf16>
    "tpu.trace_start"() <{level = 10 : i32, message = "bqk,bkd->bqd"}> : () -> ()
    %cst_39 = arith.constant dense<0.000000e+00> : vector<16x8x8xf32>
    %90 = tpu.matmul %89, %72, %cst_39 {dimension_numbers = #tpu.dot_dimension_numbers<[2], [1], [1], [2], [0, 0, 0, 1, 1, 2], [0], [0]>} : vector<16x8x8xbf16>, vector<16x8x8xbf16>, vector<16x8x8xf32> -> vector<16x8x8xf32>
    "tpu.trace_stop"() : () -> ()
    %91 = arith.truncf %90 : vector<16x8x8xf32> to vector<16x8x8xbf16>
    %92 = vector.extract_strided_slice %91 {offsets = [0, 0, 0], sizes = [4, 8, 8], strides = [1, 1, 1]} : vector<16x8x8xbf16> to vector<4x8x8xbf16>
    %93 = vector.shape_cast %92 : vector<4x8x8xbf16> to vector<32x8xbf16>
    %94 = vector.extract_strided_slice %91 {offsets = [4, 0, 0], sizes = [4, 8, 8], strides = [1, 1, 1]} : vector<16x8x8xbf16> to vector<4x8x8xbf16>
    %95 = vector.shape_cast %94 : vector<4x8x8xbf16> to vector<32x8xbf16>
    %96 = vector.extract_strided_slice %91 {offsets = [8, 0, 0], sizes = [4, 8, 8], strides = [1, 1, 1]} : vector<16x8x8xbf16> to vector<4x8x8xbf16>
    %97 = vector.shape_cast %96 : vector<4x8x8xbf16> to vector<32x8xbf16>
    %98 = vector.extract_strided_slice %91 {offsets = [12, 0, 0], sizes = [4, 8, 8], strides = [1, 1, 1]} : vector<16x8x8xbf16> to vector<4x8x8xbf16>
    %99 = vector.shape_cast %98 : vector<4x8x8xbf16> to vector<32x8xbf16>
    %100 = tpu.concatenate %93, %95, %97, %99 in 1 : vector<32x8xbf16>, vector<32x8xbf16>, vector<32x8xbf16>, vector<32x8xbf16> -> vector<32x32xbf16>
    %cst_40 = arith.constant dense<0.000000e+00> : vector<32x32xf32>
    %101 = tpu.matmul %100, %30, %cst_40 {dimension_numbers = #tpu.dot_dimension_numbers<[1], [0], [0], [1], [0, 0, 1, 1], [], []>} : vector<32x32xbf16>, vector<32x32xbf16>, vector<32x32xf32> -> vector<32x32xf32>
    %102 = vector.broadcast %31 : vector<1x32xf32> to vector<32x32xf32>
    %103 = arith.addf %101, %102 : vector<32x32xf32>
    %104 = arith.addf %103, %4 : vector<32x32xf32>
    %c0_41 = arith.constant 0 : index
    %c0_42 = arith.constant 0 : index
    %105 = vector.load %arg25[%c0_41, %c0_42] : memref<1x32xf32, #tpu.memory_space<vmem>>, vector<1x32xf32>
    %c0_43 = arith.constant 0 : index
    %c0_44 = arith.constant 0 : index
    %106 = vector.load %arg26[%c0_43, %c0_44] : memref<1x32xf32, #tpu.memory_space<vmem>>, vector<1x32xf32>
    %cst_45 = arith.constant dense<0.000000e+00> : vector<32xf32>
    %107 = vector.multi_reduction <add>, %104, %cst_45 [1] : vector<32x32xf32> to vector<32xf32>
    %108 = vector.shape_cast %107 : vector<32xf32> to vector<32x1xf32>
    %cst_46 = arith.constant 3.200000e+01 : f32
    %109 = vector.broadcast %cst_46 : f32 to vector<32x1xf32>
    %110 = arith.divf %108, %109 : vector<32x1xf32>
    %111 = vector.broadcast %110 : vector<32x1xf32> to vector<32x32xf32>
    %112 = arith.subf %104, %111 : vector<32x32xf32>
    %113 = arith.mulf %112, %112 : vector<32x32xf32>
    %cst_47 = arith.constant dense<0.000000e+00> : vector<32xf32>
    %114 = vector.multi_reduction <add>, %113, %cst_47 [1] : vector<32x32xf32> to vector<32xf32>
    %115 = vector.shape_cast %114 : vector<32xf32> to vector<32x1xf32>
    %cst_48 = arith.constant 3.200000e+01 : f32
    %116 = vector.broadcast %cst_48 : f32 to vector<32x1xf32>
    %117 = arith.divf %115, %116 : vector<32x1xf32>
    %118 = vector.broadcast %110 : vector<32x1xf32> to vector<32x32xf32>
    %119 = arith.subf %104, %118 : vector<32x32xf32>
    %cst_49 = arith.constant 9.99999974E-6 : f32
    %120 = vector.broadcast %cst_49 : f32 to vector<32x1xf32>
    %121 = arith.addf %117, %120 : vector<32x1xf32>
    %122 = math.rsqrt %121 : vector<32x1xf32>
    %123 = vector.broadcast %122 : vector<32x1xf32> to vector<32x32xf32>
    %124 = arith.mulf %119, %123 : vector<32x32xf32>
    %125 = vector.broadcast %105 : vector<1x32xf32> to vector<32x32xf32>
    %126 = arith.mulf %124, %125 : vector<32x32xf32>
    %127 = vector.broadcast %106 : vector<1x32xf32> to vector<32x32xf32>
    %128 = arith.addf %126, %127 : vector<32x32xf32>
    %129 = arith.truncf %128 : vector<32x32xf32> to vector<32x32xbf16>
    %c0_50 = arith.constant 0 : index
    %c0_51 = arith.constant 0 : index
    %130 = vector.load %arg13[%c0_50, %c0_51] : memref<32x32xbf16, #tpu.memory_space<vmem>>, vector<32x32xbf16>
    %c0_52 = arith.constant 0 : index
    %c0_53 = arith.constant 0 : index
    %131 = vector.load %arg14[%c0_52, %c0_53] : memref<1x32xf32, #tpu.memory_space<vmem>>, vector<1x32xf32>
    %c0_54 = arith.constant 0 : index
    %c0_55 = arith.constant 0 : index
    %132 = vector.load %arg15[%c0_54, %c0_55] : memref<32x32xbf16, #tpu.memory_space<vmem>>, vector<32x32xbf16>
    %c0_56 = arith.constant 0 : index
    %c0_57 = arith.constant 0 : index
    %133 = vector.load %arg16[%c0_56, %c0_57] : memref<1x32xf32, #tpu.memory_space<vmem>>, vector<1x32xf32>
    %c0_58 = arith.constant 0 : index
    %c0_59 = arith.constant 0 : index
    %134 = vector.load %arg17[%c0_58, %c0_59] : memref<32x32xbf16, #tpu.memory_space<vmem>>, vector<32x32xbf16>
    %c0_60 = arith.constant 0 : index
    %c0_61 = arith.constant 0 : index
    %135 = vector.load %arg18[%c0_60, %c0_61] : memref<1x32xf32, #tpu.memory_space<vmem>>, vector<1x32xf32>
    %c0_62 = arith.constant 0 : index
    %c0_63 = arith.constant 0 : index
    %136 = vector.load %arg19[%c0_62, %c0_63] : memref<32x32xbf16, #tpu.memory_space<vmem>>, vector<32x32xbf16>
    %c0_64 = arith.constant 0 : index
    %c0_65 = arith.constant 0 : index
    %137 = vector.load %arg20[%c0_64, %c0_65] : memref<1x32xf32, #tpu.memory_space<vmem>>, vector<1x32xf32>
    %cst_66 = arith.constant dense<0.000000e+00> : vector<32x32xf32>
    %138 = tpu.matmul %129, %130, %cst_66 {dimension_numbers = #tpu.dot_dimension_numbers<[1], [0], [0], [1], [0, 0, 1, 1], [], []>} : vector<32x32xbf16>, vector<32x32xbf16>, vector<32x32xf32> -> vector<32x32xf32>
    %139 = vector.broadcast %131 : vector<1x32xf32> to vector<32x32xf32>
    %140 = arith.addf %138, %139 : vector<32x32xf32>
    %cst_67 = arith.constant 0.353553385 : f32
    %141 = vector.broadcast %cst_67 : f32 to vector<32x32xf32>
    %142 = arith.mulf %140, %141 : vector<32x32xf32>
    %cst_68 = arith.constant dense<0.000000e+00> : vector<32x32xf32>
    %143 = tpu.matmul %3, %132, %cst_68 {dimension_numbers = #tpu.dot_dimension_numbers<[1], [0], [0], [1], [0, 0, 1, 1], [], []>} : vector<32x32xbf16>, vector<32x32xbf16>, vector<32x32xf32> -> vector<32x32xf32>
    %144 = vector.broadcast %133 : vector<1x32xf32> to vector<32x32xf32>
    %145 = arith.addf %143, %144 : vector<32x32xf32>
    %cst_69 = arith.constant dense<0.000000e+00> : vector<32x32xf32>
    %146 = tpu.matmul %3, %134, %cst_69 {dimension_numbers = #tpu.dot_dimension_numbers<[1], [0], [0], [1], [0, 0, 1, 1], [], []>} : vector<32x32xbf16>, vector<32x32xbf16>, vector<32x32xf32> -> vector<32x32xf32>
    %147 = vector.broadcast %135 : vector<1x32xf32> to vector<32x32xf32>
    %148 = arith.addf %146, %147 : vector<32x32xf32>
    %149 = arith.truncf %142 : vector<32x32xf32> to vector<32x32xbf16>
    %150 = vector.extract_strided_slice %149 {offsets = [0, 0], sizes = [32, 8], strides = [1, 1]} : vector<32x32xbf16> to vector<32x8xbf16>
    %151 = vector.shape_cast %150 : vector<32x8xbf16> to vector<4x8x8xbf16>
    %152 = vector.extract_strided_slice %149 {offsets = [0, 8], sizes = [32, 8], strides = [1, 1]} : vector<32x32xbf16> to vector<32x8xbf16>
    %153 = vector.shape_cast %152 : vector<32x8xbf16> to vector<4x8x8xbf16>
    %154 = vector.extract_strided_slice %149 {offsets = [0, 16], sizes = [32, 8], strides = [1, 1]} : vector<32x32xbf16> to vector<32x8xbf16>
    %155 = vector.shape_cast %154 : vector<32x8xbf16> to vector<4x8x8xbf16>
    %156 = vector.extract_strided_slice %149 {offsets = [0, 24], sizes = [32, 8], strides = [1, 1]} : vector<32x32xbf16> to vector<32x8xbf16>
    %157 = vector.shape_cast %156 : vector<32x8xbf16> to vector<4x8x8xbf16>
    %158 = tpu.concatenate %151, %153, %155, %157 in 0 : vector<4x8x8xbf16>, vector<4x8x8xbf16>, vector<4x8x8xbf16>, vector<4x8x8xbf16> -> vector<16x8x8xbf16>
    %159 = arith.truncf %145 : vector<32x32xf32> to vector<32x32xbf16>
    %160 = vector.extract_strided_slice %159 {offsets = [0, 0], sizes = [32, 8], strides = [1, 1]} : vector<32x32xbf16> to vector<32x8xbf16>
    %161 = vector.shape_cast %160 : vector<32x8xbf16> to vector<4x8x8xbf16>
    %162 = vector.extract_strided_slice %159 {offsets = [0, 8], sizes = [32, 8], strides = [1, 1]} : vector<32x32xbf16> to vector<32x8xbf16>
    %163 = vector.shape_cast %162 : vector<32x8xbf16> to vector<4x8x8xbf16>
    %164 = vector.extract_strided_slice %159 {offsets = [0, 16], sizes = [32, 8], strides = [1, 1]} : vector<32x32xbf16> to vector<32x8xbf16>
    %165 = vector.shape_cast %164 : vector<32x8xbf16> to vector<4x8x8xbf16>
    %166 = vector.extract_strided_slice %159 {offsets = [0, 24], sizes = [32, 8], strides = [1, 1]} : vector<32x32xbf16> to vector<32x8xbf16>
    %167 = vector.shape_cast %166 : vector<32x8xbf16> to vector<4x8x8xbf16>
    %168 = tpu.concatenate %161, %163, %165, %167 in 0 : vector<4x8x8xbf16>, vector<4x8x8xbf16>, vector<4x8x8xbf16>, vector<4x8x8xbf16> -> vector<16x8x8xbf16>
    %169 = arith.truncf %148 : vector<32x32xf32> to vector<32x32xbf16>
    %170 = vector.extract_strided_slice %169 {offsets = [0, 0], sizes = [32, 8], strides = [1, 1]} : vector<32x32xbf16> to vector<32x8xbf16>
    %171 = vector.shape_cast %170 : vector<32x8xbf16> to vector<4x8x8xbf16>
    %172 = vector.extract_strided_slice %169 {offsets = [0, 8], sizes = [32, 8], strides = [1, 1]} : vector<32x32xbf16> to vector<32x8xbf16>
    %173 = vector.shape_cast %172 : vector<32x8xbf16> to vector<4x8x8xbf16>
    %174 = vector.extract_strided_slice %169 {offsets = [0, 16], sizes = [32, 8], strides = [1, 1]} : vector<32x32xbf16> to vector<32x8xbf16>
    %175 = vector.shape_cast %174 : vector<32x8xbf16> to vector<4x8x8xbf16>
    %176 = vector.extract_strided_slice %169 {offsets = [0, 24], sizes = [32, 8], strides = [1, 1]} : vector<32x32xbf16> to vector<32x8xbf16>
    %177 = vector.shape_cast %176 : vector<32x8xbf16> to vector<4x8x8xbf16>
    %178 = tpu.concatenate %171, %173, %175, %177 in 0 : vector<4x8x8xbf16>, vector<4x8x8xbf16>, vector<4x8x8xbf16>, vector<4x8x8xbf16> -> vector<16x8x8xbf16>
    "tpu.trace_start"() <{level = 10 : i32, message = "bqd,bkd->bqk"}> : () -> ()
    %cst_70 = arith.constant dense<0.000000e+00> : vector<16x8x8xf32>
    %179 = tpu.matmul %158, %168, %cst_70 {dimension_numbers = #tpu.dot_dimension_numbers<[2], [2], [1], [1], [0, 0, 0, 1, 1, 1], [0], [0]>} : vector<16x8x8xbf16>, vector<16x8x8xbf16>, vector<16x8x8xf32> -> vector<16x8x8xf32>
    "tpu.trace_stop"() : () -> ()
    %180 = vector.shape_cast %179 : vector<16x8x8xf32> to vector<4x4x8x8xf32>
    %181 = vector.shape_cast %23 : vector<4x1x8xf32> to vector<1x4x1x8xf32>
    %182 = vector.broadcast %181 : vector<1x4x1x8xf32> to vector<4x4x8x8xf32>
    %183 = arith.addf %180, %182 : vector<4x4x8x8xf32>
    %cst_71 = arith.constant dense<0xFF800000> : vector<4x4x8xf32>
    %184 = vector.multi_reduction <maximumf>, %183, %cst_71 [3] : vector<4x4x8x8xf32> to vector<4x4x8xf32>
    %185 = vector.shape_cast %184 : vector<4x4x8xf32> to vector<4x4x8x1xf32>
    %186 = vector.broadcast %185 : vector<4x4x8x1xf32> to vector<4x4x8x8xf32>
    %187 = arith.subf %183, %186 : vector<4x4x8x8xf32>
    %188 = math.exp %187 : vector<4x4x8x8xf32>
    %cst_72 = arith.constant dense<0.000000e+00> : vector<4x4x8xf32>
    %189 = vector.multi_reduction <add>, %188, %cst_72 [3] : vector<4x4x8x8xf32> to vector<4x4x8xf32>
    %190 = vector.shape_cast %189 : vector<4x4x8xf32> to vector<4x4x8x1xf32>
    %191 = tpu.reciprocal %190 {approx = true} : vector<4x4x8x1xf32> -> vector<4x4x8x1xf32>
    %192 = vector.broadcast %191 : vector<4x4x8x1xf32> to vector<4x4x8x8xf32>
    %193 = arith.mulf %188, %192 : vector<4x4x8x8xf32>
    %194 = vector.shape_cast %193 : vector<4x4x8x8xf32> to vector<16x8x8xf32>
    %195 = arith.truncf %194 : vector<16x8x8xf32> to vector<16x8x8xbf16>
    "tpu.trace_start"() <{level = 10 : i32, message = "bqk,bkd->bqd"}> : () -> ()
    %cst_73 = arith.constant dense<0.000000e+00> : vector<16x8x8xf32>
    %196 = tpu.matmul %195, %178, %cst_73 {dimension_numbers = #tpu.dot_dimension_numbers<[2], [1], [1], [2], [0, 0, 0, 1, 1, 2], [0], [0]>} : vector<16x8x8xbf16>, vector<16x8x8xbf16>, vector<16x8x8xf32> -> vector<16x8x8xf32>
    "tpu.trace_stop"() : () -> ()
    %197 = arith.truncf %196 : vector<16x8x8xf32> to vector<16x8x8xbf16>
    %198 = vector.extract_strided_slice %197 {offsets = [0, 0, 0], sizes = [4, 8, 8], strides = [1, 1, 1]} : vector<16x8x8xbf16> to vector<4x8x8xbf16>
    %199 = vector.shape_cast %198 : vector<4x8x8xbf16> to vector<32x8xbf16>
    %200 = vector.extract_strided_slice %197 {offsets = [4, 0, 0], sizes = [4, 8, 8], strides = [1, 1, 1]} : vector<16x8x8xbf16> to vector<4x8x8xbf16>
    %201 = vector.shape_cast %200 : vector<4x8x8xbf16> to vector<32x8xbf16>
    %202 = vector.extract_strided_slice %197 {offsets = [8, 0, 0], sizes = [4, 8, 8], strides = [1, 1, 1]} : vector<16x8x8xbf16> to vector<4x8x8xbf16>
    %203 = vector.shape_cast %202 : vector<4x8x8xbf16> to vector<32x8xbf16>
    %204 = vector.extract_strided_slice %197 {offsets = [12, 0, 0], sizes = [4, 8, 8], strides = [1, 1, 1]} : vector<16x8x8xbf16> to vector<4x8x8xbf16>
    %205 = vector.shape_cast %204 : vector<4x8x8xbf16> to vector<32x8xbf16>
    %206 = tpu.concatenate %199, %201, %203, %205 in 1 : vector<32x8xbf16>, vector<32x8xbf16>, vector<32x8xbf16>, vector<32x8xbf16> -> vector<32x32xbf16>
    %cst_74 = arith.constant dense<0.000000e+00> : vector<32x32xf32>
    %207 = tpu.matmul %206, %136, %cst_74 {dimension_numbers = #tpu.dot_dimension_numbers<[1], [0], [0], [1], [0, 0, 1, 1], [], []>} : vector<32x32xbf16>, vector<32x32xbf16>, vector<32x32xf32> -> vector<32x32xf32>
    %208 = vector.broadcast %137 : vector<1x32xf32> to vector<32x32xf32>
    %209 = arith.addf %207, %208 : vector<32x32xf32>
    %210 = arith.addf %209, %128 : vector<32x32xf32>
    %c0_75 = arith.constant 0 : index
    %c0_76 = arith.constant 0 : index
    %211 = vector.load %arg27[%c0_75, %c0_76] : memref<1x32xf32, #tpu.memory_space<vmem>>, vector<1x32xf32>
    %c0_77 = arith.constant 0 : index
    %c0_78 = arith.constant 0 : index
    %212 = vector.load %arg28[%c0_77, %c0_78] : memref<1x32xf32, #tpu.memory_space<vmem>>, vector<1x32xf32>
    %cst_79 = arith.constant dense<0.000000e+00> : vector<32xf32>
    %213 = vector.multi_reduction <add>, %210, %cst_79 [1] : vector<32x32xf32> to vector<32xf32>
    %214 = vector.shape_cast %213 : vector<32xf32> to vector<32x1xf32>
    %cst_80 = arith.constant 3.200000e+01 : f32
    %215 = vector.broadcast %cst_80 : f32 to vector<32x1xf32>
    %216 = arith.divf %214, %215 : vector<32x1xf32>
    %217 = vector.broadcast %216 : vector<32x1xf32> to vector<32x32xf32>
    %218 = arith.subf %210, %217 : vector<32x32xf32>
    %219 = arith.mulf %218, %218 : vector<32x32xf32>
    %cst_81 = arith.constant dense<0.000000e+00> : vector<32xf32>
    %220 = vector.multi_reduction <add>, %219, %cst_81 [1] : vector<32x32xf32> to vector<32xf32>
    %221 = vector.shape_cast %220 : vector<32xf32> to vector<32x1xf32>
    %cst_82 = arith.constant 3.200000e+01 : f32
    %222 = vector.broadcast %cst_82 : f32 to vector<32x1xf32>
    %223 = arith.divf %221, %222 : vector<32x1xf32>
    %224 = vector.broadcast %216 : vector<32x1xf32> to vector<32x32xf32>
    %225 = arith.subf %210, %224 : vector<32x32xf32>
    %cst_83 = arith.constant 9.99999974E-6 : f32
    %226 = vector.broadcast %cst_83 : f32 to vector<32x1xf32>
    %227 = arith.addf %223, %226 : vector<32x1xf32>
    %228 = math.rsqrt %227 : vector<32x1xf32>
    %229 = vector.broadcast %228 : vector<32x1xf32> to vector<32x32xf32>
    %230 = arith.mulf %225, %229 : vector<32x32xf32>
    %231 = vector.broadcast %211 : vector<1x32xf32> to vector<32x32xf32>
    %232 = arith.mulf %230, %231 : vector<32x32xf32>
    %233 = vector.broadcast %212 : vector<1x32xf32> to vector<32x32xf32>
    %234 = arith.addf %232, %233 : vector<32x32xf32>
    %235 = arith.truncf %234 : vector<32x32xf32> to vector<32x32xbf16>
    %c0_84 = arith.constant 0 : index
    %c0_85 = arith.constant 0 : index
    %236 = vector.load %arg21[%c0_84, %c0_85] : memref<32x64xbf16, #tpu.memory_space<vmem>>, vector<32x64xbf16>
    %cst_86 = arith.constant dense<0.000000e+00> : vector<32x64xf32>
    %237 = tpu.matmul %235, %236, %cst_86 {dimension_numbers = #tpu.dot_dimension_numbers<[1], [0], [0], [1], [0, 0, 1, 1], [], []>} : vector<32x32xbf16>, vector<32x64xbf16>, vector<32x64xf32> -> vector<32x64xf32>
    %c0_87 = arith.constant 0 : index
    %c0_88 = arith.constant 0 : index
    %238 = vector.load %arg22[%c0_87, %c0_88] : memref<1x64xf32, #tpu.memory_space<vmem>>, vector<1x64xf32>
    %239 = vector.broadcast %238 : vector<1x64xf32> to vector<32x64xf32>
    %240 = arith.addf %237, %239 : vector<32x64xf32>
    %cst_89 = arith.constant 0.000000e+00 : f32
    %241 = vector.broadcast %cst_89 : f32 to vector<32x64xf32>
    %242 = arith.maximumf %240, %241 : vector<32x64xf32>
    %243 = arith.truncf %242 : vector<32x64xf32> to vector<32x64xbf16>
    %c0_90 = arith.constant 0 : index
    %c0_91 = arith.constant 0 : index
    %244 = vector.load %arg23[%c0_90, %c0_91] : memref<64x32xbf16, #tpu.memory_space<vmem>>, vector<64x32xbf16>
    %cst_92 = arith.constant dense<0.000000e+00> : vector<32x32xf32>
    %245 = tpu.matmul %243, %244, %cst_92 {dimension_numbers = #tpu.dot_dimension_numbers<[1], [0], [0], [1], [0, 0, 1, 1], [], []>} : vector<32x64xbf16>, vector<64x32xbf16>, vector<32x32xf32> -> vector<32x32xf32>
    %c0_93 = arith.constant 0 : index
    %c0_94 = arith.constant 0 : index
    %246 = vector.load %arg24[%c0_93, %c0_94] : memref<1x32xf32, #tpu.memory_space<vmem>>, vector<1x32xf32>
    %247 = vector.broadcast %246 : vector<1x32xf32> to vector<32x32xf32>
    %248 = arith.addf %245, %247 : vector<32x32xf32>
    %249 = arith.addf %248, %234 : vector<32x32xf32>
    %c0_95 = arith.constant 0 : index
    %c0_96 = arith.constant 0 : index
    %250 = vector.load %arg27[%c0_95, %c0_96] : memref<1x32xf32, #tpu.memory_space<vmem>>, vector<1x32xf32>
    %c0_97 = arith.constant 0 : index
    %c0_98 = arith.constant 0 : index
    %251 = vector.load %arg28[%c0_97, %c0_98] : memref<1x32xf32, #tpu.memory_space<vmem>>, vector<1x32xf32>
    %cst_99 = arith.constant dense<0.000000e+00> : vector<32xf32>
    %252 = vector.multi_reduction <add>, %249, %cst_99 [1] : vector<32x32xf32> to vector<32xf32>
    %253 = vector.shape_cast %252 : vector<32xf32> to vector<32x1xf32>
    %cst_100 = arith.constant 3.200000e+01 : f32
    %254 = vector.broadcast %cst_100 : f32 to vector<32x1xf32>
    %255 = arith.divf %253, %254 : vector<32x1xf32>
    %256 = vector.broadcast %255 : vector<32x1xf32> to vector<32x32xf32>
    %257 = arith.subf %249, %256 : vector<32x32xf32>
    %258 = arith.mulf %257, %257 : vector<32x32xf32>
    %cst_101 = arith.constant dense<0.000000e+00> : vector<32xf32>
    %259 = vector.multi_reduction <add>, %258, %cst_101 [1] : vector<32x32xf32> to vector<32xf32>
    %260 = vector.shape_cast %259 : vector<32xf32> to vector<32x1xf32>
    %cst_102 = arith.constant 3.200000e+01 : f32
    %261 = vector.broadcast %cst_102 : f32 to vector<32x1xf32>
    %262 = arith.divf %260, %261 : vector<32x1xf32>
    %263 = vector.broadcast %255 : vector<32x1xf32> to vector<32x32xf32>
    %264 = arith.subf %249, %263 : vector<32x32xf32>
    %cst_103 = arith.constant 9.99999974E-6 : f32
    %265 = vector.broadcast %cst_103 : f32 to vector<32x1xf32>
    %266 = arith.addf %262, %265 : vector<32x1xf32>
    %267 = math.rsqrt %266 : vector<32x1xf32>
    %268 = vector.broadcast %267 : vector<32x1xf32> to vector<32x32xf32>
    %269 = arith.mulf %264, %268 : vector<32x32xf32>
    %270 = vector.broadcast %250 : vector<1x32xf32> to vector<32x32xf32>
    %271 = arith.mulf %269, %270 : vector<32x32xf32>
    %272 = vector.broadcast %251 : vector<1x32xf32> to vector<32x32xf32>
    %273 = arith.addf %271, %272 : vector<32x32xf32>
    %274 = vector.shape_cast %273 : vector<32x32xf32> to vector<4x8x32xf32>
    %c0_104 = arith.constant 0 : index
    %c0_105 = arith.constant 0 : index
    %c0_106 = arith.constant 0 : index
    %275 = vector.load %arg29[%c0_104, %c0_105, %c0_106] : memref<4x8x32xf32, #tpu.memory_space<vmem>>, vector<4x8x32xf32>
    tpu.vector_store %arg29[%c0_104, %c0_105, %c0_106], %274 {strides = array<i32>} : memref<4x8x32xf32, #tpu.memory_space<vmem>>, vector<4x8x32xf32>,
    return
  }
  func.func @transform_0(%arg0: i32) -> (i32, i32, i32) {
    %c0_i32 = arith.constant 0 : i32
    %c0_i32_0 = arith.constant 0 : i32
    %c0_i32_1 = arith.constant 0 : i32
    return %arg0, %c0_i32, %c0_i32_0 : i32, i32, i32
  }
  func.func @transform_1(%arg0: i32) -> (i32, i32, i32) {
    %c0_i32 = arith.constant 0 : i32
    %c0_i32_0 = arith.constant 0 : i32
    %c0_i32_1 = arith.constant 0 : i32
    return %arg0, %c0_i32, %c0_i32_0 : i32, i32, i32
  }
  func.func @transform_2(%arg0: i32) -> (i32, i32, i32) {
    %c0_i32 = arith.constant 0 : i32
    %c0_i32_0 = arith.constant 0 : i32
    %c0_i32_1 = arith.constant 0 : i32
    return %arg0, %c0_i32, %c0_i32_0 : i32, i32, i32
  }
  func.func @transform_3(%arg0: i32) -> (i32, i32, i32) {
    %c0_i32 = arith.constant 0 : i32
    %c0_i32_0 = arith.constant 0 : i32
    %c0_i32_1 = arith.constant 0 : i32
    return %arg0, %c0_i32, %c0_i32_0 : i32, i32, i32
  }
  func.func @transform_4(%arg0: i32) -> (i32, i32) {
    %c0_i32 = arith.constant 0 : i32
    %c0_i32_0 = arith.constant 0 : i32
    %c0_i32_1 = arith.constant 0 : i32
    return %c0_i32, %c0_i32_0 : i32, i32
  }
  func.func @transform_5(%arg0: i32) -> (i32, i32) {
    %c0_i32 = arith.constant 0 : i32
    %c0_i32_0 = arith.constant 0 : i32
    %c0_i32_1 = arith.constant 0 : i32
    return %c0_i32, %c0_i32_0 : i32, i32
  }
  func.func @transform_6(%arg0: i32) -> (i32, i32) {
    %c0_i32 = arith.constant 0 : i32
    %c0_i32_0 = arith.constant 0 : i32
    %c0_i32_1 = arith.constant 0 : i32
    return %c0_i32, %c0_i32_0 : i32, i32
  }
  func.func @transform_7(%arg0: i32) -> (i32, i32) {
    %c0_i32 = arith.constant 0 : i32
    %c0_i32_0 = arith.constant 0 : i32
    %c0_i32_1 = arith.constant 0 : i32
    return %c0_i32, %c0_i32_0 : i32, i32
  }
  func.func @transform_8(%arg0: i32) -> (i32, i32) {
    %c0_i32 = arith.constant 0 : i32
    %c0_i32_0 = arith.constant 0 : i32
    %c0_i32_1 = arith.constant 0 : i32
    return %c0_i32, %c0_i32_0 : i32, i32
  }
  func.func @transform_9(%arg0: i32) -> (i32, i32) {
    %c0_i32 = arith.constant 0 : i32
    %c0_i32_0 = arith.constant 0 : i32
    %c0_i32_1 = arith.constant 0 : i32
    return %c0_i32, %c0_i32_0 : i32, i32
  }
  func.func @transform_10(%arg0: i32) -> (i32, i32) {
    %c0_i32 = arith.constant 0 : i32
    %c0_i32_0 = arith.constant 0 : i32
    %c0_i32_1 = arith.constant 0 : i32
    return %c0_i32, %c0_i32_0 : i32, i32
  }
  func.func @transform_11(%arg0: i32) -> (i32, i32) {
    %c0_i32 = arith.constant 0 : i32
    %c0_i32_0 = arith.constant 0 : i32
    %c0_i32_1 = arith.constant 0 : i32
    return %c0_i32, %c0_i32_0 : i32, i32
  }
  func.func @transform_12(%arg0: i32) -> (i32, i32) {
    %c0_i32 = arith.constant 0 : i32
    %c0_i32_0 = arith.constant 0 : i32
    %c0_i32_1 = arith.constant 0 : i32
    return %c0_i32, %c0_i32_0 : i32, i32
  }
  func.func @transform_13(%arg0: i32) -> (i32, i32) {
    %c0_i32 = arith.constant 0 : i32
    %c0_i32_0 = arith.constant 0 : i32
    %c0_i32_1 = arith.constant 0 : i32
    return %c0_i32, %c0_i32_0 : i32, i32
  }
  func.func @transform_14(%arg0: i32) -> (i32, i32) {
    %c0_i32 = arith.constant 0 : i32
    %c0_i32_0 = arith.constant 0 : i32
    %c0_i32_1 = arith.constant 0 : i32
    return %c0_i32, %c0_i32_0 : i32, i32
  }
  func.func @transform_15(%arg0: i32) -> (i32, i32) {
    %c0_i32 = arith.constant 0 : i32
    %c0_i32_0 = arith.constant 0 : i32
    %c0_i32_1 = arith.constant 0 : i32
    return %c0_i32, %c0_i32_0 : i32, i32
  }
  func.func @transform_16(%arg0: i32) -> (i32, i32) {
    %c0_i32 = arith.constant 0 : i32
    %c0_i32_0 = arith.constant 0 : i32
    %c0_i32_1 = arith.constant 0 : i32
    return %c0_i32, %c0_i32_0 : i32, i32
  }
  func.func @transform_17(%arg0: i32) -> (i32, i32) {
    %c0_i32 = arith.constant 0 : i32
    %c0_i32_0 = arith.constant 0 : i32
    %c0_i32_1 = arith.constant 0 : i32
    return %c0_i32, %c0_i32_0 : i32, i32
  }
  func.func @transform_18(%arg0: i32) -> (i32, i32) {
    %c0_i32 = arith.constant 0 : i32
    %c0_i32_0 = arith.constant 0 : i32
    %c0_i32_1 = arith.constant 0 : i32
    return %c0_i32, %c0_i32_0 : i32, i32
  }
  func.func @transform_19(%arg0: i32) -> (i32, i32) {
    %c0_i32 = arith.constant 0 : i32
    %c0_i32_0 = arith.constant 0 : i32
    %c0_i32_1 = arith.constant 0 : i32
    return %c0_i32, %c0_i32_0 : i32, i32
  }
  func.func @transform_20(%arg0: i32) -> (i32, i32) {
    %c0_i32 = arith.constant 0 : i32
    %c0_i32_0 = arith.constant 0 : i32
    %c0_i32_1 = arith.constant 0 : i32
    return %c0_i32, %c0_i32_0 : i32, i32
  }
  func.func @transform_21(%arg0: i32) -> (i32, i32) {
    %c0_i32 = arith.constant 0 : i32
    %c0_i32_0 = arith.constant 0 : i32
    %c0_i32_1 = arith.constant 0 : i32
    return %c0_i32, %c0_i32_0 : i32, i32
  }
  func.func @transform_22(%arg0: i32) -> (i32, i32) {
    %c0_i32 = arith.constant 0 : i32
    %c0_i32_0 = arith.constant 0 : i32
    %c0_i32_1 = arith.constant 0 : i32
    return %c0_i32, %c0_i32_0 : i32, i32
  }
  func.func @transform_23(%arg0: i32) -> (i32, i32) {
    %c0_i32 = arith.constant 0 : i32
    %c0_i32_0 = arith.constant 0 : i32
    %c0_i32_1 = arith.constant 0 : i32
    return %c0_i32, %c0_i32_0 : i32, i32
  }
  func.func @transform_24(%arg0: i32) -> (i32, i32) {
    %c0_i32 = arith.constant 0 : i32
    %c0_i32_0 = arith.constant 0 : i32
    %c0_i32_1 = arith.constant 0 : i32
    return %c0_i32, %c0_i32_0 : i32, i32
  }
  func.func @transform_25(%arg0: i32) -> (i32, i32) {
    %c0_i32 = arith.constant 0 : i32
    %c0_i32_0 = arith.constant 0 : i32
    %c0_i32_1 = arith.constant 0 : i32
    return %c0_i32, %c0_i32_0 : i32, i32
  }
  func.func @transform_26(%arg0: i32) -> (i32, i32) {
    %c0_i32 = arith.constant 0 : i32
    %c0_i32_0 = arith.constant 0 : i32
    %c0_i32_1 = arith.constant 0 : i32
    return %c0_i32, %c0_i32_0 : i32, i32
  }
  func.func @transform_27(%arg0: i32) -> (i32, i32) {
    %c0_i32 = arith.constant 0 : i32
    %c0_i32_0 = arith.constant 0 : i32
    %c0_i32_1 = arith.constant 0 : i32
    return %c0_i32, %c0_i32_0 : i32, i32
  }
  func.func @transform_28(%arg0: i32) -> (i32, i32, i32) {
    %c0_i32 = arith.constant 0 : i32
    %c0_i32_0 = arith.constant 0 : i32
    %c0_i32_1 = arith.constant 0 : i32
    return %arg0, %c0_i32, %c0_i32_0 : i32, i32, i32
  }
}

</mosaic_0001>

<llo_original>
// kernel: tpu_custom_call.1
$region0: #{tpu_custom_call.1}
  #allocation0 [shape = 'u32[]', space=smem, size = 0x4, offset = 0x4, fixed_abs, tag = 'smem constant byte address 0x4 - core index']
  #allocation1 [shape = 'u32[144,128]{1,0:T(1,128)}', space=vmem, size = 0x12000, scoped, tag = 'internal scratch']
  %s0 = inlined_call_operand.vmem [shape: bf16[4,8,32], index: 0, kind: input, shape index: {}]
  %s1 = inlined_call_operand.hbm [shape: f32[4,1,8], index: 1, kind: input, shape index: {}]
  %s2 = inlined_call_operand.vmem [shape: bf16[4,8,32], index: 2, kind: input, shape index: {}]
  %s3 = inlined_call_operand.hbm [shape: f32[4,1,8], index: 3, kind: input, shape index: {}]
  %s4 = inlined_call_operand.vmem [shape: bf16[32,32], index: 4, kind: input, shape index: {}]
  %s5 = inlined_call_operand.hbm [shape: f32[1,32], index: 5, kind: input, shape index: {}]
  %s6 = inlined_call_operand.hbm [shape: bf16[32,32], index: 6, kind: input, shape index: {}]
  %s7 = inlined_call_operand.hbm [shape: f32[1,32], index: 7, kind: input, shape index: {}]
  %s8 = inlined_call_operand.hbm [shape: bf16[32,32], index: 8, kind: input, shape index: {}]
  %s9 = inlined_call_operand.hbm [shape: f32[1,32], index: 9, kind: input, shape index: {}]
  %s10 = inlined_call_operand.vmem [shape: bf16[32,32], index: 10, kind: input, shape index: {}]
  %s11 = inlined_call_operand.hbm [shape: f32[1,32], index: 11, kind: input, shape index: {}]
  %s12 = inlined_call_operand.hbm [shape: bf16[32,32], index: 12, kind: input, shape index: {}]
  %s13 = inlined_call_operand.hbm [shape: f32[1,32], index: 13, kind: input, shape index: {}]
  %s14 = inlined_call_operand.vmem [shape: bf16[32,32], index: 14, kind: input, shape index: {}]
  %s15 = inlined_call_operand.hbm [shape: f32[1,32], index: 15, kind: input, shape index: {}]
  %s16 = inlined_call_operand.hbm [shape: bf16[32,32], index: 16, kind: input, shape index: {}]
  %s17 = inlined_call_operand.hbm [shape: f32[1,32], index: 17, kind: input, shape index: {}]
  %s18 = inlined_call_operand.vmem [shape: bf16[32,32], index: 18, kind: input, shape index: {}]
  %s19 = inlined_call_operand.vmem [shape: f32[1,32], index: 19, kind: input, shape index: {}]
  %s20 = inlined_call_operand.hbm [shape: bf16[32,64], index: 20, kind: input, shape index: {}]
  %s21 = inlined_call_operand.vmem [shape: f32[1,64], index: 21, kind: input, shape index: {}]
  %s22 = inlined_call_operand.vmem [shape: bf16[64,32], index: 22, kind: input, shape index: {}]
  %s23 = inlined_call_operand.vmem [shape: f32[1,32], index: 23, kind: input, shape index: {}]
  %s24 = inlined_call_operand.vmem [shape: f32[1,32], index: 24, kind: input, shape index: {}]
  %s25 = inlined_call_operand.vmem [shape: f32[1,32], index: 25, kind: input, shape index: {}]
  %s26 = inlined_call_operand.vmem [shape: f32[1,32], index: 26, kind: input, shape index: {}]
  %s27 = inlined_call_operand.vmem [shape: f32[1,32], index: 27, kind: input, shape index: {}]
  %s28 = inlined_call_operand.hbm [shape: f32[4,8,32], index: 28, kind: output, shape index: {}]
  %s29 = sld [smem:[#allocation0]]
  $region178: #{tpu_custom_call.1} parent=0
    _
  %s31 = ssub.s32 1, %s29
  %s32 = scalar_select 0, %s31, %s29
  $region1: #{tpu_custom_call.1} parent=0
    #allocation2 [shape = 'u8[2048]{0}', space=vmem, size = 0x800, scoped, tag = 'input window, operand 1, single buffered']
    #allocation3 [shape = 's32[1]{0}', space=sflag, size = 0x4, scoped, tag = 'scoped memory for tpu_custom_call.1']
    #allocation4 [shape = 's32[1]{0}', space=sflag, size = 0x4, scoped, tag = 'scoped memory for tpu_custom_call.1']
    #allocation5 [shape = 'u8[2048]{0}', space=vmem, size = 0x800, scoped, tag = 'input window, operand 3, single buffered']
    #allocation6 [shape = 's32[1]{0}', space=sflag, size = 0x4, scoped, tag = 'scoped memory for tpu_custom_call.1']
    #allocation7 [shape = 'u8[512]{0}', space=vmem, size = 0x400, scoped, tag = 'input window, operand 5, single buffered']
    #allocation8 [shape = 'u8[8192]{0}', space=vmem, size = 0x2000, scoped, tag = 'input window, operand 6, single buffered']
    #allocation9 [shape = 's32[1]{0}', space=sflag, size = 0x4, scoped, tag = 'scoped memory for tpu_custom_call.1']
    #allocation10 [shape = 'u8[512]{0}', space=vmem, size = 0x400, scoped, tag = 'input window, operand 7, single buffered']
    #allocation11 [shape = 'u8[8192]{0}', space=vmem, size = 0x2000, scoped, tag = 'input window, operand 8, single buffered']
    #allocation12 [shape = 's32[1]{0}', space=sflag, size = 0x4, scoped, tag = 'scoped memory for tpu_custom_call.1']
    #allocation13 [shape = 'u8[512]{0}', space=vmem, size = 0x400, scoped, tag = 'input window, operand 9, single buffered']
    #allocation14 [shape = 'u8[512]{0}', space=vmem, size = 0x400, scoped, tag = 'input window, operand 11, single buffered']
    #allocation15 [shape = 's32[1]{0}', space=sflag, size = 0x4, scoped, tag = 'scoped memory for tpu_custom_call.1']
    #allocation16 [shape = 'u8[8192]{0}', space=vmem, size = 0x2000, scoped, tag = 'input window, operand 12, single buffered']
    #allocation17 [shape = 'u8[512]{0}', space=vmem, size = 0x400, scoped, tag = 'input window, operand 13, single buffered']
    #allocation18 [shape = 's32[1]{0}', space=sflag, size = 0x4, scoped, tag = 'scoped memory for tpu_custom_call.1']
    #allocation19 [shape = 'u8[512]{0}', space=vmem, size = 0x400, scoped, tag = 'input window, operand 15, single buffered']
    #allocation20 [shape = 'u8[8192]{0}', space=vmem, size = 0x2000, scoped, tag = 'input window, operand 16, single buffered']
    #allocation21 [shape = 's32[1]{0}', space=sflag, size = 0x4, scoped, tag = 'scoped memory for tpu_custom_call.1']
    #allocation22 [shape = 'u8[512]{0}', space=vmem, size = 0x400, scoped, tag = 'input window, operand 17, single buffered']
    #allocation23 [shape = 'u8[8192]{0}', space=vmem, size = 0x2000, scoped, tag = 'input window, operand 20, single buffered']
    #allocation24 [shape = 's32[1]{0}', space=sflag, size = 0x4, scoped, tag = 'scoped memory for tpu_custom_call.1']
    #allocation25 [shape = 'u8[16384]{0}', space=vmem, size = 0x4000, scoped, tag = 'output window, operand 0, single buffered']
    %33 = vsyncpa [#allocation3], 0
    %34 = vsyncpa [#allocation6], 0
    %35 = vsyncpa [#allocation9], 0
    %36 = vsyncpa [#allocation12], 0
    %37 = vsyncpa [#allocation15], 0
    %38 = vsyncpa [#allocation18], 0
    %39 = vsyncpa [#allocation21], 0
    %40 = vsyncpa [#allocation24], 0
    %41 = vsyncpa [#allocation4], 0
    // Predicated region
    $region2: #{tpu_custom_call.1} parent=1 // pred_check
      _
    $region3: #{tpu_custom_call.1} parent=1 // pred_check_branch
      %43 = sbr.rel (0) target = $region5
    $region4: #{tpu_custom_call.1} parent=1 // pred_region
      _
    $region5: #{tpu_custom_call.1} parent=1 // pred_fallthru
      _
    // Predicated region
    $region6: #{tpu_custom_call.1} parent=1 // pred_check
      _
    $region7: #{tpu_custom_call.1} parent=1 // pred_check_branch
      %45 = sbr.rel (0) target = $region9
    $region8: #{tpu_custom_call.1} parent=1 // pred_region
      %s47 = ssub.s32 64, 64
      %48 = vsyncadd [#allocation3], %s47
      %s49 = sshll.u32 [#allocation2], 4
      %s50 = int_to_ptr.vmem [resolvable:$true] %s49
      %55 = dma.hbm_to_vmem [thread:$0]  %s1, 64, %s50, [#allocation3], 16, 16, 1
    $region9: #{tpu_custom_call.1} parent=1 // pred_fallthru
      _
    // Predicated region
    $region10: #{tpu_custom_call.1} parent=1 // pred_check
      _
    $region11: #{tpu_custom_call.1} parent=1 // pred_check_branch
      %57 = sbr.rel (0) target = $region13
    $region12: #{tpu_custom_call.1} parent=1 // pred_region
      _
    $region13: #{tpu_custom_call.1} parent=1 // pred_fallthru
      _
    // Predicated region
    $region14: #{tpu_custom_call.1} parent=1 // pred_check
      _
    $region15: #{tpu_custom_call.1} parent=1 // pred_check_branch
      %59 = sbr.rel (0) target = $region17
    $region16: #{tpu_custom_call.1} parent=1 // pred_region
      %s61 = ssub.s32 64, 64
      %62 = vsyncadd [#allocation6], %s61
      %s63 = sshll.u32 [#allocation5], 4
      %s64 = int_to_ptr.vmem [resolvable:$true] %s63
      %69 = dma.hbm_to_vmem [thread:$0]  %s3, 64, %s64, [#allocation6], 16, 16, 1
    $region17: #{tpu_custom_call.1} parent=1 // pred_fallthru
      _
    // Predicated region
    $region18: #{tpu_custom_call.1} parent=1 // pred_check
      _
    $region19: #{tpu_custom_call.1} parent=1 // pred_check_branch
      %71 = sbr.rel (0) target = $region21
    $region20: #{tpu_custom_call.1} parent=1 // pred_region
      _
    $region21: #{tpu_custom_call.1} parent=1 // pred_fallthru
      _
    // Predicated region
    $region22: #{tpu_custom_call.1} parent=1 // pred_check
      _
    $region23: #{tpu_custom_call.1} parent=1 // pred_check_branch
      %73 = sbr.rel (0) target = $region25
    $region24: #{tpu_custom_call.1} parent=1 // pred_region
      %s75 = ssub.s32 16, 16
      %76 = vsyncadd [#allocation6], %s75
      %s78 = sshll.u32 [#allocation7], 4
      %s79 = int_to_ptr.vmem [resolvable:$true] %s78
      %81 = dma.hbm_to_vmem [thread:$0]  %s5, 16, %s79, [#allocation6]
    $region25: #{tpu_custom_call.1} parent=1 // pred_fallthru
      _
    // Predicated region
    $region26: #{tpu_custom_call.1} parent=1 // pred_check
      _
    $region27: #{tpu_custom_call.1} parent=1 // pred_check_branch
      %83 = sbr.rel (0) target = $region29
    $region28: #{tpu_custom_call.1} parent=1 // pred_region
      %s85 = ssub.s32 256, 256
      %86 = vsyncadd [#allocation9], %s85
      %s87 = sshll.u32 [#allocation8], 4
      %s88 = int_to_ptr.vmem [resolvable:$true] %s87
      %93 = dma.hbm_to_vmem [thread:$0]  %s6, 256, %s88, [#allocation9], 64, 64, 4
    $region29: #{tpu_custom_call.1} parent=1 // pred_fallthru
      _
    // Predicated region
    $region30: #{tpu_custom_call.1} parent=1 // pred_check
      _
    $region31: #{tpu_custom_call.1} parent=1 // pred_check_branch
      %95 = sbr.rel (0) target = $region33
    $region32: #{tpu_custom_call.1} parent=1 // pred_region
      %s97 = ssub.s32 16, 16
      %98 = vsyncadd [#allocation9], %s97
      %s100 = sshll.u32 [#allocation10], 4
      %s101 = int_to_ptr.vmem [resolvable:$true] %s100
      %103 = dma.hbm_to_vmem [thread:$0]  %s7, 16, %s101, [#allocation9]
    $region33: #{tpu_custom_call.1} parent=1 // pred_fallthru
      _
    // Predicated region
    $region34: #{tpu_custom_call.1} parent=1 // pred_check
      _
    $region35: #{tpu_custom_call.1} parent=1 // pred_check_branch
      %105 = sbr.rel (0) target = $region37
    $region36: #{tpu_custom_call.1} parent=1 // pred_region
      %s107 = ssub.s32 256, 256
      %108 = vsyncadd [#allocation12], %s107
      %s109 = sshll.u32 [#allocation11], 4
      %s110 = int_to_ptr.vmem [resolvable:$true] %s109
      %115 = dma.hbm_to_vmem [thread:$0]  %s8, 256, %s110, [#allocation12], 64, 64, 4
    $region37: #{tpu_custom_call.1} parent=1 // pred_fallthru
      _
    // Predicated region
    $region38: #{tpu_custom_call.1} parent=1 // pred_check
      _
    $region39: #{tpu_custom_call.1} parent=1 // pred_check_branch
      %117 = sbr.rel (0) target = $region41
    $region40: #{tpu_custom_call.1} parent=1 // pred_region
      %s119 = ssub.s32 16, 16
      %120 = vsyncadd [#allocation12], %s119
      %s122 = sshll.u32 [#allocation13], 4
      %s123 = int_to_ptr.vmem [resolvable:$true] %s122
      %125 = dma.hbm_to_vmem [thread:$0]  %s9, 16, %s123, [#allocation12]
    $region41: #{tpu_custom_call.1} parent=1 // pred_fallthru
      _
    // Predicated region
    $region42: #{tpu_custom_call.1} parent=1 // pred_check
      _
    $region43: #{tpu_custom_call.1} parent=1 // pred_check_branch
      %127 = sbr.rel (0) target = $region45
    $region44: #{tpu_custom_call.1} parent=1 // pred_region
      _
    $region45: #{tpu_custom_call.1} parent=1 // pred_fallthru
      _
    // Predicated region
    $region46: #{tpu_custom_call.1} parent=1 // pred_check
      _
    $region47: #{tpu_custom_call.1} parent=1 // pred_check_branch
      %129 = sbr.rel (0) target = $region49
    $region48: #{tpu_custom_call.1} parent=1 // pred_region
      %s131 = ssub.s32 16, 16
      %132 = vsyncadd [#allocation15], %s131
      %s134 = sshll.u32 [#allocation14], 4
      %s135 = int_to_ptr.vmem [resolvable:$true] %s134
      %137 = dma.hbm_to_vmem [thread:$0]  %s11, 16, %s135, [#allocation15]
    $region49: #{tpu_custom_call.1} parent=1 // pred_fallthru
      _
    // Predicated region
    $region50: #{tpu_custom_call.1} parent=1 // pred_check
      _
    $region51: #{tpu_custom_call.1} parent=1 // pred_check_branch
      %139 = sbr.rel (0) target = $region53
    $region52: #{tpu_custom_call.1} parent=1 // pred_region
      %s141 = ssub.s32 256, 256
      %142 = vsyncadd [#allocation15], %s141
      %s143 = sshll.u32 [#allocation16], 4
      %s144 = int_to_ptr.vmem [resolvable:$true] %s143
      %149 = dma.hbm_to_vmem [thread:$0]  %s12, 256, %s144, [#allocation15], 64, 64, 4
    $region53: #{tpu_custom_call.1} parent=1 // pred_fallthru
      _
    // Predicated region
    $region54: #{tpu_custom_call.1} parent=1 // pred_check
      _
    $region55: #{tpu_custom_call.1} parent=1 // pred_check_branch
      %151 = sbr.rel (0) target = $region57
    $region56: #{tpu_custom_call.1} parent=1 // pred_region
      %s153 = ssub.s32 16, 16
      %154 = vsyncadd [#allocation18], %s153
      %s156 = sshll.u32 [#allocation17], 4
      %s157 = int_to_ptr.vmem [resolvable:$true] %s156
      %159 = dma.hbm_to_vmem [thread:$0]  %s13, 16, %s157, [#allocation18]
    $region57: #{tpu_custom_call.1} parent=1 // pred_fallthru
      _
    // Predicated region
    $region58: #{tpu_custom_call.1} parent=1 // pred_check
      _
    $region59: #{tpu_custom_call.1} parent=1 // pred_check_branch
      %161 = sbr.rel (0) target = $region61
    $region60: #{tpu_custom_call.1} parent=1 // pred_region
      _
    $region61: #{tpu_custom_call.1} parent=1 // pred_fallthru
      _
    // Predicated region
    $region62: #{tpu_custom_call.1} parent=1 // pred_check
      _
    $region63: #{tpu_custom_call.1} parent=1 // pred_check_branch
      %163 = sbr.rel (0) target = $region65
    $region64: #{tpu_custom_call.1} parent=1 // pred_region
      %s165 = ssub.s32 16, 16
      %166 = vsyncadd [#allocation18], %s165
      %s168 = sshll.u32 [#allocation19], 4
      %s169 = int_to_ptr.vmem [resolvable:$true] %s168
      %171 = dma.hbm_to_vmem [thread:$0]  %s15, 16, %s169, [#allocation18]
    $region65: #{tpu_custom_call.1} parent=1 // pred_fallthru
      _
    // Predicated region
    $region66: #{tpu_custom_call.1} parent=1 // pred_check
      _
    $region67: #{tpu_custom_call.1} parent=1 // pred_check_branch
      %173 = sbr.rel (0) target = $region69
    $region68: #{tpu_custom_call.1} parent=1 // pred_region
      %s175 = ssub.s32 256, 256
      %176 = vsyncadd [#allocation21], %s175
      %s177 = sshll.u32 [#allocation20], 4
      %s178 = int_to_ptr.vmem [resolvable:$true] %s177
      %183 = dma.hbm_to_vmem [thread:$0]  %s16, 256, %s178, [#allocation21], 64, 64, 4
    $region69: #{tpu_custom_call.1} parent=1 // pred_fallthru
      _
    // Predicated region
    $region70: #{tpu_custom_call.1} parent=1 // pred_check
      _
    $region71: #{tpu_custom_call.1} parent=1 // pred_check_branch
      %185 = sbr.rel (0) target = $region73
    $region72: #{tpu_custom_call.1} parent=1 // pred_region
      %s187 = ssub.s32 16, 16
      %188 = vsyncadd [#allocation21], %s187
      %s190 = sshll.u32 [#allocation22], 4
      %s191 = int_to_ptr.vmem [resolvable:$true] %s190
      %193 = dma.hbm_to_vmem [thread:$0]  %s17, 16, %s191, [#allocation21]
    $region73: #{tpu_custom_call.1} parent=1 // pred_fallthru
      _
    // Predicated region
    $region74: #{tpu_custom_call.1} parent=1 // pred_check
      _
    $region75: #{tpu_custom_call.1} parent=1 // pred_check_branch
      %195 = sbr.rel (0) target = $region77
    $region76: #{tpu_custom_call.1} parent=1 // pred_region
      _
    $region77: #{tpu_custom_call.1} parent=1 // pred_fallthru
      _
    // Predicated region
    $region78: #{tpu_custom_call.1} parent=1 // pred_check
      _
    $region79: #{tpu_custom_call.1} parent=1 // pred_check_branch
      %197 = sbr.rel (0) target = $region81
    $region80: #{tpu_custom_call.1} parent=1 // pred_region
      _
    $region81: #{tpu_custom_call.1} parent=1 // pred_fallthru
      _
    // Predicated region
    $region82: #{tpu_custom_call.1} parent=1 // pred_check
      _
    $region83: #{tpu_custom_call.1} parent=1 // pred_check_branch
      %199 = sbr.rel (0) target = $region85
    $region84: #{tpu_custom_call.1} parent=1 // pred_region
      %s201 = ssub.s32 256, 256
      %202 = vsyncadd [#allocation24], %s201
      %s203 = sshll.u32 [#allocation23], 4
      %s204 = int_to_ptr.vmem [resolvable:$true] %s203
      %209 = dma.hbm_to_vmem [thread:$0]  %s20, 256, %s204, [#allocation24], 64, 64, 4
    $region85: #{tpu_custom_call.1} parent=1 // pred_fallthru
      _
    // Predicated region
    $region86: #{tpu_custom_call.1} parent=1 // pred_check
      _
    $region87: #{tpu_custom_call.1} parent=1 // pred_check_branch
      %211 = sbr.rel (0) target = $region89
    $region88: #{tpu_custom_call.1} parent=1 // pred_region
      _
    $region89: #{tpu_custom_call.1} parent=1 // pred_fallthru
      _
    // Predicated region
    $region90: #{tpu_custom_call.1} parent=1 // pred_check
      _
    $region91: #{tpu_custom_call.1} parent=1 // pred_check_branch
      %213 = sbr.rel (0) target = $region93
    $region92: #{tpu_custom_call.1} parent=1 // pred_region
      _
    $region93: #{tpu_custom_call.1} parent=1 // pred_fallthru
      _
    // Predicated region
    $region94: #{tpu_custom_call.1} parent=1 // pred_check
      _
    $region95: #{tpu_custom_call.1} parent=1 // pred_check_branch
      %215 = sbr.rel (0) target = $region97
    $region96: #{tpu_custom_call.1} parent=1 // pred_region
      _
    $region97: #{tpu_custom_call.1} parent=1 // pred_fallthru
      _
    // Predicated region
    $region98: #{tpu_custom_call.1} parent=1 // pred_check
      _
    $region99: #{tpu_custom_call.1} parent=1 // pred_check_branch
      %217 = sbr.rel (0) target = $region101
    $region100: #{tpu_custom_call.1} parent=1 // pred_region
      _
    $region101: #{tpu_custom_call.1} parent=1 // pred_fallthru
      _
    // Predicated region
    $region102: #{tpu_custom_call.1} parent=1 // pred_check
      _
    $region103: #{tpu_custom_call.1} parent=1 // pred_check_branch
      %219 = sbr.rel (0) target = $region105
    $region104: #{tpu_custom_call.1} parent=1 // pred_region
      _
    $region105: #{tpu_custom_call.1} parent=1 // pred_fallthru
      _
    // Predicated region
    $region106: #{tpu_custom_call.1} parent=1 // pred_check
      _
    $region107: #{tpu_custom_call.1} parent=1 // pred_check_branch
      %221 = sbr.rel (0) target = $region109
    $region108: #{tpu_custom_call.1} parent=1 // pred_region
      _
    $region109: #{tpu_custom_call.1} parent=1 // pred_fallthru
      _
    // Predicated region
    $region110: #{tpu_custom_call.1} parent=1 // pred_check
      _
    $region111: #{tpu_custom_call.1} parent=1 // pred_check_branch
      %223 = sbr.rel (0) target = $region113
    $region112: #{tpu_custom_call.1} parent=1 // pred_region
      _
    $region113: #{tpu_custom_call.1} parent=1 // pred_fallthru
      _
    // Predicated region
    $region114: #{tpu_custom_call.1} parent=1 // pred_check
      _
    $region115: #{tpu_custom_call.1} parent=1 // pred_check_branch
      %225 = sbr.rel (0) target = $region117
    $region116: #{tpu_custom_call.1} parent=1 // pred_region
      %226 = dma.done [#allocation3], 64
    $region117: #{tpu_custom_call.1} parent=1 // pred_fallthru
      _
    // Predicated region
    $region118: #{tpu_custom_call.1} parent=1 // pred_check
      _
    $region119: #{tpu_custom_call.1} parent=1 // pred_check_branch
      %228 = sbr.rel (0) target = $region121
    $region120: #{tpu_custom_call.1} parent=1 // pred_region
      %229 = dma.done [#allocation6], 64
    $region121: #{tpu_custom_call.1} parent=1 // pred_fallthru
      _
    // Predicated region
    $region122: #{tpu_custom_call.1} parent=1 // pred_check
      _
    $region123: #{tpu_custom_call.1} parent=1 // pred_check_branch
      %231 = sbr.rel (0) target = $region125
    $region124: #{tpu_custom_call.1} parent=1 // pred_region
      %232 = dma.done [#allocation6], 16
    $region125: #{tpu_custom_call.1} parent=1 // pred_fallthru
      _
    // Predicated region
    $region126: #{tpu_custom_call.1} parent=1 // pred_check
      _
    $region127: #{tpu_custom_call.1} parent=1 // pred_check_branch
      %234 = sbr.rel (0) target = $region129
    $region128: #{tpu_custom_call.1} parent=1 // pred_region
      %235 = dma.done [#allocation9], 256
    $region129: #{tpu_custom_call.1} parent=1 // pred_fallthru
      _
    // Predicated region
    $region130: #{tpu_custom_call.1} parent=1 // pred_check
      _
    $region131: #{tpu_custom_call.1} parent=1 // pred_check_branch
      %237 = sbr.rel (0) target = $region133
    $region132: #{tpu_custom_call.1} parent=1 // pred_region
      %238 = dma.done [#allocation9], 16
    $region133: #{tpu_custom_call.1} parent=1 // pred_fallthru
      _
    // Predicated region
    $region134: #{tpu_custom_call.1} parent=1 // pred_check
      _
    $region135: #{tpu_custom_call.1} parent=1 // pred_check_branch
      %240 = sbr.rel (0) target = $region137
    $region136: #{tpu_custom_call.1} parent=1 // pred_region
      %241 = dma.done [#allocation12], 256
    $region137: #{tpu_custom_call.1} parent=1 // pred_fallthru
      _
    // Predicated region
    $region138: #{tpu_custom_call.1} parent=1 // pred_check
      _
    $region139: #{tpu_custom_call.1} parent=1 // pred_check_branch
      %243 = sbr.rel (0) target = $region141
    $region140: #{tpu_custom_call.1} parent=1 // pred_region
      %244 = dma.done [#allocation12], 16
    $region141: #{tpu_custom_call.1} parent=1 // pred_fallthru
      _
    // Predicated region
    $region142: #{tpu_custom_call.1} parent=1 // pred_check
      _
    $region143: #{tpu_custom_call.1} parent=1 // pred_check_branch
      %246 = sbr.rel (0) target = $region145
    $region144: #{tpu_custom_call.1} parent=1 // pred_region
      %247 = dma.done [#allocation15], 16
    $region145: #{tpu_custom_call.1} parent=1 // pred_fallthru
      _
    // Predicated region
    $region146: #{tpu_custom_call.1} parent=1 // pred_check
      _
    $region147: #{tpu_custom_call.1} parent=1 // pred_check_branch
      %249 = sbr.rel (0) target = $region149
    $region148: #{tpu_custom_call.1} parent=1 // pred_region
      %250 = dma.done [#allocation15], 256
    $region149: #{tpu_custom_call.1} parent=1 // pred_fallthru
      _
    // Predicated region
    $region150: #{tpu_custom_call.1} parent=1 // pred_check
      _
    $region151: #{tpu_custom_call.1} parent=1 // pred_check_branch
      %252 = sbr.rel (0) target = $region153
    $region152: #{tpu_custom_call.1} parent=1 // pred_region
      %253 = dma.done [#allocation18], 16
    $region153: #{tpu_custom_call.1} parent=1 // pred_fallthru
      _
    // Predicated region
    $region154: #{tpu_custom_call.1} parent=1 // pred_check
      _
    $region155: #{tpu_custom_call.1} parent=1 // pred_check_branch
      %255 = sbr.rel (0) target = $region157
    $region156: #{tpu_custom_call.1} parent=1 // pred_region
      %256 = dma.done [#allocation18], 16
    $region157: #{tpu_custom_call.1} parent=1 // pred_fallthru
      _
    // Predicated region
    $region158: #{tpu_custom_call.1} parent=1 // pred_check
      _
    $region159: #{tpu_custom_call.1} parent=1 // pred_check_branch
      %258 = sbr.rel (0) target = $region161
    $region160: #{tpu_custom_call.1} parent=1 // pred_region
      %259 = dma.done [#allocation21], 256
    $region161: #{tpu_custom_call.1} parent=1 // pred_fallthru
      _
    // Predicated region
    $region162: #{tpu_custom_call.1} parent=1 // pred_check
      _
    $region163: #{tpu_custom_call.1} parent=1 // pred_check_branch
      %261 = sbr.rel (0) target = $region165
    $region164: #{tpu_custom_call.1} parent=1 // pred_region
      %262 = dma.done [#allocation21], 16
    $region165: #{tpu_custom_call.1} parent=1 // pred_fallthru
      _
    // Predicated region
    $region166: #{tpu_custom_call.1} parent=1 // pred_check
      _
    $region167: #{tpu_custom_call.1} parent=1 // pred_check_branch
      %264 = sbr.rel (0) target = $region169
    $region168: #{tpu_custom_call.1} parent=1 // pred_region
      %265 = dma.done [#allocation24], 256
    $region169: #{tpu_custom_call.1} parent=1 // pred_fallthru
      _
    %v267 = vld [vmem:[%s0] sm:$0xf]
    %v268 = vld [vmem:[%s0 + $0x4] sm:$0xf]
    %v269 = vld [vmem:[%s0 + $0x8] sm:$0xf]
    %v270 = vld [vmem:[%s0 + $0xc] sm:$0xf]
    %v271 = vld [vmem:[%s2] sm:$0xf]
    %v272 = vld [vmem:[%s2 + $0x4] sm:$0xf]
    %v273 = vld [vmem:[%s2 + $0x8] sm:$0xf]
    %v274 = vld [vmem:[%s2 + $0xc] sm:$0xf]
    %v275 = vunpack.c.l.bf16 %v267
    %v276 = vunpack.c.l.bf16 %v268
    %v277 = vunpack.c.l.bf16 %v269
    %v278 = vunpack.c.l.bf16 %v270
    %v279 = vld [vmem:[#allocation2] sm:$0x1]
    %v280 = vld [vmem:[#allocation2 + $0x1] sm:$0x1]
    %v281 = vld [vmem:[#allocation2 + $0x2] sm:$0x1]
    %v282 = vld [vmem:[#allocation2 + $0x3] sm:$0x1]
    %v283 = vld [vmem:[#allocation5] sm:$0x1]
    %v284 = vld [vmem:[#allocation5 + $0x1] sm:$0x1]
    %v285 = vld [vmem:[#allocation5 + $0x2] sm:$0x1]
    %v286 = vld [vmem:[#allocation5 + $0x3] sm:$0x1]
    %v287 = vlaneseq
    %v288 = vshrl.u32 %v287, 7
    %v289 = vlaneseq
    %v290 = vand.u32 %v289, 127
    %vm291 = vcmp.ge.s32.totalorder %v288, %v290
    %vm292 = vcmp.gt.f32.partialorder %v279, 0.5
    %vm293 = vcmp.gt.f32.partialorder %v280, 0.5
    %vm294 = vcmp.gt.f32.partialorder %v281, 0.5
    %vm295 = vcmp.gt.f32.partialorder %v282, 0.5
    %v296 = vsel %vm292, 1, 0
    %v297 = vsel %vm293, 1, 0
    %v298 = vsel %vm294, 1, 0
    %v299 = vsel %vm295, 1, 0
    %v300 = vlaneseq
    %v301 = vshrl.u32 %v300, 7
    %v302 = vsub.s32 0, %v301
    %v303 = vrot.slane %v296, %v302
    %v304 = vlaneseq
    %v305 = vshrl.u32 %v304, 7
    %v306 = vsub.s32 0, %v305
    %v307 = vrot.slane %v297, %v306
    %v308 = vlaneseq
    %v309 = vshrl.u32 %v308, 7
    %v310 = vsub.s32 0, %v309
    %v311 = vrot.slane %v298, %v310
    %v312 = vlaneseq
    %v313 = vshrl.u32 %v312, 7
    %v314 = vsub.s32 0, %v313
    %v315 = vrot.slane %v299, %v314
    %vm316 = vcmp.eq.s32.totalorder %v303, 1
    %vm317 = vcmp.eq.s32.totalorder %v307, 1
    %vm318 = vcmp.eq.s32.totalorder %v311, 1
    %vm319 = vcmp.eq.s32.totalorder %v315, 1
    %v320 = vsel %vm291, 1, 0
    %vm321 = vcmp.eq.s32.totalorder %v320, 1
    %vm322 = vmand %vm316, %vm321
    %vm323 = vmand %vm317, %vm321
    %vm324 = vmand %vm318, %vm321
    %vm325 = vmand %vm319, %vm321
    %v326 = vsel %vm322, 0.0, -1e+09
    %v327 = vsel %vm323, 0.0, -1e+09
    %v328 = vsel %vm324, 0.0, -1e+09
    %v329 = vsel %vm325, 0.0, -1e+09
    %vm330 = vcmp.gt.f32.partialorder %v283, 0.5
    %vm331 = vcmp.gt.f32.partialorder %v284, 0.5
    %vm332 = vcmp.gt.f32.partialorder %v285, 0.5
    %vm333 = vcmp.gt.f32.partialorder %v286, 0.5
    %v334 = vsel %vm330, 0.0, -1e+09
    %v335 = vsel %vm331, 0.0, -1e+09
    %v336 = vsel %vm332, 0.0, -1e+09
    %v337 = vsel %vm333, 0.0, -1e+09
    %v338 = vld [vmem:[%s4] sm:$0xf]
    %v339 = vld [vmem:[%s4 + $0x4] sm:$0xf]
    %v340 = vld [vmem:[%s4 + $0x8] sm:$0xf]
    %v341 = vld [vmem:[%s4 + $0xc] sm:$0xf]
    %v342 = vld [vmem:[#allocation7] sm:$0x1]
    %v343 = vld [vmem:[#allocation8] sm:$0xf]
    %v344 = vld [vmem:[#allocation8 + $0x4] sm:$0xf]
    %v345 = vld [vmem:[#allocation8 + $0x8] sm:$0xf]
    %v346 = vld [vmem:[#allocation8 + $0xc] sm:$0xf]
    %v347 = vld [vmem:[#allocation10] sm:$0x1]
    %v348 = vld [vmem:[#allocation11] sm:$0xf]
    %v349 = vld [vmem:[#allocation11 + $0x4] sm:$0xf]
    %v350 = vld [vmem:[#allocation11 + $0x8] sm:$0xf]
    %v351 = vld [vmem:[#allocation11 + $0xc] sm:$0xf]
    %v352 = vld [vmem:[#allocation13] sm:$0x1]
    %v353 = vld [vmem:[%s10] sm:$0xf]
    %v354 = vld [vmem:[%s10 + $0x4] sm:$0xf]
    %v355 = vld [vmem:[%s10 + $0x8] sm:$0xf]
    %v356 = vld [vmem:[%s10 + $0xc] sm:$0xf]
    %v357 = vld [vmem:[#allocation14] sm:$0x1]
    %v359 = vlaneseq
    %v360 = vshrl.u32 %v359, 7
    %v361 = vsub.s32 0, %v360
    %v362 = vrot.slane %v342, %v361
    %v368 = vunpack.c.l.b16 %v267
    %v369 = vunpack.c.l.b16 %v268
    %v370 = vunpack.c.l.b16 %v269
    %v371 = vunpack.c.l.b16 %v270
    %v372 = vpack.c.b16 %v369, %v368
    %v373 = vpack.c.b16 %v371, %v370
    %v378 = vunpack.c.l.b16 %v338
    %v379 = vunpack.c.l.b16 %v339
    %v380 = vunpack.c.l.b16 %v340
    %v381 = vunpack.c.l.b16 %v341
    %v382 = vpack.c.b16 %v379, %v378
    %v383 = vpack.c.b16 %v381, %v380
    %vm386 = vcmask 261120
    %v388 = vsel %vm386, %v372, 0
    %v391 = vsel %vm386, %v373, 0
    %393 = vmatprep.subr.bf16.mxu0 0
    %394 = vmatpush1.bf16.msra.mxu0 %v382
    %395 = vmatprep.subr.bf16.mxu0 0
    %396 = vmatpush1.bf16.msra.mxu0 %v383
    %397 = vmatprep.subr.bf16.mxu0 0
    %398 = vmatpush1.bf16.msra.mxu0 0
    %399 = vmatprep.subr.bf16.mxu0 0
    %400 = vmatpush1.bf16.msra.mxu0 0
    %401 = vmatprep.subr.bf16.mxu0 0
    %402 = vmatpush1.bf16.msra.mxu0 0
    %403 = vmatprep.subr.bf16.mxu0 0
    %404 = vmatpush1.bf16.msra.mxu0 0
    %405 = vmatprep.subr.bf16.mxu0 0
    %406 = vmatpush1.bf16.msra.mxu0 0
    %407 = vmatprep.subr.bf16.mxu0 0
    %408 = vmatpush1.bf16.msra.mxu0 0
    %409 = vmatprep.subr.bf16.mxu0 0
    %410 = vmatpush1.bf16.msra.mxu0 0
    %411 = vmatprep.subr.bf16.mxu0 0
    %412 = vmatpush1.bf16.msra.mxu0 0
    %413 = vmatprep.subr.bf16.mxu0 0
    %414 = vmatpush1.bf16.msra.mxu0 0
    %415 = vmatprep.subr.bf16.mxu0 0
    %416 = vmatpush1.bf16.msra.mxu0 0
    %417 = vmatprep.subr.bf16.mxu0 0
    %418 = vmatpush1.bf16.msra.mxu0 0
    %419 = vmatprep.subr.bf16.mxu0 0
    %420 = vmatpush1.bf16.msra.mxu0 0
    %421 = vmatprep.subr.bf16.mxu0 0
    %422 = vmatpush1.bf16.msra.mxu0 0
    %423 = vmatprep.subr.bf16.mxu0 0
    %424 = vmatpush1.bf16.msra.mxu0 0
    %425 = vmatprep.mubr.bf16.mxu0 0
    %426 = vmatmul.mubr.bf16.gmra.mrb[0].mxu0 %v388
    %v427 = vpop.f32.mrb[0].mxu0
    %v428 = vadd.f32 %v362, %v427
    %v429 = vpop.f32.mrb[0].mxu0
    %v430 = vpop.f32.mrb[0].mxu0
    %v431 = vadd.f32 %v362, %v430
    %v432 = vpop.f32.mrb[0].mxu0
    %433 = vmatprep.mubr.bf16.mxu0 0
    %434 = vmatmul.mubr.bf16.gmra.mrb[0].mxu0 %v391
    %v435 = vpop.f32.mrb[0].mxu0
    %v436 = vadd.f32 %v362, %v435
    %v437 = vpop.f32.mrb[0].mxu0
    %v438 = vpop.f32.mrb[0].mxu0
    %v439 = vadd.f32 %v362, %v438
    %v440 = vpop.f32.mrb[0].mxu0
    %441 = vdwg.mxu0
    %v442 = vmul.f32 %v428, 0.35355338
    %v443 = vmul.f32 %v431, 0.35355338
    %v444 = vmul.f32 %v436, 0.35355338
    %v445 = vmul.f32 %v439, 0.35355338
    %v447 = vlaneseq
    %v448 = vshrl.u32 %v447, 7
    %v449 = vsub.s32 0, %v448
    %v450 = vrot.slane %v347, %v449
    %v456 = vunpack.c.l.b16 %v343
    %v457 = vunpack.c.l.b16 %v344
    %v458 = vunpack.c.l.b16 %v345
    %v459 = vunpack.c.l.b16 %v346
    %v460 = vpack.c.b16 %v457, %v456
    %v461 = vpack.c.b16 %v459, %v458
    %464 = vmatprep.subr.bf16.mxu0 0
    %465 = vmatpush1.bf16.msra.mxu0 %v460
    %466 = vmatprep.subr.bf16.mxu0 0
    %467 = vmatpush1.bf16.msra.mxu0 %v461
    %468 = vmatprep.subr.bf16.mxu0 0
    %469 = vmatpush1.bf16.msra.mxu0 0
    %470 = vmatprep.subr.bf16.mxu0 0
    %471 = vmatpush1.bf16.msra.mxu0 0
    %472 = vmatprep.subr.bf16.mxu0 0
    %473 = vmatpush1.bf16.msra.mxu0 0
    %474 = vmatprep.subr.bf16.mxu0 0
    %475 = vmatpush1.bf16.msra.mxu0 0
    %476 = vmatprep.subr.bf16.mxu0 0
    %477 = vmatpush1.bf16.msra.mxu0 0
    %478 = vmatprep.subr.bf16.mxu0 0
    %479 = vmatpush1.bf16.msra.mxu0 0
    %480 = vmatprep.subr.bf16.mxu0 0
    %481 = vmatpush1.bf16.msra.mxu0 0
    %482 = vmatprep.subr.bf16.mxu0 0
    %483 = vmatpush1.bf16.msra.mxu0 0
    %484 = vmatprep.subr.bf16.mxu0 0
    %485 = vmatpush1.bf16.msra.mxu0 0
    %486 = vmatprep.subr.bf16.mxu0 0
    %487 = vmatpush1.bf16.msra.mxu0 0
    %488 = vmatprep.subr.bf16.mxu0 0
    %489 = vmatpush1.bf16.msra.mxu0 0
    %490 = vmatprep.subr.bf16.mxu0 0
    %491 = vmatpush1.bf16.msra.mxu0 0
    %492 = vmatprep.subr.bf16.mxu0 0
    %493 = vmatpush1.bf16.msra.mxu0 0
    %494 = vmatprep.subr.bf16.mxu0 0
    %495 = vmatpush1.bf16.msra.mxu0 0
    %496 = vmatprep.mubr.bf16.mxu0 0
    %497 = vmatmul.mubr.bf16.gmra.mrb[0].mxu0 %v388
    %v498 = vpop.f32.mrb[0].mxu0
    %v499 = vadd.f32 %v450, %v498
    %v500 = vpop.f32.mrb[0].mxu0
    %v501 = vpop.f32.mrb[0].mxu0
    %v502 = vadd.f32 %v450, %v501
    %v503 = vpop.f32.mrb[0].mxu0
    %504 = vmatprep.mubr.bf16.mxu0 0
    %505 = vmatmul.mubr.bf16.gmra.mrb[0].mxu0 %v391
    %v506 = vpop.f32.mrb[0].mxu0
    %v507 = vadd.f32 %v450, %v506
    %v508 = vpop.f32.mrb[0].mxu0
    %v509 = vpop.f32.mrb[0].mxu0
    %v510 = vadd.f32 %v450, %v509
    %v511 = vpop.f32.mrb[0].mxu0
    %512 = vdwg.mxu0
    %v514 = vlaneseq
    %v515 = vshrl.u32 %v514, 7
    %v516 = vsub.s32 0, %v515
    %v517 = vrot.slane %v352, %v516
    %v523 = vunpack.c.l.b16 %v348
    %v524 = vunpack.c.l.b16 %v349
    %v525 = vunpack.c.l.b16 %v350
    %v526 = vunpack.c.l.b16 %v351
    %v527 = vpack.c.b16 %v524, %v523
    %v528 = vpack.c.b16 %v526, %v525
    %531 = vmatprep.subr.bf16.mxu0 0
    %532 = vmatpush1.bf16.msra.mxu0 %v527
    %533 = vmatprep.subr.bf16.mxu0 0
    %534 = vmatpush1.bf16.msra.mxu0 %v528
    %535 = vmatprep.subr.bf16.mxu0 0
    %536 = vmatpush1.bf16.msra.mxu0 0
    %537 = vmatprep.subr.bf16.mxu0 0
    %538 = vmatpush1.bf16.msra.mxu0 0
    %539 = vmatprep.subr.bf16.mxu0 0
    %540 = vmatpush1.bf16.msra.mxu0 0
    %541 = vmatprep.subr.bf16.mxu0 0
    %542 = vmatpush1.bf16.msra.mxu0 0
    %543 = vmatprep.subr.bf16.mxu0 0
    %544 = vmatpush1.bf16.msra.mxu0 0
    %545 = vmatprep.subr.bf16.mxu0 0
    %546 = vmatpush1.bf16.msra.mxu0 0
    %547 = vmatprep.subr.bf16.mxu0 0
    %548 = vmatpush1.bf16.msra.mxu0 0
    %549 = vmatprep.subr.bf16.mxu0 0
    %550 = vmatpush1.bf16.msra.mxu0 0
    %551 = vmatprep.subr.bf16.mxu0 0
    %552 = vmatpush1.bf16.msra.mxu0 0
    %553 = vmatprep.subr.bf16.mxu0 0
    %554 = vmatpush1.bf16.msra.mxu0 0
    %555 = vmatprep.subr.bf16.mxu0 0
    %556 = vmatpush1.bf16.msra.mxu0 0
    %557 = vmatprep.subr.bf16.mxu0 0
    %558 = vmatpush1.bf16.msra.mxu0 0
    %559 = vmatprep.subr.bf16.mxu0 0
    %560 = vmatpush1.bf16.msra.mxu0 0
    %561 = vmatprep.subr.bf16.mxu0 0
    %562 = vmatpush1.bf16.msra.mxu0 0
    %563 = vmatprep.mubr.bf16.mxu0 0
    %564 = vmatmul.mubr.bf16.gmra.mrb[0].mxu0 %v388
    %v565 = vpop.f32.mrb[0].mxu0
    %v566 = vadd.f32 %v517, %v565
    %v567 = vpop.f32.mrb[0].mxu0
    %v568 = vpop.f32.mrb[0].mxu0
    %v569 = vadd.f32 %v517, %v568
    %v570 = vpop.f32.mrb[0].mxu0
    %571 = vmatprep.mubr.bf16.mxu0 0
    %572 = vmatmul.mubr.bf16.gmra.mrb[0].mxu0 %v391
    %v573 = vpop.f32.mrb[0].mxu0
    %v574 = vadd.f32 %v517, %v573
    %v575 = vpop.f32.mrb[0].mxu0
    %v576 = vpop.f32.mrb[0].mxu0
    %v577 = vadd.f32 %v517, %v576
    %v578 = vpop.f32.mrb[0].mxu0
    %579 = vdwg.mxu0
    %v580 = vpack.c.bf16 %v443, %v442
    %v581 = vpack.c.bf16 %v445, %v444
    %v584 = vunpack.c.l.b16 %v580
    %v585 = vunpack.c.h.b16 %v580
    %v586 = vunpack.c.l.b16 %v581
    %v587 = vunpack.c.h.b16 %v581
    %v588 = vpack.c.b16 %v584, %v584
    %v589 = vpack.c.b16 %v585, %v585
    %v590 = vpack.c.b16 %v586, %v586
    %v591 = vpack.c.b16 %v587, %v587
    %592 = vrot.lane.b32.xlu0 %v588, 120
    %v593 = vpop.permute.xlu0 %592
    %594 = vrot.lane.b32.xlu0 %v589, 120
    %v595 = vpop.permute.xlu0 %594
    %596 = vrot.lane.b32.xlu0 %v590, 120
    %v597 = vpop.permute.xlu0 %596
    %598 = vrot.lane.b32.xlu0 %v591, 120
    %v599 = vpop.permute.xlu0 %598
    %600 = vrot.lane.b32.xlu0 %v588, 112
    %v601 = vpop.permute.xlu0 %600
    %602 = vrot.lane.b32.xlu0 %v589, 112
    %v603 = vpop.permute.xlu0 %602
    %604 = vrot.lane.b32.xlu0 %v590, 112
    %v605 = vpop.permute.xlu0 %604
    %606 = vrot.lane.b32.xlu0 %v591, 112
    %v607 = vpop.permute.xlu0 %606
    %608 = vrot.lane.b32.xlu0 %v588, 104
    %v609 = vpop.permute.xlu0 %608
    %610 = vrot.lane.b32.xlu0 %v589, 104
    %v611 = vpop.permute.xlu0 %610
    %612 = vrot.lane.b32.xlu0 %v590, 104
    %v613 = vpop.permute.xlu0 %612
    %614 = vrot.lane.b32.xlu0 %v591, 104
    %v615 = vpop.permute.xlu0 %614
    %v616 = vpack.c.bf16 %v502, %v499
    %v617 = vpack.c.bf16 %v510, %v507
    %v620 = vunpack.c.l.b16 %v616
    %v621 = vunpack.c.h.b16 %v616
    %v622 = vunpack.c.l.b16 %v617
    %v623 = vunpack.c.h.b16 %v617
    %v624 = vpack.c.b16 %v620, %v620
    %v625 = vpack.c.b16 %v621, %v621
    %v626 = vpack.c.b16 %v622, %v622
    %v627 = vpack.c.b16 %v623, %v623
    %628 = vrot.lane.b32.xlu0 %v624, 120
    %v629 = vpop.permute.xlu0 %628
    %630 = vrot.lane.b32.xlu0 %v625, 120
    %v631 = vpop.permute.xlu0 %630
    %632 = vrot.lane.b32.xlu0 %v626, 120
    %v633 = vpop.permute.xlu0 %632
    %634 = vrot.lane.b32.xlu0 %v627, 120
    %v635 = vpop.permute.xlu0 %634
    %636 = vrot.lane.b32.xlu0 %v624, 112
    %v637 = vpop.permute.xlu0 %636
    %638 = vrot.lane.b32.xlu0 %v625, 112
    %v639 = vpop.permute.xlu0 %638
    %640 = vrot.lane.b32.xlu0 %v626, 112
    %v641 = vpop.permute.xlu0 %640
    %642 = vrot.lane.b32.xlu0 %v627, 112
    %v643 = vpop.permute.xlu0 %642
    %644 = vrot.lane.b32.xlu0 %v624, 104
    %v645 = vpop.permute.xlu0 %644
    %646 = vrot.lane.b32.xlu0 %v625, 104
    %v647 = vpop.permute.xlu0 %646
    %648 = vrot.lane.b32.xlu0 %v626, 104
    %v649 = vpop.permute.xlu0 %648
    %650 = vrot.lane.b32.xlu0 %v627, 104
    %v651 = vpop.permute.xlu0 %650
    %v652 = vpack.c.bf16 %v569, %v566
    %v653 = vpack.c.bf16 %v577, %v574
    %v656 = vunpack.c.l.b16 %v652
    %v657 = vunpack.c.h.b16 %v652
    %v658 = vunpack.c.l.b16 %v653
    %v659 = vunpack.c.h.b16 %v653
    %v660 = vpack.c.b16 %v656, %v656
    %v661 = vpack.c.b16 %v657, %v657
    %v662 = vpack.c.b16 %v658, %v658
    %v663 = vpack.c.b16 %v659, %v659
    %664 = vrot.lane.b32.xlu0 %v660, 120
    %v665 = vpop.permute.xlu0 %664
    %666 = vrot.lane.b32.xlu0 %v661, 120
    %v667 = vpop.permute.xlu0 %666
    %668 = vrot.lane.b32.xlu0 %v662, 120
    %v669 = vpop.permute.xlu0 %668
    %670 = vrot.lane.b32.xlu0 %v663, 120
    %v671 = vpop.permute.xlu0 %670
    %672 = vrot.lane.b32.xlu0 %v660, 112
    %v673 = vpop.permute.xlu0 %672
    %674 = vrot.lane.b32.xlu0 %v661, 112
    %v675 = vpop.permute.xlu0 %674
    %676 = vrot.lane.b32.xlu0 %v662, 112
    %v677 = vpop.permute.xlu0 %676
    %678 = vrot.lane.b32.xlu0 %v663, 112
    %v679 = vpop.permute.xlu0 %678
    %680 = vrot.lane.b32.xlu0 %v660, 104
    %v681 = vpop.permute.xlu0 %680
    %682 = vrot.lane.b32.xlu0 %v661, 104
    %v683 = vpop.permute.xlu0 %682
    %684 = vrot.lane.b32.xlu0 %v662, 104
    %v685 = vpop.permute.xlu0 %684
    %686 = vrot.lane.b32.xlu0 %v663, 104
    %v687 = vpop.permute.xlu0 %686
    %vm688 = vcmask 64512
    %v690 = vsel %vm688, %v588, 0
    %v693 = vsel %vm688, %v624, 0
    %695 = vmatprep.subr.bf16.mxu0 0
    %696 = vmatpush1.bf16.xpose.msra.mxu0 %v693
    %697 = vmatprep.subr.bf16.mxu0 0
    %698 = vmatpush1.bf16.xpose.msra.mxu0 0
    %699 = vmatprep.subr.bf16.mxu0 0
    %700 = vmatpush1.bf16.xpose.msra.mxu0 0
    %701 = vmatprep.subr.bf16.mxu0 0
    %702 = vmatpush1.bf16.xpose.msra.mxu0 0
    %703 = vmatprep.subr.bf16.mxu0 0
    %704 = vmatpush1.bf16.xpose.msra.mxu0 0
    %705 = vmatprep.subr.bf16.mxu0 0
    %706 = vmatpush1.bf16.xpose.msra.mxu0 0
    %707 = vmatprep.subr.bf16.mxu0 0
    %708 = vmatpush1.bf16.xpose.msra.mxu0 0
    %709 = vmatprep.subr.bf16.mxu0 0
    %710 = vmatpush1.bf16.xpose.msra.mxu0 0
    %711 = vmatprep.subr.bf16.mxu0 0
    %712 = vmatpush1.bf16.xpose.msra.mxu0 0
    %713 = vmatprep.subr.bf16.mxu0 0
    %714 = vmatpush1.bf16.xpose.msra.mxu0 0
    %715 = vmatprep.subr.bf16.mxu0 0
    %716 = vmatpush1.bf16.xpose.msra.mxu0 0
    %717 = vmatprep.subr.bf16.mxu0 0
    %718 = vmatpush1.bf16.xpose.msra.mxu0 0
    %719 = vmatprep.subr.bf16.mxu0 0
    %720 = vmatpush1.bf16.xpose.msra.mxu0 0
    %721 = vmatprep.subr.bf16.mxu0 0
    %722 = vmatpush1.bf16.xpose.msra.mxu0 0
    %723 = vmatprep.subr.bf16.mxu0 0
    %724 = vmatpush1.bf16.xpose.msra.mxu0 0
    %725 = vmatprep.subr.bf16.mxu0 0
    %726 = vmatpush1.bf16.xpose.msra.mxu0 0
    %727 = vmatprep.mubr.bf16.mxu0 0
    %728 = vmatmul.mubr.bf16.gmra.mrb[0].mxu0 %v690
    %v729 = vpop.f32.mrb[0].mxu0
    %v730 = vadd.f32 0.0, %v729
    %v731 = vpop.f32.mrb[0].mxu0
    %v732 = vpop.f32.mrb[0].mxu0
    %v733 = vpop.f32.mrb[0].mxu0
    %734 = vdwg.mxu0
    %v736 = vsel %vm688, %v589, 0
    %v739 = vsel %vm688, %v625, 0
    %741 = vmatprep.subr.bf16.mxu0 0
    %742 = vmatpush1.bf16.xpose.msra.mxu0 %v739
    %743 = vmatprep.subr.bf16.mxu0 0
    %744 = vmatpush1.bf16.xpose.msra.mxu0 0
    %745 = vmatprep.subr.bf16.mxu0 0
    %746 = vmatpush1.bf16.xpose.msra.mxu0 0
    %747 = vmatprep.subr.bf16.mxu0 0
    %748 = vmatpush1.bf16.xpose.msra.mxu0 0
    %749 = vmatprep.subr.bf16.mxu0 0
    %750 = vmatpush1.bf16.xpose.msra.mxu0 0
    %751 = vmatprep.subr.bf16.mxu0 0
    %752 = vmatpush1.bf16.xpose.msra.mxu0 0
    %753 = vmatprep.subr.bf16.mxu0 0
    %754 = vmatpush1.bf16.xpose.msra.mxu0 0
    %755 = vmatprep.subr.bf16.mxu0 0
    %756 = vmatpush1.bf16.xpose.msra.mxu0 0
    %757 = vmatprep.subr.bf16.mxu0 0
    %758 = vmatpush1.bf16.xpose.msra.mxu0 0
    %759 = vmatprep.subr.bf16.mxu0 0
    %760 = vmatpush1.bf16.xpose.msra.mxu0 0
    %761 = vmatprep.subr.bf16.mxu0 0
    %762 = vmatpush1.bf16.xpose.msra.mxu0 0
    %763 = vmatprep.subr.bf16.mxu0 0
    %764 = vmatpush1.bf16.xpose.msra.mxu0 0
    %765 = vmatprep.subr.bf16.mxu0 0
    %766 = vmatpush1.bf16.xpose.msra.mxu0 0
    %767 = vmatprep.subr.bf16.mxu0 0
    %768 = vmatpush1.bf16.xpose.msra.mxu0 0
    %769 = vmatprep.subr.bf16.mxu0 0
    %770 = vmatpush1.bf16.xpose.msra.mxu0 0
    %771 = vmatprep.subr.bf16.mxu0 0
    %772 = vmatpush1.bf16.xpose.msra.mxu0 0
    %773 = vmatprep.mubr.bf16.mxu0 0
    %774 = vmatmul.mubr.bf16.gmra.mrb[0].mxu0 %v736
    %v775 = vpop.f32.mrb[0].mxu0
    %v776 = vadd.f32 0.0, %v775
    %v777 = vpop.f32.mrb[0].mxu0
    %v778 = vpop.f32.mrb[0].mxu0
    %v779 = vpop.f32.mrb[0].mxu0
    %780 = vdwg.mxu0
    %v782 = vsel %vm688, %v590, 0
    %v785 = vsel %vm688, %v626, 0
    %787 = vmatprep.subr.bf16.mxu0 0
    %788 = vmatpush1.bf16.xpose.msra.mxu0 %v785
    %789 = vmatprep.subr.bf16.mxu0 0
    %790 = vmatpush1.bf16.xpose.msra.mxu0 0
    %791 = vmatprep.subr.bf16.mxu0 0
    %792 = vmatpush1.bf16.xpose.msra.mxu0 0
    %793 = vmatprep.subr.bf16.mxu0 0
    %794 = vmatpush1.bf16.xpose.msra.mxu0 0
    %795 = vmatprep.subr.bf16.mxu0 0
    %796 = vmatpush1.bf16.xpose.msra.mxu0 0
    %797 = vmatprep.subr.bf16.mxu0 0
    %798 = vmatpush1.bf16.xpose.msra.mxu0 0
    %799 = vmatprep.subr.bf16.mxu0 0
    %800 = vmatpush1.bf16.xpose.msra.mxu0 0
    %801 = vmatprep.subr.bf16.mxu0 0
    %802 = vmatpush1.bf16.xpose.msra.mxu0 0
    %803 = vmatprep.subr.bf16.mxu0 0
    %804 = vmatpush1.bf16.xpose.msra.mxu0 0
    %805 = vmatprep.subr.bf16.mxu0 0
    %806 = vmatpush1.bf16.xpose.msra.mxu0 0
    %807 = vmatprep.subr.bf16.mxu0 0
    %808 = vmatpush1.bf16.xpose.msra.mxu0 0
    %809 = vmatprep.subr.bf16.mxu0 0
    %810 = vmatpush1.bf16.xpose.msra.mxu0 0
    %811 = vmatprep.subr.bf16.mxu0 0
    %812 = vmatpush1.bf16.xpose.msra.mxu0 0
    %813 = vmatprep.subr.bf16.mxu0 0
    %814 = vmatpush1.bf16.xpose.msra.mxu0 0
    %815 = vmatprep.subr.bf16.mxu0 0
    %816 = vmatpush1.bf16.xpose.msra.mxu0 0
    %817 = vmatprep.subr.bf16.mxu0 0
    %818 = vmatpush1.bf16.xpose.msra.mxu0 0
    %819 = vmatprep.mubr.bf16.mxu0 0
    %820 = vmatmul.mubr.bf16.gmra.mrb[0].mxu0 %v782
    %v821 = vpop.f32.mrb[0].mxu0
    %v822 = vadd.f32 0.0, %v821
    %v823 = vpop.f32.mrb[0].mxu0
    %v824 = vpop.f32.mrb[0].mxu0
    %v825 = vpop.f32.mrb[0].mxu0
    %826 = vdwg.mxu0
    %v828 = vsel %vm688, %v591, 0
    %v831 = vsel %vm688, %v627, 0
    %833 = vmatprep.subr.bf16.mxu0 0
    %834 = vmatpush1.bf16.xpose.msra.mxu0 %v831
    %835 = vmatprep.subr.bf16.mxu0 0
    %836 = vmatpush1.bf16.xpose.msra.mxu0 0
    %837 = vmatprep.subr.bf16.mxu0 0
    %838 = vmatpush1.bf16.xpose.msra.mxu0 0
    %839 = vmatprep.subr.bf16.mxu0 0
    %840 = vmatpush1.bf16.xpose.msra.mxu0 0
    %841 = vmatprep.subr.bf16.mxu0 0
    %842 = vmatpush1.bf16.xpose.msra.mxu0 0
    %843 = vmatprep.subr.bf16.mxu0 0
    %844 = vmatpush1.bf16.xpose.msra.mxu0 0
    %845 = vmatprep.subr.bf16.mxu0 0
    %846 = vmatpush1.bf16.xpose.msra.mxu0 0
    %847 = vmatprep.subr.bf16.mxu0 0
    %848 = vmatpush1.bf16.xpose.msra.mxu0 0
    %849 = vmatprep.subr.bf16.mxu0 0
    %850 = vmatpush1.bf16.xpose.msra.mxu0 0
    %851 = vmatprep.subr.bf16.mxu0 0
    %852 = vmatpush1.bf16.xpose.msra.mxu0 0
    %853 = vmatprep.subr.bf16.mxu0 0
    %854 = vmatpush1.bf16.xpose.msra.mxu0 0
    %855 = vmatprep.subr.bf16.mxu0 0
    %856 = vmatpush1.bf16.xpose.msra.mxu0 0
    %857 = vmatprep.subr.bf16.mxu0 0
    %858 = vmatpush1.bf16.xpose.msra.mxu0 0
    %859 = vmatprep.subr.bf16.mxu0 0
    %860 = vmatpush1.bf16.xpose.msra.mxu0 0
    %861 = vmatprep.subr.bf16.mxu0 0
    %862 = vmatpush1.bf16.xpose.msra.mxu0 0
    %863 = vmatprep.subr.bf16.mxu0 0
    %864 = vmatpush1.bf16.xpose.msra.mxu0 0
    %865 = vmatprep.mubr.bf16.mxu0 0
    %866 = vmatmul.mubr.bf16.gmra.mrb[0].mxu0 %v828
    %v867 = vpop.f32.mrb[0].mxu0
    %v868 = vadd.f32 0.0, %v867
    %v869 = vpop.f32.mrb[0].mxu0
    %v870 = vpop.f32.mrb[0].mxu0
    %v871 = vpop.f32.mrb[0].mxu0
    %872 = vdwg.mxu0
    %v874 = vsel %vm688, %v593, 0
    %v877 = vsel %vm688, %v629, 0
    %879 = vmatprep.subr.bf16.mxu0 0
    %880 = vmatpush1.bf16.xpose.msra.mxu0 %v877
    %881 = vmatprep.subr.bf16.mxu0 0
    %882 = vmatpush1.bf16.xpose.msra.mxu0 0
    %883 = vmatprep.subr.bf16.mxu0 0
    %884 = vmatpush1.bf16.xpose.msra.mxu0 0
    %885 = vmatprep.subr.bf16.mxu0 0
    %886 = vmatpush1.bf16.xpose.msra.mxu0 0
    %887 = vmatprep.subr.bf16.mxu0 0
    %888 = vmatpush1.bf16.xpose.msra.mxu0 0
    %889 = vmatprep.subr.bf16.mxu0 0
    %890 = vmatpush1.bf16.xpose.msra.mxu0 0
    %891 = vmatprep.subr.bf16.mxu0 0
    %892 = vmatpush1.bf16.xpose.msra.mxu0 0
    %893 = vmatprep.subr.bf16.mxu0 0
    %894 = vmatpush1.bf16.xpose.msra.mxu0 0
    %895 = vmatprep.subr.bf16.mxu0 0
    %896 = vmatpush1.bf16.xpose.msra.mxu0 0
    %897 = vmatprep.subr.bf16.mxu0 0
    %898 = vmatpush1.bf16.xpose.msra.mxu0 0
    %899 = vmatprep.subr.bf16.mxu0 0
    %900 = vmatpush1.bf16.xpose.msra.mxu0 0
    %901 = vmatprep.subr.bf16.mxu0 0
    %902 = vmatpush1.bf16.xpose.msra.mxu0 0
    %903 = vmatprep.subr.bf16.mxu0 0
    %904 = vmatpush1.bf16.xpose.msra.mxu0 0
    %905 = vmatprep.subr.bf16.mxu0 0
    %906 = vmatpush1.bf16.xpose.msra.mxu0 0
    %907 = vmatprep.subr.bf16.mxu0 0
    %908 = vmatpush1.bf16.xpose.msra.mxu0 0
    %909 = vmatprep.subr.bf16.mxu0 0
    %910 = vmatpush1.bf16.xpose.msra.mxu0 0
    %911 = vmatprep.mubr.bf16.mxu0 0
    %912 = vmatmul.mubr.bf16.gmra.mrb[0].mxu0 %v874
    %v913 = vpop.f32.mrb[0].mxu0
    %v914 = vadd.f32 0.0, %v913
    %v915 = vpop.f32.mrb[0].mxu0
    %v916 = vpop.f32.mrb[0].mxu0
    %v917 = vpop.f32.mrb[0].mxu0
    %918 = vdwg.mxu0
    %v920 = vsel %vm688, %v595, 0
    %v923 = vsel %vm688, %v631, 0
    %925 = vmatprep.subr.bf16.mxu0 0
    %926 = vmatpush1.bf16.xpose.msra.mxu0 %v923
    %927 = vmatprep.subr.bf16.mxu0 0
    %928 = vmatpush1.bf16.xpose.msra.mxu0 0
    %929 = vmatprep.subr.bf16.mxu0 0
    %930 = vmatpush1.bf16.xpose.msra.mxu0 0
    %931 = vmatprep.subr.bf16.mxu0 0
    %932 = vmatpush1.bf16.xpose.msra.mxu0 0
    %933 = vmatprep.subr.bf16.mxu0 0
    %934 = vmatpush1.bf16.xpose.msra.mxu0 0
    %935 = vmatprep.subr.bf16.mxu0 0
    %936 = vmatpush1.bf16.xpose.msra.mxu0 0
    %937 = vmatprep.subr.bf16.mxu0 0
    %938 = vmatpush1.bf16.xpose.msra.mxu0 0
    %939 = vmatprep.subr.bf16.mxu0 0
    %940 = vmatpush1.bf16.xpose.msra.mxu0 0
    %941 = vmatprep.subr.bf16.mxu0 0
    %942 = vmatpush1.bf16.xpose.msra.mxu0 0
    %943 = vmatprep.subr.bf16.mxu0 0
    %944 = vmatpush1.bf16.xpose.msra.mxu0 0
    %945 = vmatprep.subr.bf16.mxu0 0
    %946 = vmatpush1.bf16.xpose.msra.mxu0 0
    %947 = vmatprep.subr.bf16.mxu0 0
    %948 = vmatpush1.bf16.xpose.msra.mxu0 0
    %949 = vmatprep.subr.bf16.mxu0 0
    %950 = vmatpush1.bf16.xpose.msra.mxu0 0
    %951 = vmatprep.subr.bf16.mxu0 0
    %952 = vmatpush1.bf16.xpose.msra.mxu0 0
    %953 = vmatprep.subr.bf16.mxu0 0
    %954 = vmatpush1.bf16.xpose.msra.mxu0 0
    %955 = vmatprep.subr.bf16.mxu0 0
    %956 = vmatpush1.bf16.xpose.msra.mxu0 0
    %957 = vmatprep.mubr.bf16.mxu0 0
    %958 = vmatmul.mubr.bf16.gmra.mrb[0].mxu0 %v920
    %v959 = vpop.f32.mrb[0].mxu0
    %v960 = vadd.f32 0.0, %v959
    %v961 = vpop.f32.mrb[0].mxu0
    %v962 = vpop.f32.mrb[0].mxu0
    %v963 = vpop.f32.mrb[0].mxu0
    %964 = vdwg.mxu0
    %v966 = vsel %vm688, %v597, 0
    %v969 = vsel %vm688, %v633, 0
    %971 = vmatprep.subr.bf16.mxu0 0
    %972 = vmatpush1.bf16.xpose.msra.mxu0 %v969
    %973 = vmatprep.subr.bf16.mxu0 0
    %974 = vmatpush1.bf16.xpose.msra.mxu0 0
    %975 = vmatprep.subr.bf16.mxu0 0
    %976 = vmatpush1.bf16.xpose.msra.mxu0 0
    %977 = vmatprep.subr.bf16.mxu0 0
    %978 = vmatpush1.bf16.xpose.msra.mxu0 0
    %979 = vmatprep.subr.bf16.mxu0 0
    %980 = vmatpush1.bf16.xpose.msra.mxu0 0
    %981 = vmatprep.subr.bf16.mxu0 0
    %982 = vmatpush1.bf16.xpose.msra.mxu0 0
    %983 = vmatprep.subr.bf16.mxu0 0
    %984 = vmatpush1.bf16.xpose.msra.mxu0 0
    %985 = vmatprep.subr.bf16.mxu0 0
    %986 = vmatpush1.bf16.xpose.msra.mxu0 0
    %987 = vmatprep.subr.bf16.mxu0 0
    %988 = vmatpush1.bf16.xpose.msra.mxu0 0
    %989 = vmatprep.subr.bf16.mxu0 0
    %990 = vmatpush1.bf16.xpose.msra.mxu0 0
    %991 = vmatprep.subr.bf16.mxu0 0
    %992 = vmatpush1.bf16.xpose.msra.mxu0 0
    %993 = vmatprep.subr.bf16.mxu0 0
    %994 = vmatpush1.bf16.xpose.msra.mxu0 0
    %995 = vmatprep.subr.bf16.mxu0 0
    %996 = vmatpush1.bf16.xpose.msra.mxu0 0
    %997 = vmatprep.subr.bf16.mxu0 0
    %998 = vmatpush1.bf16.xpose.msra.mxu0 0
    %999 = vmatprep.subr.bf16.mxu0 0
    %1000 = vmatpush1.bf16.xpose.msra.mxu0 0
    %1001 = vmatprep.subr.bf16.mxu0 0
    %1002 = vmatpush1.bf16.xpose.msra.mxu0 0
    %1003 = vmatprep.mubr.bf16.mxu0 0
    %1004 = vmatmul.mubr.bf16.gmra.mrb[0].mxu0 %v966
    %v1005 = vpop.f32.mrb[0].mxu0
    %v1006 = vadd.f32 0.0, %v1005
    %v1007 = vpop.f32.mrb[0].mxu0
    %v1008 = vpop.f32.mrb[0].mxu0
    %v1009 = vpop.f32.mrb[0].mxu0
    %1010 = vdwg.mxu0
    %v1012 = vsel %vm688, %v599, 0
    %v1015 = vsel %vm688, %v635, 0
    %1017 = vmatprep.subr.bf16.mxu0 0
    %1018 = vmatpush1.bf16.xpose.msra.mxu0 %v1015
    %1019 = vmatprep.subr.bf16.mxu0 0
    %1020 = vmatpush1.bf16.xpose.msra.mxu0 0
    %1021 = vmatprep.subr.bf16.mxu0 0
    %1022 = vmatpush1.bf16.xpose.msra.mxu0 0
    %1023 = vmatprep.subr.bf16.mxu0 0
    %1024 = vmatpush1.bf16.xpose.msra.mxu0 0
    %1025 = vmatprep.subr.bf16.mxu0 0
    %1026 = vmatpush1.bf16.xpose.msra.mxu0 0
    %1027 = vmatprep.subr.bf16.mxu0 0
    %1028 = vmatpush1.bf16.xpose.msra.mxu0 0
    %1029 = vmatprep.subr.bf16.mxu0 0
    %1030 = vmatpush1.bf16.xpose.msra.mxu0 0
    %1031 = vmatprep.subr.bf16.mxu0 0
    %1032 = vmatpush1.bf16.xpose.msra.mxu0 0
    %1033 = vmatprep.subr.bf16.mxu0 0
    %1034 = vmatpush1.bf16.xpose.msra.mxu0 0
    %1035 = vmatprep.subr.bf16.mxu0 0
    %1036 = vmatpush1.bf16.xpose.msra.mxu0 0
    %1037 = vmatprep.subr.bf16.mxu0 0
    %1038 = vmatpush1.bf16.xpose.msra.mxu0 0
    %1039 = vmatprep.subr.bf16.mxu0 0
    %1040 = vmatpush1.bf16.xpose.msra.mxu0 0
    %1041 = vmatprep.subr.bf16.mxu0 0
    %1042 = vmatpush1.bf16.xpose.msra.mxu0 0
    %1043 = vmatprep.subr.bf16.mxu0 0
    %1044 = vmatpush1.bf16.xpose.msra.mxu0 0
    %1045 = vmatprep.subr.bf16.mxu0 0
    %1046 = vmatpush1.bf16.xpose.msra.mxu0 0
    %1047 = vmatprep.subr.bf16.mxu0 0
    %1048 = vmatpush1.bf16.xpose.msra.mxu0 0
    %1049 = vmatprep.mubr.bf16.mxu0 0
    %1050 = vmatmul.mubr.bf16.gmra.mrb[0].mxu0 %v1012
    %v1051 = vpop.f32.mrb[0].mxu0
    %v1052 = vadd.f32 0.0, %v1051
    %v1053 = vpop.f32.mrb[0].mxu0
    %v1054 = vpop.f32.mrb[0].mxu0
    %v1055 = vpop.f32.mrb[0].mxu0
    %1056 = vdwg.mxu0
    %v1058 = vsel %vm688, %v601, 0
    %v1061 = vsel %vm688, %v637, 0
    %1063 = vmatprep.subr.bf16.mxu0 0
    %1064 = vmatpush1.bf16.xpose.msra.mxu0 %v1061
    %1065 = vmatprep.subr.bf16.mxu0 0
    %1066 = vmatpush1.bf16.xpose.msra.mxu0 0
    %1067 = vmatprep.subr.bf16.mxu0 0
    %1068 = vmatpush1.bf16.xpose.msra.mxu0 0
    %1069 = vmatprep.subr.bf16.mxu0 0
    %1070 = vmatpush1.bf16.xpose.msra.mxu0 0
    %1071 = vmatprep.subr.bf16.mxu0 0
    %1072 = vmatpush1.bf16.xpose.msra.mxu0 0
    %1073 = vmatprep.subr.bf16.mxu0 0
    %1074 = vmatpush1.bf16.xpose.msra.mxu0 0
    %1075 = vmatprep.subr.bf16.mxu0 0
    %1076 = vmatpush1.bf16.xpose.msra.mxu0 0
    %1077 = vmatprep.subr.bf16.mxu0 0
    %1078 = vmatpush1.bf16.xpose.msra.mxu0 0
    %1079 = vmatprep.subr.bf16.mxu0 0
    %1080 = vmatpush1.bf16.xpose.msra.mxu0 0
    %1081 = vmatprep.subr.bf16.mxu0 0
    %1082 = vmatpush1.bf16.xpose.msra.mxu0 0
    %1083 = vmatprep.subr.bf16.mxu0 0
    %1084 = vmatpush1.bf16.xpose.msra.mxu0 0
    %1085 = vmatprep.subr.bf16.mxu0 0
    %1086 = vmatpush1.bf16.xpose.msra.mxu0 0
    %1087 = vmatprep.subr.bf16.mxu0 0
    %1088 = vmatpush1.bf16.xpose.msra.mxu0 0
    %1089 = vmatprep.subr.bf16.mxu0 0
    %1090 = vmatpush1.bf16.xpose.msra.mxu0 0
    %1091 = vmatprep.subr.bf16.mxu0 0
    %1092 = vmatpush1.bf16.xpose.msra.mxu0 0
    %1093 = vmatprep.subr.bf16.mxu0 0
    %1094 = vmatpush1.bf16.xpose.msra.mxu0 0
    %1095 = vmatprep.mubr.bf16.mxu0 0
    %1096 = vmatmul.mubr.bf16.gmra.mrb[0].mxu0 %v1058
    %v1097 = vpop.f32.mrb[0].mxu0
    %v1098 = vadd.f32 0.0, %v1097
    %v1099 = vpop.f32.mrb[0].mxu0
    %v1100 = vpop.f32.mrb[0].mxu0
    %v1101 = vpop.f32.mrb[0].mxu0
    %1102 = vdwg.mxu0
    %v1104 = vsel %vm688, %v603, 0
    %v1107 = vsel %vm688, %v639, 0
    %1109 = vmatprep.subr.bf16.mxu0 0
    %1110 = vmatpush1.bf16.xpose.msra.mxu0 %v1107
    %1111 = vmatprep.subr.bf16.mxu0 0
    %1112 = vmatpush1.bf16.xpose.msra.mxu0 0
    %1113 = vmatprep.subr.bf16.mxu0 0
    %1114 = vmatpush1.bf16.xpose.msra.mxu0 0
    %1115 = vmatprep.subr.bf16.mxu0 0
    %1116 = vmatpush1.bf16.xpose.msra.mxu0 0
    %1117 = vmatprep.subr.bf16.mxu0 0
    %1118 = vmatpush1.bf16.xpose.msra.mxu0 0
    %1119 = vmatprep.subr.bf16.mxu0 0
    %1120 = vmatpush1.bf16.xpose.msra.mxu0 0
    %1121 = vmatprep.subr.bf16.mxu0 0
    %1122 = vmatpush1.bf16.xpose.msra.mxu0 0
    %1123 = vmatprep.subr.bf16.mxu0 0
    %1124 = vmatpush1.bf16.xpose.msra.mxu0 0
    %1125 = vmatprep.subr.bf16.mxu0 0
    %1126 = vmatpush1.bf16.xpose.msra.mxu0 0
    %1127 = vmatprep.subr.bf16.mxu0 0
    %1128 = vmatpush1.bf16.xpose.msra.mxu0 0
    %1129 = vmatprep.subr.bf16.mxu0 0
    %1130 = vmatpush1.bf16.xpose.msra.mxu0 0
    %1131 = vmatprep.subr.bf16.mxu0 0
    %1132 = vmatpush1.bf16.xpose.msra.mxu0 0
    %1133 = vmatprep.subr.bf16.mxu0 0
    %1134 = vmatpush1.bf16.xpose.msra.mxu0 0
    %1135 = vmatprep.subr.bf16.mxu0 0
    %1136 = vmatpush1.bf16.xpose.msra.mxu0 0
    %1137 = vmatprep.subr.bf16.mxu0 0
    %1138 = vmatpush1.bf16.xpose.msra.mxu0 0
    %1139 = vmatprep.subr.bf16.mxu0 0
    %1140 = vmatpush1.bf16.xpose.msra.mxu0 0
    %1141 = vmatprep.mubr.bf16.mxu0 0
    %1142 = vmatmul.mubr.bf16.gmra.mrb[0].mxu0 %v1104
    %v1143 = vpop.f32.mrb[0].mxu0
    %v1144 = vadd.f32 0.0, %v1143
    %v1145 = vpop.f32.mrb[0].mxu0
    %v1146 = vpop.f32.mrb[0].mxu0
    %v1147 = vpop.f32.mrb[0].mxu0
    %1148 = vdwg.mxu0
    %v1150 = vsel %vm688, %v605, 0
    %v1153 = vsel %vm688, %v641, 0
    %1155 = vmatprep.subr.bf16.mxu0 0
    %1156 = vmatpush1.bf16.xpose.msra.mxu0 %v1153
    %1157 = vmatprep.subr.bf16.mxu0 0
    %1158 = vmatpush1.bf16.xpose.msra.mxu0 0
    %1159 = vmatprep.subr.bf16.mxu0 0
    %1160 = vmatpush1.bf16.xpose.msra.mxu0 0
    %1161 = vmatprep.subr.bf16.mxu0 0
    %1162 = vmatpush1.bf16.xpose.msra.mxu0 0
    %1163 = vmatprep.subr.bf16.mxu0 0
    %1164 = vmatpush1.bf16.xpose.msra.mxu0 0
    %1165 = vmatprep.subr.bf16.mxu0 0
    %1166 = vmatpush1.bf16.xpose.msra.mxu0 0
    %1167 = vmatprep.subr.bf16.mxu0 0
    %1168 = vmatpush1.bf16.xpose.msra.mxu0 0
    %1169 = vmatprep.subr.bf16.mxu0 0
    %1170 = vmatpush1.bf16.xpose.msra.mxu0 0
    %1171 = vmatprep.subr.bf16.mxu0 0
    %1172 = vmatpush1.bf16.xpose.msra.mxu0 0
    %1173 = vmatprep.subr.bf16.mxu0 0
    %1174 = vmatpush1.bf16.xpose.msra.mxu0 0
    %1175 = vmatprep.subr.bf16.mxu0 0
    %1176 = vmatpush1.bf16.xpose.msra.mxu0 0
    %1177 = vmatprep.subr.bf16.mxu0 0
    %1178 = vmatpush1.bf16.xpose.msra.mxu0 0
    %1179 = vmatprep.subr.bf16.mxu0 0
    %1180 = vmatpush1.bf16.xpose.msra.mxu0 0
    %1181 = vmatprep.subr.bf16.mxu0 0
    %1182 = vmatpush1.bf16.xpose.msra.mxu0 0
    %1183 = vmatprep.subr.bf16.mxu0 0
    %1184 = vmatpush1.bf16.xpose.msra.mxu0 0
    %1185 = vmatprep.subr.bf16.mxu0 0
    %1186 = vmatpush1.bf16.xpose.msra.mxu0 0
    %1187 = vmatprep.mubr.bf16.mxu0 0
    %1188 = vmatmul.mubr.bf16.gmra.mrb[0].mxu0 %v1150
    %v1189 = vpop.f32.mrb[0].mxu0
    %v1190 = vadd.f32 0.0, %v1189
    %v1191 = vpop.f32.mrb[0].mxu0
    %v1192 = vpop.f32.mrb[0].mxu0
    %v1193 = vpop.f32.mrb[0].mxu0
    %1194 = vdwg.mxu0
    %v1196 = vsel %vm688, %v607, 0
    %v1199 = vsel %vm688, %v643, 0
    %1201 = vmatprep.subr.bf16.mxu0 0
    %1202 = vmatpush1.bf16.xpose.msra.mxu0 %v1199
    %1203 = vmatprep.subr.bf16.mxu0 0
    %1204 = vmatpush1.bf16.xpose.msra.mxu0 0
    %1205 = vmatprep.subr.bf16.mxu0 0
    %1206 = vmatpush1.bf16.xpose.msra.mxu0 0
    %1207 = vmatprep.subr.bf16.mxu0 0
    %1208 = vmatpush1.bf16.xpose.msra.mxu0 0
    %1209 = vmatprep.subr.bf16.mxu0 0
    %1210 = vmatpush1.bf16.xpose.msra.mxu0 0
    %1211 = vmatprep.subr.bf16.mxu0 0
    %1212 = vmatpush1.bf16.xpose.msra.mxu0 0
    %1213 = vmatprep.subr.bf16.mxu0 0
    %1214 = vmatpush1.bf16.xpose.msra.mxu0 0
    %1215 = vmatprep.subr.bf16.mxu0 0
    %1216 = vmatpush1.bf16.xpose.msra.mxu0 0
    %1217 = vmatprep.subr.bf16.mxu0 0
    %1218 = vmatpush1.bf16.xpose.msra.mxu0 0
    %1219 = vmatprep.subr.bf16.mxu0 0
    %1220 = vmatpush1.bf16.xpose.msra.mxu0 0
    %1221 = vmatprep.subr.bf16.mxu0 0
    %1222 = vmatpush1.bf16.xpose.msra.mxu0 0
    %1223 = vmatprep.subr.bf16.mxu0 0
    %1224 = vmatpush1.bf16.xpose.msra.mxu0 0
    %1225 = vmatprep.subr.bf16.mxu0 0
    %1226 = vmatpush1.bf16.xpose.msra.mxu0 0
    %1227 = vmatprep.subr.bf16.mxu0 0
    %1228 = vmatpush1.bf16.xpose.msra.mxu0 0
    %1229 = vmatprep.subr.bf16.mxu0 0
    %1230 = vmatpush1.bf16.xpose.msra.mxu0 0
    %1231 = vmatprep.subr.bf16.mxu0 0
    %1232 = vmatpush1.bf16.xpose.msra.mxu0 0
    %1233 = vmatprep.mubr.bf16.mxu0 0
    %1234 = vmatmul.mubr.bf16.gmra.mrb[0].mxu0 %v1196
    %v1235 = vpop.f32.mrb[0].mxu0
    %v1236 = vadd.f32 0.0, %v1235
    %v1237 = vpop.f32.mrb[0].mxu0
    %v1238 = vpop.f32.mrb[0].mxu0
    %v1239 = vpop.f32.mrb[0].mxu0
    %1240 = vdwg.mxu0
    %v1242 = vsel %vm688, %v609, 0
    %v1245 = vsel %vm688, %v645, 0
    %1247 = vmatprep.subr.bf16.mxu0 0
    %1248 = vmatpush1.bf16.xpose.msra.mxu0 %v1245
    %1249 = vmatprep.subr.bf16.mxu0 0
    %1250 = vmatpush1.bf16.xpose.msra.mxu0 0
    %1251 = vmatprep.subr.bf16.mxu0 0
    %1252 = vmatpush1.bf16.xpose.msra.mxu0 0
    %1253 = vmatprep.subr.bf16.mxu0 0
    %1254 = vmatpush1.bf16.xpose.msra.mxu0 0
    %1255 = vmatprep.subr.bf16.mxu0 0
    %1256 = vmatpush1.bf16.xpose.msra.mxu0 0
    %1257 = vmatprep.subr.bf16.mxu0 0
    %1258 = vmatpush1.bf16.xpose.msra.mxu0 0
    %1259 = vmatprep.subr.bf16.mxu0 0
    %1260 = vmatpush1.bf16.xpose.msra.mxu0 0
    %1261 = vmatprep.subr.bf16.mxu0 0
    %1262 = vmatpush1.bf16.xpose.msra.mxu0 0
    %1263 = vmatprep.subr.bf16.mxu0 0
    %1264 = vmatpush1.bf16.xpose.msra.mxu0 0
    %1265 = vmatprep.subr.bf16.mxu0 0
    %1266 = vmatpush1.bf16.xpose.msra.mxu0 0
    %1267 = vmatprep.subr.bf16.mxu0 0
    %1268 = vmatpush1.bf16.xpose.msra.mxu0 0
    %1269 = vmatprep.subr.bf16.mxu0 0
    %1270 = vmatpush1.bf16.xpose.msra.mxu0 0
    %1271 = vmatprep.subr.bf16.mxu0 0
    %1272 = vmatpush1.bf16.xpose.msra.mxu0 0
    %1273 = vmatprep.subr.bf16.mxu0 0
    %1274 = vmatpush1.bf16.xpose.msra.mxu0 0
    %1275 = vmatprep.subr.bf16.mxu0 0
    %1276 = vmatpush1.bf16.xpose.msra.mxu0 0
    %1277 = vmatprep.subr.bf16.mxu0 0
    %1278 = vmatpush1.bf16.xpose.msra.mxu0 0
    %1279 = vmatprep.mubr.bf16.mxu0 0
    %1280 = vmatmul.mubr.bf16.gmra.mrb[0].mxu0 %v1242
    %v1281 = vpop.f32.mrb[0].mxu0
    %v1282 = vadd.f32 0.0, %v1281
    %v1283 = vpop.f32.mrb[0].mxu0
    %v1284 = vpop.f32.mrb[0].mxu0
    %v1285 = vpop.f32.mrb[0].mxu0
    %1286 = vdwg.mxu0
    %v1288 = vsel %vm688, %v611, 0
    %v1291 = vsel %vm688, %v647, 0
    %1293 = vmatprep.subr.bf16.mxu0 0
    %1294 = vmatpush1.bf16.xpose.msra.mxu0 %v1291
    %1295 = vmatprep.subr.bf16.mxu0 0
    %1296 = vmatpush1.bf16.xpose.msra.mxu0 0
    %1297 = vmatprep.subr.bf16.mxu0 0
    %1298 = vmatpush1.bf16.xpose.msra.mxu0 0
    %1299 = vmatprep.subr.bf16.mxu0 0
    %1300 = vmatpush1.bf16.xpose.msra.mxu0 0
    %1301 = vmatprep.subr.bf16.mxu0 0
    %1302 = vmatpush1.bf16.xpose.msra.mxu0 0
    %1303 = vmatprep.subr.bf16.mxu0 0
    %1304 = vmatpush1.bf16.xpose.msra.mxu0 0
    %1305 = vmatprep.subr.bf16.mxu0 0
    %1306 = vmatpush1.bf16.xpose.msra.mxu0 0
    %1307 = vmatprep.subr.bf16.mxu0 0
    %1308 = vmatpush1.bf16.xpose.msra.mxu0 0
    %1309 = vmatprep.subr.bf16.mxu0 0
    %1310 = vmatpush1.bf16.xpose.msra.mxu0 0
    %1311 = vmatprep.subr.bf16.mxu0 0
    %1312 = vmatpush1.bf16.xpose.msra.mxu0 0
    %1313 = vmatprep.subr.bf16.mxu0 0
    %1314 = vmatpush1.bf16.xpose.msra.mxu0 0
    %1315 = vmatprep.subr.bf16.mxu0 0
    %1316 = vmatpush1.bf16.xpose.msra.mxu0 0
    %1317 = vmatprep.subr.bf16.mxu0 0
    %1318 = vmatpush1.bf16.xpose.msra.mxu0 0
    %1319 = vmatprep.subr.bf16.mxu0 0
    %1320 = vmatpush1.bf16.xpose.msra.mxu0 0
    %1321 = vmatprep.subr.bf16.mxu0 0
    %1322 = vmatpush1.bf16.xpose.msra.mxu0 0
    %1323 = vmatprep.subr.bf16.mxu0 0
    %1324 = vmatpush1.bf16.xpose.msra.mxu0 0
    %1325 = vmatprep.mubr.bf16.mxu0 0
    %1326 = vmatmul.mubr.bf16.gmra.mrb[0].mxu0 %v1288
    %v1327 = vpop.f32.mrb[0].mxu0
    %v1328 = vadd.f32 0.0, %v1327
    %v1329 = vpop.f32.mrb[0].mxu0
    %v1330 = vpop.f32.mrb[0].mxu0
    %v1331 = vpop.f32.mrb[0].mxu0
    %1332 = vdwg.mxu0
    %v1334 = vsel %vm688, %v613, 0
    %v1337 = vsel %vm688, %v649, 0
    %1339 = vmatprep.subr.bf16.mxu0 0
    %1340 = vmatpush1.bf16.xpose.msra.mxu0 %v1337
    %1341 = vmatprep.subr.bf16.mxu0 0
    %1342 = vmatpush1.bf16.xpose.msra.mxu0 0
    %1343 = vmatprep.subr.bf16.mxu0 0
    %1344 = vmatpush1.bf16.xpose.msra.mxu0 0
    %1345 = vmatprep.subr.bf16.mxu0 0
    %1346 = vmatpush1.bf16.xpose.msra.mxu0 0
    %1347 = vmatprep.subr.bf16.mxu0 0
    %1348 = vmatpush1.bf16.xpose.msra.mxu0 0
    %1349 = vmatprep.subr.bf16.mxu0 0
    %1350 = vmatpush1.bf16.xpose.msra.mxu0 0
    %1351 = vmatprep.subr.bf16.mxu0 0
    %1352 = vmatpush1.bf16.xpose.msra.mxu0 0
    %1353 = vmatprep.subr.bf16.mxu0 0
    %1354 = vmatpush1.bf16.xpose.msra.mxu0 0
    %1355 = vmatprep.subr.bf16.mxu0 0
    %1356 = vmatpush1.bf16.xpose.msra.mxu0 0
    %1357 = vmatprep.subr.bf16.mxu0 0
    %1358 = vmatpush1.bf16.xpose.msra.mxu0 0
    %1359 = vmatprep.subr.bf16.mxu0 0
    %1360 = vmatpush1.bf16.xpose.msra.mxu0 0
    %1361 = vmatprep.subr.bf16.mxu0 0
    %1362 = vmatpush1.bf16.xpose.msra.mxu0 0
    %1363 = vmatprep.subr.bf16.mxu0 0
    %1364 = vmatpush1.bf16.xpose.msra.mxu0 0
    %1365 = vmatprep.subr.bf16.mxu0 0
    %1366 = vmatpush1.bf16.xpose.msra.mxu0 0
    %1367 = vmatprep.subr.bf16.mxu0 0
    %1368 = vmatpush1.bf16.xpose.msra.mxu0 0
    %1369 = vmatprep.subr.bf16.mxu0 0
    %1370 = vmatpush1.bf16.xpose.msra.mxu0 0
    %1371 = vmatprep.mubr.bf16.mxu0 0
    %1372 = vmatmul.mubr.bf16.gmra.mrb[0].mxu0 %v1334
    %v1373 = vpop.f32.mrb[0].mxu0
    %v1374 = vadd.f32 0.0, %v1373
    %v1375 = vpop.f32.mrb[0].mxu0
    %v1376 = vpop.f32.mrb[0].mxu0
    %v1377 = vpop.f32.mrb[0].mxu0
    %1378 = vdwg.mxu0
    %v1380 = vsel %vm688, %v615, 0
    %v1383 = vsel %vm688, %v651, 0
    %1385 = vmatprep.subr.bf16.mxu0 0
    %1386 = vmatpush1.bf16.xpose.msra.mxu0 %v1383
    %1387 = vmatprep.subr.bf16.mxu0 0
    %1388 = vmatpush1.bf16.xpose.msra.mxu0 0
    %1389 = vmatprep.subr.bf16.mxu0 0
    %1390 = vmatpush1.bf16.xpose.msra.mxu0 0
    %1391 = vmatprep.subr.bf16.mxu0 0
    %1392 = vmatpush1.bf16.xpose.msra.mxu0 0
    %1393 = vmatprep.subr.bf16.mxu0 0
    %1394 = vmatpush1.bf16.xpose.msra.mxu0 0
    %1395 = vmatprep.subr.bf16.mxu0 0
    %1396 = vmatpush1.bf16.xpose.msra.mxu0 0
    %1397 = vmatprep.subr.bf16.mxu0 0
    %1398 = vmatpush1.bf16.xpose.msra.mxu0 0
    %1399 = vmatprep.subr.bf16.mxu0 0
    %1400 = vmatpush1.bf16.xpose.msra.mxu0 0
    %1401 = vmatprep.subr.bf16.mxu0 0
    %1402 = vmatpush1.bf16.xpose.msra.mxu0 0
    %1403 = vmatprep.subr.bf16.mxu0 0
    %1404 = vmatpush1.bf16.xpose.msra.mxu0 0
    %1405 = vmatprep.subr.bf16.mxu0 0
    %1406 = vmatpush1.bf16.xpose.msra.mxu0 0
    %1407 = vmatprep.subr.bf16.mxu0 0
    %1408 = vmatpush1.bf16.xpose.msra.mxu0 0
    %1409 = vmatprep.subr.bf16.mxu0 0
    %1410 = vmatpush1.bf16.xpose.msra.mxu0 0
    %1411 = vmatprep.subr.bf16.mxu0 0
    %1412 = vmatpush1.bf16.xpose.msra.mxu0 0
    %1413 = vmatprep.subr.bf16.mxu0 0
    %1414 = vmatpush1.bf16.xpose.msra.mxu0 0
    %1415 = vmatprep.subr.bf16.mxu0 0
    %1416 = vmatpush1.bf16.xpose.msra.mxu0 0
    %1417 = vmatprep.mubr.bf16.mxu0 0
    %1418 = vmatmul.mubr.bf16.gmra.mrb[0].mxu0 %v1380
    %v1419 = vpop.f32.mrb[0].mxu0
    %v1420 = vadd.f32 0.0, %v1419
    %v1421 = vpop.f32.mrb[0].mxu0
    %v1422 = vpop.f32.mrb[0].mxu0
    %v1423 = vpop.f32.mrb[0].mxu0
    %1424 = vdwg.mxu0
    %v1425 = vadd.f32 %v730, %v326
    %v1426 = vadd.f32 %v776, %v327
    %v1427 = vadd.f32 %v822, %v328
    %v1428 = vadd.f32 %v868, %v329
    %v1429 = vadd.f32 %v914, %v326
    %v1430 = vadd.f32 %v960, %v327
    %v1431 = vadd.f32 %v1006, %v328
    %v1432 = vadd.f32 %v1052, %v329
    %v1433 = vadd.f32 %v1098, %v326
    %v1434 = vadd.f32 %v1144, %v327
    %v1435 = vadd.f32 %v1190, %v328
    %v1436 = vadd.f32 %v1236, %v329
    %v1437 = vadd.f32 %v1282, %v326
    %v1438 = vadd.f32 %v1328, %v327
    %v1439 = vadd.f32 %v1374, %v328
    %v1440 = vadd.f32 %v1420, %v329
    %v1441 = vsel %vm688, %v1425, -inf
    %1442 = vmax.xlane.f32.xlu0 %v1441
    %v1443 = vpop.xlane.xlu0 %1442
    %v1444 = vsel %vm688, %v1426, -inf
    %1445 = vmax.xlane.f32.xlu0 %v1444
    %v1446 = vpop.xlane.xlu0 %1445
    %v1447 = vsel %vm688, %v1427, -inf
    %1448 = vmax.xlane.f32.xlu0 %v1447
    %v1449 = vpop.xlane.xlu0 %1448
    %v1450 = vsel %vm688, %v1428, -inf
    %1451 = vmax.xlane.f32.xlu0 %v1450
    %v1452 = vpop.xlane.xlu0 %1451
    %v1453 = vsel %vm688, %v1429, -inf
    %1454 = vmax.xlane.f32.xlu0 %v1453
    %v1455 = vpop.xlane.xlu0 %1454
    %v1456 = vsel %vm688, %v1430, -inf
    %1457 = vmax.xlane.f32.xlu0 %v1456
    %v1458 = vpop.xlane.xlu0 %1457
    %v1459 = vsel %vm688, %v1431, -inf
    %1460 = vmax.xlane.f32.xlu0 %v1459
    %v1461 = vpop.xlane.xlu0 %1460
    %v1462 = vsel %vm688, %v1432, -inf
    %1463 = vmax.xlane.f32.xlu0 %v1462
    %v1464 = vpop.xlane.xlu0 %1463
    %v1465 = vsel %vm688, %v1433, -inf
    %1466 = vmax.xlane.f32.xlu0 %v1465
    %v1467 = vpop.xlane.xlu0 %1466
    %v1468 = vsel %vm688, %v1434, -inf
    %1469 = vmax.xlane.f32.xlu0 %v1468
    %v1470 = vpop.xlane.xlu0 %1469
    %v1471 = vsel %vm688, %v1435, -inf
    %1472 = vmax.xlane.f32.xlu0 %v1471
    %v1473 = vpop.xlane.xlu0 %1472
    %v1474 = vsel %vm688, %v1436, -inf
    %1475 = vmax.xlane.f32.xlu0 %v1474
    %v1476 = vpop.xlane.xlu0 %1475
    %v1477 = vsel %vm688, %v1437, -inf
    %1478 = vmax.xlane.f32.xlu0 %v1477
    %v1479 = vpop.xlane.xlu0 %1478
    %v1480 = vsel %vm688, %v1438, -inf
    %1481 = vmax.xlane.f32.xlu0 %v1480
    %v1482 = vpop.xlane.xlu0 %1481
    %v1483 = vsel %vm688, %v1439, -inf
    %1484 = vmax.xlane.f32.xlu0 %v1483
    %v1485 = vpop.xlane.xlu0 %1484
    %v1486 = vsel %vm688, %v1440, -inf
    %1487 = vmax.xlane.f32.xlu0 %v1486
    %v1488 = vpop.xlane.xlu0 %1487
    %v1489 = vsub.f32 %v1425, %v1443
    %v1490 = vsub.f32 %v1426, %v1446
    %v1491 = vsub.f32 %v1427, %v1449
    %v1492 = vsub.f32 %v1428, %v1452
    %v1493 = vsub.f32 %v1429, %v1455
    %v1494 = vsub.f32 %v1430, %v1458
    %v1495 = vsub.f32 %v1431, %v1461
    %v1496 = vsub.f32 %v1432, %v1464
    %v1497 = vsub.f32 %v1433, %v1467
    %v1498 = vsub.f32 %v1434, %v1470
    %v1499 = vsub.f32 %v1435, %v1473
    %v1500 = vsub.f32 %v1436, %v1476
    %v1501 = vsub.f32 %v1437, %v1479
    %v1502 = vsub.f32 %v1438, %v1482
    %v1503 = vsub.f32 %v1439, %v1485
    %v1504 = vsub.f32 %v1440, %v1488
    %v1505 = vmul.f32 %v1489, 1.442695
    %v1506 = vpow.pop %v1505
    %v1507 = vmul.f32 %v1490, 1.442695
    %v1508 = vpow.pop %v1507
    %v1509 = vmul.f32 %v1491, 1.442695
    %v1510 = vpow.pop %v1509
    %v1511 = vmul.f32 %v1492, 1.442695
    %v1512 = vpow.pop %v1511
    %v1513 = vmul.f32 %v1493, 1.442695
    %v1514 = vpow.pop %v1513
    %v1515 = vmul.f32 %v1494, 1.442695
    %v1516 = vpow.pop %v1515
    %v1517 = vmul.f32 %v1495, 1.442695
    %v1518 = vpow.pop %v1517
    %v1519 = vmul.f32 %v1496, 1.442695
    %v1520 = vpow.pop %v1519
    %v1521 = vmul.f32 %v1497, 1.442695
    %v1522 = vpow.pop %v1521
    %v1523 = vmul.f32 %v1498, 1.442695
    %v1524 = vpow.pop %v1523
    %v1525 = vmul.f32 %v1499, 1.442695
    %v1526 = vpow.pop %v1525
    %v1527 = vmul.f32 %v1500, 1.442695
    %v1528 = vpow.pop %v1527
    %v1529 = vmul.f32 %v1501, 1.442695
    %v1530 = vpow.pop %v1529
    %v1531 = vmul.f32 %v1502, 1.442695
    %v1532 = vpow.pop %v1531
    %v1533 = vmul.f32 %v1503, 1.442695
    %v1534 = vpow.pop %v1533
    %v1535 = vmul.f32 %v1504, 1.442695
    %v1536 = vpow.pop %v1535
    %v1537 = vsel %vm688, %v1506, 0.0
    %1538 = vadd.xlane.f32.xlu0 %v1537
    %v1539 = vpop.xlane.xlu0 %1538
    %v1540 = vsel %vm688, %v1508, 0.0
    %1541 = vadd.xlane.f32.xlu0 %v1540
    %v1542 = vpop.xlane.xlu0 %1541
    %v1543 = vsel %vm688, %v1510, 0.0
    %1544 = vadd.xlane.f32.xlu0 %v1543
    %v1545 = vpop.xlane.xlu0 %1544
    %v1546 = vsel %vm688, %v1512, 0.0
    %1547 = vadd.xlane.f32.xlu0 %v1546
    %v1548 = vpop.xlane.xlu0 %1547
    %v1549 = vsel %vm688, %v1514, 0.0
    %1550 = vadd.xlane.f32.xlu0 %v1549
    %v1551 = vpop.xlane.xlu0 %1550
    %v1552 = vsel %vm688, %v1516, 0.0
    %1553 = vadd.xlane.f32.xlu0 %v1552
    %v1554 = vpop.xlane.xlu0 %1553
    %v1555 = vsel %vm688, %v1518, 0.0
    %1556 = vadd.xlane.f32.xlu0 %v1555
    %v1557 = vpop.xlane.xlu0 %1556
    %v1558 = vsel %vm688, %v1520, 0.0
    %1559 = vadd.xlane.f32.xlu0 %v1558
    %v1560 = vpop.xlane.xlu0 %1559
    %v1561 = vsel %vm688, %v1522, 0.0
    %1562 = vadd.xlane.f32.xlu0 %v1561
    %v1563 = vpop.xlane.xlu0 %1562
    %v1564 = vsel %vm688, %v1524, 0.0
    %1565 = vadd.xlane.f32.xlu0 %v1564
    %v1566 = vpop.xlane.xlu0 %1565
    %v1567 = vsel %vm688, %v1526, 0.0
    %1568 = vadd.xlane.f32.xlu0 %v1567
    %v1569 = vpop.xlane.xlu0 %1568
    %v1570 = vsel %vm688, %v1528, 0.0
    %1571 = vadd.xlane.f32.xlu0 %v1570
    %v1572 = vpop.xlane.xlu0 %1571
    %v1573 = vsel %vm688, %v1530, 0.0
    %1574 = vadd.xlane.f32.xlu0 %v1573
    %v1575 = vpop.xlane.xlu0 %1574
    %v1576 = vsel %vm688, %v1532, 0.0
    %1577 = vadd.xlane.f32.xlu0 %v1576
    %v1578 = vpop.xlane.xlu0 %1577
    %v1579 = vsel %vm688, %v1534, 0.0
    %1580 = vadd.xlane.f32.xlu0 %v1579
    %v1581 = vpop.xlane.xlu0 %1580
    %v1582 = vsel %vm688, %v1536, 0.0
    %1583 = vadd.xlane.f32.xlu0 %v1582
    %v1584 = vpop.xlane.xlu0 %1583
    %v1585 = vrcp.pop %v1539
    %v1586 = vrcp.pop %v1542
    %v1587 = vrcp.pop %v1545
    %v1588 = vrcp.pop %v1548
    %v1589 = vrcp.pop %v1551
    %v1590 = vrcp.pop %v1554
    %v1591 = vrcp.pop %v1557
    %v1592 = vrcp.pop %v1560
    %v1593 = vrcp.pop %v1563
    %v1594 = vrcp.pop %v1566
    %v1595 = vrcp.pop %v1569
    %v1596 = vrcp.pop %v1572
    %v1597 = vrcp.pop %v1575
    %v1598 = vrcp.pop %v1578
    %v1599 = vrcp.pop %v1581
    %v1600 = vrcp.pop %v1584
    %v1601 = vmul.f32 %v1506, %v1585
    %v1602 = vmul.f32 %v1508, %v1586
    %v1603 = vmul.f32 %v1510, %v1587
    %v1604 = vmul.f32 %v1512, %v1588
    %v1605 = vmul.f32 %v1514, %v1589
    %v1606 = vmul.f32 %v1516, %v1590
    %v1607 = vmul.f32 %v1518, %v1591
    %v1608 = vmul.f32 %v1520, %v1592
    %v1609 = vmul.f32 %v1522, %v1593
    %v1610 = vmul.f32 %v1524, %v1594
    %v1611 = vmul.f32 %v1526, %v1595
    %v1612 = vmul.f32 %v1528, %v1596
    %v1613 = vmul.f32 %v1530, %v1597
    %v1614 = vmul.f32 %v1532, %v1598
    %v1615 = vmul.f32 %v1534, %v1599
    %v1616 = vmul.f32 %v1536, %v1600
    %v1617 = vpack.c.bf16 %v1601, %v1601
    %v1618 = vpack.c.bf16 %v1602, %v1602
    %v1619 = vpack.c.bf16 %v1603, %v1603
    %v1620 = vpack.c.bf16 %v1604, %v1604
    %v1621 = vpack.c.bf16 %v1605, %v1605
    %v1622 = vpack.c.bf16 %v1606, %v1606
    %v1623 = vpack.c.bf16 %v1607, %v1607
    %v1624 = vpack.c.bf16 %v1608, %v1608
    %v1625 = vpack.c.bf16 %v1609, %v1609
    %v1626 = vpack.c.bf16 %v1610, %v1610
    %v1627 = vpack.c.bf16 %v1611, %v1611
    %v1628 = vpack.c.bf16 %v1612, %v1612
    %v1629 = vpack.c.bf16 %v1613, %v1613
    %v1630 = vpack.c.bf16 %v1614, %v1614
    %v1631 = vpack.c.bf16 %v1615, %v1615
    %v1632 = vpack.c.bf16 %v1616, %v1616
    %v1634 = vsel %vm688, %v1617, 0
    %vm1636 = vcmask 1043456
    %v1638 = vsel %vm1636, %v660, 0
    %1640 = vmatprep.subr.bf16.mxu0 0
    %1641 = vmatpush1.bf16.msra.mxu0 %v1638
    %1642 = vmatprep.subr.bf16.mxu0 0
    %1643 = vmatpush1.bf16.msra.mxu0 0
    %1644 = vmatprep.subr.bf16.mxu0 0
    %1645 = vmatpush1.bf16.msra.mxu0 0
    %1646 = vmatprep.subr.bf16.mxu0 0
    %1647 = vmatpush1.bf16.msra.mxu0 0
    %1648 = vmatprep.subr.bf16.mxu0 0
    %1649 = vmatpush1.bf16.msra.mxu0 0
    %1650 = vmatprep.subr.bf16.mxu0 0
    %1651 = vmatpush1.bf16.msra.mxu0 0
    %1652 = vmatprep.subr.bf16.mxu0 0
    %1653 = vmatpush1.bf16.msra.mxu0 0
    %1654 = vmatprep.subr.bf16.mxu0 0
    %1655 = vmatpush1.bf16.msra.mxu0 0
    %1656 = vmatprep.subr.bf16.mxu0 0
    %1657 = vmatpush1.bf16.msra.mxu0 0
    %1658 = vmatprep.subr.bf16.mxu0 0
    %1659 = vmatpush1.bf16.msra.mxu0 0
    %1660 = vmatprep.subr.bf16.mxu0 0
    %1661 = vmatpush1.bf16.msra.mxu0 0
    %1662 = vmatprep.subr.bf16.mxu0 0
    %1663 = vmatpush1.bf16.msra.mxu0 0
    %1664 = vmatprep.subr.bf16.mxu0 0
    %1665 = vmatpush1.bf16.msra.mxu0 0
    %1666 = vmatprep.subr.bf16.mxu0 0
    %1667 = vmatpush1.bf16.msra.mxu0 0
    %1668 = vmatprep.subr.bf16.mxu0 0
    %1669 = vmatpush1.bf16.msra.mxu0 0
    %1670 = vmatprep.subr.bf16.mxu0 0
    %1671 = vmatpush1.bf16.msra.mxu0 0
    %1672 = vmatprep.mubr.bf16.mxu0 0
    %1673 = vmatmul.mubr.bf16.gmra.mrb[0].mxu0 %v1634
    %v1674 = vpop.f32.mrb[0].mxu0
    %v1675 = vadd.f32 0.0, %v1674
    %v1676 = vpop.f32.mrb[0].mxu0
    %v1677 = vpop.f32.mrb[0].mxu0
    %v1678 = vpop.f32.mrb[0].mxu0
    %1679 = vdwg.mxu0
    %v1681 = vsel %vm688, %v1618, 0
    %v1684 = vsel %vm1636, %v661, 0
    %1686 = vmatprep.subr.bf16.mxu0 0
    %1687 = vmatpush1.bf16.msra.mxu0 %v1684
    %1688 = vmatprep.subr.bf16.mxu0 0
    %1689 = vmatpush1.bf16.msra.mxu0 0
    %1690 = vmatprep.subr.bf16.mxu0 0
    %1691 = vmatpush1.bf16.msra.mxu0 0
    %1692 = vmatprep.subr.bf16.mxu0 0
    %1693 = vmatpush1.bf16.msra.mxu0 0
    %1694 = vmatprep.subr.bf16.mxu0 0
    %1695 = vmatpush1.bf16.msra.mxu0 0
    %1696 = vmatprep.subr.bf16.mxu0 0
    %1697 = vmatpush1.bf16.msra.mxu0 0
    %1698 = vmatprep.subr.bf16.mxu0 0
    %1699 = vmatpush1.bf16.msra.mxu0 0
    %1700 = vmatprep.subr.bf16.mxu0 0
    %1701 = vmatpush1.bf16.msra.mxu0 0
    %1702 = vmatprep.subr.bf16.mxu0 0
    %1703 = vmatpush1.bf16.msra.mxu0 0
    %1704 = vmatprep.subr.bf16.mxu0 0
    %1705 = vmatpush1.bf16.msra.mxu0 0
    %1706 = vmatprep.subr.bf16.mxu0 0
    %1707 = vmatpush1.bf16.msra.mxu0 0
    %1708 = vmatprep.subr.bf16.mxu0 0
    %1709 = vmatpush1.bf16.msra.mxu0 0
    %1710 = vmatprep.subr.bf16.mxu0 0
    %1711 = vmatpush1.bf16.msra.mxu0 0
    %1712 = vmatprep.subr.bf16.mxu0 0
    %1713 = vmatpush1.bf16.msra.mxu0 0
    %1714 = vmatprep.subr.bf16.mxu0 0
    %1715 = vmatpush1.bf16.msra.mxu0 0
    %1716 = vmatprep.subr.bf16.mxu0 0
    %1717 = vmatpush1.bf16.msra.mxu0 0
    %1718 = vmatprep.mubr.bf16.mxu0 0
    %1719 = vmatmul.mubr.bf16.gmra.mrb[0].mxu0 %v1681
    %v1720 = vpop.f32.mrb[0].mxu0
    %v1721 = vadd.f32 0.0, %v1720
    %v1722 = vpop.f32.mrb[0].mxu0
    %v1723 = vpop.f32.mrb[0].mxu0
    %v1724 = vpop.f32.mrb[0].mxu0
    %1725 = vdwg.mxu0
    %v1727 = vsel %vm688, %v1619, 0
    %v1730 = vsel %vm1636, %v662, 0
    %1732 = vmatprep.subr.bf16.mxu0 0
    %1733 = vmatpush1.bf16.msra.mxu0 %v1730
    %1734 = vmatprep.subr.bf16.mxu0 0
    %1735 = vmatpush1.bf16.msra.mxu0 0
    %1736 = vmatprep.subr.bf16.mxu0 0
    %1737 = vmatpush1.bf16.msra.mxu0 0
    %1738 = vmatprep.subr.bf16.mxu0 0
    %1739 = vmatpush1.bf16.msra.mxu0 0
    %1740 = vmatprep.subr.bf16.mxu0 0
    %1741 = vmatpush1.bf16.msra.mxu0 0
    %1742 = vmatprep.subr.bf16.mxu0 0
    %1743 = vmatpush1.bf16.msra.mxu0 0
    %1744 = vmatprep.subr.bf16.mxu0 0
    %1745 = vmatpush1.bf16.msra.mxu0 0
    %1746 = vmatprep.subr.bf16.mxu0 0
    %1747 = vmatpush1.bf16.msra.mxu0 0
    %1748 = vmatprep.subr.bf16.mxu0 0
    %1749 = vmatpush1.bf16.msra.mxu0 0
    %1750 = vmatprep.subr.bf16.mxu0 0
    %1751 = vmatpush1.bf16.msra.mxu0 0
    %1752 = vmatprep.subr.bf16.mxu0 0
    %1753 = vmatpush1.bf16.msra.mxu0 0
    %1754 = vmatprep.subr.bf16.mxu0 0
    %1755 = vmatpush1.bf16.msra.mxu0 0
    %1756 = vmatprep.subr.bf16.mxu0 0
    %1757 = vmatpush1.bf16.msra.mxu0 0
    %1758 = vmatprep.subr.bf16.mxu0 0
    %1759 = vmatpush1.bf16.msra.mxu0 0
    %1760 = vmatprep.subr.bf16.mxu0 0
    %1761 = vmatpush1.bf16.msra.mxu0 0
    %1762 = vmatprep.subr.bf16.mxu0 0
    %1763 = vmatpush1.bf16.msra.mxu0 0
    %1764 = vmatprep.mubr.bf16.mxu0 0
    %1765 = vmatmul.mubr.bf16.gmra.mrb[0].mxu0 %v1727
    %v1766 = vpop.f32.mrb[0].mxu0
    %v1767 = vadd.f32 0.0, %v1766
    %v1768 = vpop.f32.mrb[0].mxu0
    %v1769 = vpop.f32.mrb[0].mxu0
    %v1770 = vpop.f32.mrb[0].mxu0
    %1771 = vdwg.mxu0
    %v1773 = vsel %vm688, %v1620, 0
    %v1776 = vsel %vm1636, %v663, 0
    %1778 = vmatprep.subr.bf16.mxu0 0
    %1779 = vmatpush1.bf16.msra.mxu0 %v1776
    %1780 = vmatprep.subr.bf16.mxu0 0
    %1781 = vmatpush1.bf16.msra.mxu0 0
    %1782 = vmatprep.subr.bf16.mxu0 0
    %1783 = vmatpush1.bf16.msra.mxu0 0
    %1784 = vmatprep.subr.bf16.mxu0 0
    %1785 = vmatpush1.bf16.msra.mxu0 0
    %1786 = vmatprep.subr.bf16.mxu0 0
    %1787 = vmatpush1.bf16.msra.mxu0 0
    %1788 = vmatprep.subr.bf16.mxu0 0
    %1789 = vmatpush1.bf16.msra.mxu0 0
    %1790 = vmatprep.subr.bf16.mxu0 0
    %1791 = vmatpush1.bf16.msra.mxu0 0
    %1792 = vmatprep.subr.bf16.mxu0 0
    %1793 = vmatpush1.bf16.msra.mxu0 0
    %1794 = vmatprep.subr.bf16.mxu0 0
    %1795 = vmatpush1.bf16.msra.mxu0 0
    %1796 = vmatprep.subr.bf16.mxu0 0
    %1797 = vmatpush1.bf16.msra.mxu0 0
    %1798 = vmatprep.subr.bf16.mxu0 0
    %1799 = vmatpush1.bf16.msra.mxu0 0
    %1800 = vmatprep.subr.bf16.mxu0 0
    %1801 = vmatpush1.bf16.msra.mxu0 0
    %1802 = vmatprep.subr.bf16.mxu0 0
    %1803 = vmatpush1.bf16.msra.mxu0 0
    %1804 = vmatprep.subr.bf16.mxu0 0
    %1805 = vmatpush1.bf16.msra.mxu0 0
    %1806 = vmatprep.subr.bf16.mxu0 0
    %1807 = vmatpush1.bf16.msra.mxu0 0
    %1808 = vmatprep.subr.bf16.mxu0 0
    %1809 = vmatpush1.bf16.msra.mxu0 0
    %1810 = vmatprep.mubr.bf16.mxu0 0
    %1811 = vmatmul.mubr.bf16.gmra.mrb[0].mxu0 %v1773
    %v1812 = vpop.f32.mrb[0].mxu0
    %v1813 = vadd.f32 0.0, %v1812
    %v1814 = vpop.f32.mrb[0].mxu0
    %v1815 = vpop.f32.mrb[0].mxu0
    %v1816 = vpop.f32.mrb[0].mxu0
    %1817 = vdwg.mxu0
    %v1819 = vsel %vm688, %v1621, 0
    %v1822 = vsel %vm1636, %v665, 0
    %1824 = vmatprep.subr.bf16.mxu0 0
    %1825 = vmatpush1.bf16.msra.mxu0 %v1822
    %1826 = vmatprep.subr.bf16.mxu0 0
    %1827 = vmatpush1.bf16.msra.mxu0 0
    %1828 = vmatprep.subr.bf16.mxu0 0
    %1829 = vmatpush1.bf16.msra.mxu0 0
    %1830 = vmatprep.subr.bf16.mxu0 0
    %1831 = vmatpush1.bf16.msra.mxu0 0
    %1832 = vmatprep.subr.bf16.mxu0 0
    %1833 = vmatpush1.bf16.msra.mxu0 0
    %1834 = vmatprep.subr.bf16.mxu0 0
    %1835 = vmatpush1.bf16.msra.mxu0 0
    %1836 = vmatprep.subr.bf16.mxu0 0
    %1837 = vmatpush1.bf16.msra.mxu0 0
    %1838 = vmatprep.subr.bf16.mxu0 0
    %1839 = vmatpush1.bf16.msra.mxu0 0
    %1840 = vmatprep.subr.bf16.mxu0 0
    %1841 = vmatpush1.bf16.msra.mxu0 0
    %1842 = vmatprep.subr.bf16.mxu0 0
    %1843 = vmatpush1.bf16.msra.mxu0 0
    %1844 = vmatprep.subr.bf16.mxu0 0
    %1845 = vmatpush1.bf16.msra.mxu0 0
    %1846 = vmatprep.subr.bf16.mxu0 0
    %1847 = vmatpush1.bf16.msra.mxu0 0
    %1848 = vmatprep.subr.bf16.mxu0 0
    %1849 = vmatpush1.bf16.msra.mxu0 0
    %1850 = vmatprep.subr.bf16.mxu0 0
    %1851 = vmatpush1.bf16.msra.mxu0 0
    %1852 = vmatprep.subr.bf16.mxu0 0
    %1853 = vmatpush1.bf16.msra.mxu0 0
    %1854 = vmatprep.subr.bf16.mxu0 0
    %1855 = vmatpush1.bf16.msra.mxu0 0
    %1856 = vmatprep.mubr.bf16.mxu0 0
    %1857 = vmatmul.mubr.bf16.gmra.mrb[0].mxu0 %v1819
    %v1858 = vpop.f32.mrb[0].mxu0
    %v1859 = vadd.f32 0.0, %v1858
    %v1860 = vpop.f32.mrb[0].mxu0
    %v1861 = vpop.f32.mrb[0].mxu0
    %v1862 = vpop.f32.mrb[0].mxu0
    %1863 = vdwg.mxu0
    %v1865 = vsel %vm688, %v1622, 0
    %v1868 = vsel %vm1636, %v667, 0
    %1870 = vmatprep.subr.bf16.mxu0 0
    %1871 = vmatpush1.bf16.msra.mxu0 %v1868
    %1872 = vmatprep.subr.bf16.mxu0 0
    %1873 = vmatpush1.bf16.msra.mxu0 0
    %1874 = vmatprep.subr.bf16.mxu0 0
    %1875 = vmatpush1.bf16.msra.mxu0 0
    %1876 = vmatprep.subr.bf16.mxu0 0
    %1877 = vmatpush1.bf16.msra.mxu0 0
    %1878 = vmatprep.subr.bf16.mxu0 0
    %1879 = vmatpush1.bf16.msra.mxu0 0
    %1880 = vmatprep.subr.bf16.mxu0 0
    %1881 = vmatpush1.bf16.msra.mxu0 0
    %1882 = vmatprep.subr.bf16.mxu0 0
    %1883 = vmatpush1.bf16.msra.mxu0 0
    %1884 = vmatprep.subr.bf16.mxu0 0
    %1885 = vmatpush1.bf16.msra.mxu0 0
    %1886 = vmatprep.subr.bf16.mxu0 0
    %1887 = vmatpush1.bf16.msra.mxu0 0
    %1888 = vmatprep.subr.bf16.mxu0 0
    %1889 = vmatpush1.bf16.msra.mxu0 0
    %1890 = vmatprep.subr.bf16.mxu0 0
    %1891 = vmatpush1.bf16.msra.mxu0 0
    %1892 = vmatprep.subr.bf16.mxu0 0
    %1893 = vmatpush1.bf16.msra.mxu0 0
    %1894 = vmatprep.subr.bf16.mxu0 0
    %1895 = vmatpush1.bf16.msra.mxu0 0
    %1896 = vmatprep.subr.bf16.mxu0 0
    %1897 = vmatpush1.bf16.msra.mxu0 0
    %1898 = vmatprep.subr.bf16.mxu0 0
    %1899 = vmatpush1.bf16.msra.mxu0 0
    %1900 = vmatprep.subr.bf16.mxu0 0
    %1901 = vmatpush1.bf16.msra.mxu0 0
    %1902 = vmatprep.mubr.bf16.mxu0 0
    %1903 = vmatmul.mubr.bf16.gmra.mrb[0].mxu0 %v1865
    %v1904 = vpop.f32.mrb[0].mxu0
    %v1905 = vadd.f32 0.0, %v1904
    %v1906 = vpop.f32.mrb[0].mxu0
    %v1907 = vpop.f32.mrb[0].mxu0
    %v1908 = vpop.f32.mrb[0].mxu0
    %1909 = vdwg.mxu0
    %v1911 = vsel %vm688, %v1623, 0
    %v1914 = vsel %vm1636, %v669, 0
    %1916 = vmatprep.subr.bf16.mxu0 0
    %1917 = vmatpush1.bf16.msra.mxu0 %v1914
    %1918 = vmatprep.subr.bf16.mxu0 0
    %1919 = vmatpush1.bf16.msra.mxu0 0
    %1920 = vmatprep.subr.bf16.mxu0 0
    %1921 = vmatpush1.bf16.msra.mxu0 0
    %1922 = vmatprep.subr.bf16.mxu0 0
    %1923 = vmatpush1.bf16.msra.mxu0 0
    %1924 = vmatprep.subr.bf16.mxu0 0
    %1925 = vmatpush1.bf16.msra.mxu0 0
    %1926 = vmatprep.subr.bf16.mxu0 0
    %1927 = vmatpush1.bf16.msra.mxu0 0
    %1928 = vmatprep.subr.bf16.mxu0 0
    %1929 = vmatpush1.bf16.msra.mxu0 0
    %1930 = vmatprep.subr.bf16.mxu0 0
    %1931 = vmatpush1.bf16.msra.mxu0 0
    %1932 = vmatprep.subr.bf16.mxu0 0
    %1933 = vmatpush1.bf16.msra.mxu0 0
    %1934 = vmatprep.subr.bf16.mxu0 0
    %1935 = vmatpush1.bf16.msra.mxu0 0
    %1936 = vmatprep.subr.bf16.mxu0 0
    %1937 = vmatpush1.bf16.msra.mxu0 0
    %1938 = vmatprep.subr.bf16.mxu0 0
    %1939 = vmatpush1.bf16.msra.mxu0 0
    %1940 = vmatprep.subr.bf16.mxu0 0
    %1941 = vmatpush1.bf16.msra.mxu0 0
    %1942 = vmatprep.subr.bf16.mxu0 0
    %1943 = vmatpush1.bf16.msra.mxu0 0
    %1944 = vmatprep.subr.bf16.mxu0 0
    %1945 = vmatpush1.bf16.msra.mxu0 0
    %1946 = vmatprep.subr.bf16.mxu0 0
    %1947 = vmatpush1.bf16.msra.mxu0 0
    %1948 = vmatprep.mubr.bf16.mxu0 0
    %1949 = vmatmul.mubr.bf16.gmra.mrb[0].mxu0 %v1911
    %v1950 = vpop.f32.mrb[0].mxu0
    %v1951 = vadd.f32 0.0, %v1950
    %v1952 = vpop.f32.mrb[0].mxu0
    %v1953 = vpop.f32.mrb[0].mxu0
    %v1954 = vpop.f32.mrb[0].mxu0
    %1955 = vdwg.mxu0
    %v1957 = vsel %vm688, %v1624, 0
    %v1960 = vsel %vm1636, %v671, 0
    %1962 = vmatprep.subr.bf16.mxu0 0
    %1963 = vmatpush1.bf16.msra.mxu0 %v1960
    %1964 = vmatprep.subr.bf16.mxu0 0
    %1965 = vmatpush1.bf16.msra.mxu0 0
    %1966 = vmatprep.subr.bf16.mxu0 0
    %1967 = vmatpush1.bf16.msra.mxu0 0
    %1968 = vmatprep.subr.bf16.mxu0 0
    %1969 = vmatpush1.bf16.msra.mxu0 0
    %1970 = vmatprep.subr.bf16.mxu0 0
    %1971 = vmatpush1.bf16.msra.mxu0 0
    %1972 = vmatprep.subr.bf16.mxu0 0
    %1973 = vmatpush1.bf16.msra.mxu0 0
    %1974 = vmatprep.subr.bf16.mxu0 0
    %1975 = vmatpush1.bf16.msra.mxu0 0
    %1976 = vmatprep.subr.bf16.mxu0 0
    %1977 = vmatpush1.bf16.msra.mxu0 0
    %1978 = vmatprep.subr.bf16.mxu0 0
    %1979 = vmatpush1.bf16.msra.mxu0 0
    %1980 = vmatprep.subr.bf16.mxu0 0
    %1981 = vmatpush1.bf16.msra.mxu0 0
    %1982 = vmatprep.subr.bf16.mxu0 0
    %1983 = vmatpush1.bf16.msra.mxu0 0
    %1984 = vmatprep.subr.bf16.mxu0 0
    %1985 = vmatpush1.bf16.msra.mxu0 0
    %1986 = vmatprep.subr.bf16.mxu0 0
    %1987 = vmatpush1.bf16.msra.mxu0 0
    %1988 = vmatprep.subr.bf16.mxu0 0
    %1989 = vmatpush1.bf16.msra.mxu0 0
    %1990 = vmatprep.subr.bf16.mxu0 0
    %1991 = vmatpush1.bf16.msra.mxu0 0
    %1992 = vmatprep.subr.bf16.mxu0 0
    %1993 = vmatpush1.bf16.msra.mxu0 0
    %1994 = vmatprep.mubr.bf16.mxu0 0
    %1995 = vmatmul.mubr.bf16.gmra.mrb[0].mxu0 %v1957
    %v1996 = vpop.f32.mrb[0].mxu0
    %v1997 = vadd.f32 0.0, %v1996
    %v1998 = vpop.f32.mrb[0].mxu0
    %v1999 = vpop.f32.mrb[0].mxu0
    %v2000 = vpop.f32.mrb[0].mxu0
    %2001 = vdwg.mxu0
    %v2003 = vsel %vm688, %v1625, 0
    %v2006 = vsel %vm1636, %v673, 0
    %2008 = vmatprep.subr.bf16.mxu0 0
    %2009 = vmatpush1.bf16.msra.mxu0 %v2006
    %2010 = vmatprep.subr.bf16.mxu0 0
    %2011 = vmatpush1.bf16.msra.mxu0 0
    %2012 = vmatprep.subr.bf16.mxu0 0
    %2013 = vmatpush1.bf16.msra.mxu0 0
    %2014 = vmatprep.subr.bf16.mxu0 0
    %2015 = vmatpush1.bf16.msra.mxu0 0
    %2016 = vmatprep.subr.bf16.mxu0 0
    %2017 = vmatpush1.bf16.msra.mxu0 0
    %2018 = vmatprep.subr.bf16.mxu0 0
    %2019 = vmatpush1.bf16.msra.mxu0 0
    %2020 = vmatprep.subr.bf16.mxu0 0
    %2021 = vmatpush1.bf16.msra.mxu0 0
    %2022 = vmatprep.subr.bf16.mxu0 0
    %2023 = vmatpush1.bf16.msra.mxu0 0
    %2024 = vmatprep.subr.bf16.mxu0 0
    %2025 = vmatpush1.bf16.msra.mxu0 0
    %2026 = vmatprep.subr.bf16.mxu0 0
    %2027 = vmatpush1.bf16.msra.mxu0 0
    %2028 = vmatprep.subr.bf16.mxu0 0
    %2029 = vmatpush1.bf16.msra.mxu0 0
    %2030 = vmatprep.subr.bf16.mxu0 0
    %2031 = vmatpush1.bf16.msra.mxu0 0
    %2032 = vmatprep.subr.bf16.mxu0 0
    %2033 = vmatpush1.bf16.msra.mxu0 0
    %2034 = vmatprep.subr.bf16.mxu0 0
    %2035 = vmatpush1.bf16.msra.mxu0 0
    %2036 = vmatprep.subr.bf16.mxu0 0
    %2037 = vmatpush1.bf16.msra.mxu0 0
    %2038 = vmatprep.subr.bf16.mxu0 0
    %2039 = vmatpush1.bf16.msra.mxu0 0
    %2040 = vmatprep.mubr.bf16.mxu0 0
    %2041 = vmatmul.mubr.bf16.gmra.mrb[0].mxu0 %v2003
    %v2042 = vpop.f32.mrb[0].mxu0
    %v2043 = vadd.f32 0.0, %v2042
    %v2044 = vpop.f32.mrb[0].mxu0
    %v2045 = vpop.f32.mrb[0].mxu0
    %v2046 = vpop.f32.mrb[0].mxu0
    %2047 = vdwg.mxu0
    %v2049 = vsel %vm688, %v1626, 0
    %v2052 = vsel %vm1636, %v675, 0
    %2054 = vmatprep.subr.bf16.mxu0 0
    %2055 = vmatpush1.bf16.msra.mxu0 %v2052
    %2056 = vmatprep.subr.bf16.mxu0 0
    %2057 = vmatpush1.bf16.msra.mxu0 0
    %2058 = vmatprep.subr.bf16.mxu0 0
    %2059 = vmatpush1.bf16.msra.mxu0 0
    %2060 = vmatprep.subr.bf16.mxu0 0
    %2061 = vmatpush1.bf16.msra.mxu0 0
    %2062 = vmatprep.subr.bf16.mxu0 0
    %2063 = vmatpush1.bf16.msra.mxu0 0
    %2064 = vmatprep.subr.bf16.mxu0 0
    %2065 = vmatpush1.bf16.msra.mxu0 0
    %2066 = vmatprep.subr.bf16.mxu0 0
    %2067 = vmatpush1.bf16.msra.mxu0 0
    %2068 = vmatprep.subr.bf16.mxu0 0
    %2069 = vmatpush1.bf16.msra.mxu0 0
    %2070 = vmatprep.subr.bf16.mxu0 0
    %2071 = vmatpush1.bf16.msra.mxu0 0
    %2072 = vmatprep.subr.bf16.mxu0 0
    %2073 = vmatpush1.bf16.msra.mxu0 0
    %2074 = vmatprep.subr.bf16.mxu0 0
    %2075 = vmatpush1.bf16.msra.mxu0 0
    %2076 = vmatprep.subr.bf16.mxu0 0
    %2077 = vmatpush1.bf16.msra.mxu0 0
    %2078 = vmatprep.subr.bf16.mxu0 0
    %2079 = vmatpush1.bf16.msra.mxu0 0
    %2080 = vmatprep.subr.bf16.mxu0 0
    %2081 = vmatpush1.bf16.msra.mxu0 0
    %2082 = vmatprep.subr.bf16.mxu0 0
    %2083 = vmatpush1.bf16.msra.mxu0 0
    %2084 = vmatprep.subr.bf16.mxu0 0
    %2085 = vmatpush1.bf16.msra.mxu0 0
    %2086 = vmatprep.mubr.bf16.mxu0 0
    %2087 = vmatmul.mubr.bf16.gmra.mrb[0].mxu0 %v2049
    %v2088 = vpop.f32.mrb[0].mxu0
    %v2089 = vadd.f32 0.0, %v2088
    %v2090 = vpop.f32.mrb[0].mxu0
    %v2091 = vpop.f32.mrb[0].mxu0
    %v2092 = vpop.f32.mrb[0].mxu0
    %2093 = vdwg.mxu0
    %v2095 = vsel %vm688, %v1627, 0
    %v2098 = vsel %vm1636, %v677, 0
    %2100 = vmatprep.subr.bf16.mxu0 0
    %2101 = vmatpush1.bf16.msra.mxu0 %v2098
    %2102 = vmatprep.subr.bf16.mxu0 0
    %2103 = vmatpush1.bf16.msra.mxu0 0
    %2104 = vmatprep.subr.bf16.mxu0 0
    %2105 = vmatpush1.bf16.msra.mxu0 0
    %2106 = vmatprep.subr.bf16.mxu0 0
    %2107 = vmatpush1.bf16.msra.mxu0 0
    %2108 = vmatprep.subr.bf16.mxu0 0
    %2109 = vmatpush1.bf16.msra.mxu0 0
    %2110 = vmatprep.subr.bf16.mxu0 0
    %2111 = vmatpush1.bf16.msra.mxu0 0
    %2112 = vmatprep.subr.bf16.mxu0 0
    %2113 = vmatpush1.bf16.msra.mxu0 0
    %2114 = vmatprep.subr.bf16.mxu0 0
    %2115 = vmatpush1.bf16.msra.mxu0 0
    %2116 = vmatprep.subr.bf16.mxu0 0
    %2117 = vmatpush1.bf16.msra.mxu0 0
    %2118 = vmatprep.subr.bf16.mxu0 0
    %2119 = vmatpush1.bf16.msra.mxu0 0
    %2120 = vmatprep.subr.bf16.mxu0 0
    %2121 = vmatpush1.bf16.msra.mxu0 0
    %2122 = vmatprep.subr.bf16.mxu0 0
    %2123 = vmatpush1.bf16.msra.mxu0 0
    %2124 = vmatprep.subr.bf16.mxu0 0
    %2125 = vmatpush1.bf16.msra.mxu0 0
    %2126 = vmatprep.subr.bf16.mxu0 0
    %2127 = vmatpush1.bf16.msra.mxu0 0
    %2128 = vmatprep.subr.bf16.mxu0 0
    %2129 = vmatpush1.bf16.msra.mxu0 0
    %2130 = vmatprep.subr.bf16.mxu0 0
    %2131 = vmatpush1.bf16.msra.mxu0 0
    %2132 = vmatprep.mubr.bf16.mxu0 0
    %2133 = vmatmul.mubr.bf16.gmra.mrb[0].mxu0 %v2095
    %v2134 = vpop.f32.mrb[0].mxu0
    %v2135 = vadd.f32 0.0, %v2134
    %v2136 = vpop.f32.mrb[0].mxu0
    %v2137 = vpop.f32.mrb[0].mxu0
    %v2138 = vpop.f32.mrb[0].mxu0
    %2139 = vdwg.mxu0
    %v2141 = vsel %vm688, %v1628, 0
    %v2144 = vsel %vm1636, %v679, 0
    %2146 = vmatprep.subr.bf16.mxu0 0
    %2147 = vmatpush1.bf16.msra.mxu0 %v2144
    %2148 = vmatprep.subr.bf16.mxu0 0
    %2149 = vmatpush1.bf16.msra.mxu0 0
    %2150 = vmatprep.subr.bf16.mxu0 0
    %2151 = vmatpush1.bf16.msra.mxu0 0
    %2152 = vmatprep.subr.bf16.mxu0 0
    %2153 = vmatpush1.bf16.msra.mxu0 0
    %2154 = vmatprep.subr.bf16.mxu0 0
    %2155 = vmatpush1.bf16.msra.mxu0 0
    %2156 = vmatprep.subr.bf16.mxu0 0
    %2157 = vmatpush1.bf16.msra.mxu0 0
    %2158 = vmatprep.subr.bf16.mxu0 0
    %2159 = vmatpush1.bf16.msra.mxu0 0
    %2160 = vmatprep.subr.bf16.mxu0 0
    %2161 = vmatpush1.bf16.msra.mxu0 0
    %2162 = vmatprep.subr.bf16.mxu0 0
    %2163 = vmatpush1.bf16.msra.mxu0 0
    %2164 = vmatprep.subr.bf16.mxu0 0
    %2165 = vmatpush1.bf16.msra.mxu0 0
    %2166 = vmatprep.subr.bf16.mxu0 0
    %2167 = vmatpush1.bf16.msra.mxu0 0
    %2168 = vmatprep.subr.bf16.mxu0 0
    %2169 = vmatpush1.bf16.msra.mxu0 0
    %2170 = vmatprep.subr.bf16.mxu0 0
    %2171 = vmatpush1.bf16.msra.mxu0 0
    %2172 = vmatprep.subr.bf16.mxu0 0
    %2173 = vmatpush1.bf16.msra.mxu0 0
    %2174 = vmatprep.subr.bf16.mxu0 0
    %2175 = vmatpush1.bf16.msra.mxu0 0
    %2176 = vmatprep.subr.bf16.mxu0 0
    %2177 = vmatpush1.bf16.msra.mxu0 0
    %2178 = vmatprep.mubr.bf16.mxu0 0
    %2179 = vmatmul.mubr.bf16.gmra.mrb[0].mxu0 %v2141
    %v2180 = vpop.f32.mrb[0].mxu0
    %v2181 = vadd.f32 0.0, %v2180
    %v2182 = vpop.f32.mrb[0].mxu0
    %v2183 = vpop.f32.mrb[0].mxu0
    %v2184 = vpop.f32.mrb[0].mxu0
    %2185 = vdwg.mxu0
    %v2187 = vsel %vm688, %v1629, 0
    %v2190 = vsel %vm1636, %v681, 0
    %2192 = vmatprep.subr.bf16.mxu0 0
    %2193 = vmatpush1.bf16.msra.mxu0 %v2190
    %2194 = vmatprep.subr.bf16.mxu0 0
    %2195 = vmatpush1.bf16.msra.mxu0 0
    %2196 = vmatprep.subr.bf16.mxu0 0
    %2197 = vmatpush1.bf16.msra.mxu0 0
    %2198 = vmatprep.subr.bf16.mxu0 0
    %2199 = vmatpush1.bf16.msra.mxu0 0
    %2200 = vmatprep.subr.bf16.mxu0 0
    %2201 = vmatpush1.bf16.msra.mxu0 0
    %2202 = vmatprep.subr.bf16.mxu0 0
    %2203 = vmatpush1.bf16.msra.mxu0 0
    %2204 = vmatprep.subr.bf16.mxu0 0
    %2205 = vmatpush1.bf16.msra.mxu0 0
    %2206 = vmatprep.subr.bf16.mxu0 0
    %2207 = vmatpush1.bf16.msra.mxu0 0
    %2208 = vmatprep.subr.bf16.mxu0 0
    %2209 = vmatpush1.bf16.msra.mxu0 0
    %2210 = vmatprep.subr.bf16.mxu0 0
    %2211 = vmatpush1.bf16.msra.mxu0 0
    %2212 = vmatprep.subr.bf16.mxu0 0
    %2213 = vmatpush1.bf16.msra.mxu0 0
    %2214 = vmatprep.subr.bf16.mxu0 0
    %2215 = vmatpush1.bf16.msra.mxu0 0
    %2216 = vmatprep.subr.bf16.mxu0 0
    %2217 = vmatpush1.bf16.msra.mxu0 0
    %2218 = vmatprep.subr.bf16.mxu0 0
    %2219 = vmatpush1.bf16.msra.mxu0 0
    %2220 = vmatprep.subr.bf16.mxu0 0
    %2221 = vmatpush1.bf16.msra.mxu0 0
    %2222 = vmatprep.subr.bf16.mxu0 0
    %2223 = vmatpush1.bf16.msra.mxu0 0
    %2224 = vmatprep.mubr.bf16.mxu0 0
    %2225 = vmatmul.mubr.bf16.gmra.mrb[0].mxu0 %v2187
    %v2226 = vpop.f32.mrb[0].mxu0
    %v2227 = vadd.f32 0.0, %v2226
    %v2228 = vpop.f32.mrb[0].mxu0
    %v2229 = vpop.f32.mrb[0].mxu0
    %v2230 = vpop.f32.mrb[0].mxu0
    %2231 = vdwg.mxu0
    %v2233 = vsel %vm688, %v1630, 0
    %v2236 = vsel %vm1636, %v683, 0
    %2238 = vmatprep.subr.bf16.mxu0 0
    %2239 = vmatpush1.bf16.msra.mxu0 %v2236
    %2240 = vmatprep.subr.bf16.mxu0 0
    %2241 = vmatpush1.bf16.msra.mxu0 0
    %2242 = vmatprep.subr.bf16.mxu0 0
    %2243 = vmatpush1.bf16.msra.mxu0 0
    %2244 = vmatprep.subr.bf16.mxu0 0
    %2245 = vmatpush1.bf16.msra.mxu0 0
    %2246 = vmatprep.subr.bf16.mxu0 0
    %2247 = vmatpush1.bf16.msra.mxu0 0
    %2248 = vmatprep.subr.bf16.mxu0 0
    %2249 = vmatpush1.bf16.msra.mxu0 0
    %2250 = vmatprep.subr.bf16.mxu0 0
    %2251 = vmatpush1.bf16.msra.mxu0 0
    %2252 = vmatprep.subr.bf16.mxu0 0
    %2253 = vmatpush1.bf16.msra.mxu0 0
    %2254 = vmatprep.subr.bf16.mxu0 0
    %2255 = vmatpush1.bf16.msra.mxu0 0
    %2256 = vmatprep.subr.bf16.mxu0 0
    %2257 = vmatpush1.bf16.msra.mxu0 0
    %2258 = vmatprep.subr.bf16.mxu0 0
    %2259 = vmatpush1.bf16.msra.mxu0 0
    %2260 = vmatprep.subr.bf16.mxu0 0
    %2261 = vmatpush1.bf16.msra.mxu0 0
    %2262 = vmatprep.subr.bf16.mxu0 0
    %2263 = vmatpush1.bf16.msra.mxu0 0
    %2264 = vmatprep.subr.bf16.mxu0 0
    %2265 = vmatpush1.bf16.msra.mxu0 0
    %2266 = vmatprep.subr.bf16.mxu0 0
    %2267 = vmatpush1.bf16.msra.mxu0 0
    %2268 = vmatprep.subr.bf16.mxu0 0
    %2269 = vmatpush1.bf16.msra.mxu0 0
    %2270 = vmatprep.mubr.bf16.mxu0 0
    %2271 = vmatmul.mubr.bf16.gmra.mrb[0].mxu0 %v2233
    %v2272 = vpop.f32.mrb[0].mxu0
    %v2273 = vadd.f32 0.0, %v2272
    %v2274 = vpop.f32.mrb[0].mxu0
    %v2275 = vpop.f32.mrb[0].mxu0
    %v2276 = vpop.f32.mrb[0].mxu0
    %2277 = vdwg.mxu0
    %v2279 = vsel %vm688, %v1631, 0
    %v2282 = vsel %vm1636, %v685, 0
    %2284 = vmatprep.subr.bf16.mxu0 0
    %2285 = vmatpush1.bf16.msra.mxu0 %v2282
    %2286 = vmatprep.subr.bf16.mxu0 0
    %2287 = vmatpush1.bf16.msra.mxu0 0
    %2288 = vmatprep.subr.bf16.mxu0 0
    %2289 = vmatpush1.bf16.msra.mxu0 0
    %2290 = vmatprep.subr.bf16.mxu0 0
    %2291 = vmatpush1.bf16.msra.mxu0 0
    %2292 = vmatprep.subr.bf16.mxu0 0
    %2293 = vmatpush1.bf16.msra.mxu0 0
    %2294 = vmatprep.subr.bf16.mxu0 0
    %2295 = vmatpush1.bf16.msra.mxu0 0
    %2296 = vmatprep.subr.bf16.mxu0 0
    %2297 = vmatpush1.bf16.msra.mxu0 0
    %2298 = vmatprep.subr.bf16.mxu0 0
    %2299 = vmatpush1.bf16.msra.mxu0 0
    %2300 = vmatprep.subr.bf16.mxu0 0
    %2301 = vmatpush1.bf16.msra.mxu0 0
    %2302 = vmatprep.subr.bf16.mxu0 0
    %2303 = vmatpush1.bf16.msra.mxu0 0
    %2304 = vmatprep.subr.bf16.mxu0 0
    %2305 = vmatpush1.bf16.msra.mxu0 0
    %2306 = vmatprep.subr.bf16.mxu0 0
    %2307 = vmatpush1.bf16.msra.mxu0 0
    %2308 = vmatprep.subr.bf16.mxu0 0
    %2309 = vmatpush1.bf16.msra.mxu0 0
    %2310 = vmatprep.subr.bf16.mxu0 0
    %2311 = vmatpush1.bf16.msra.mxu0 0
    %2312 = vmatprep.subr.bf16.mxu0 0
    %2313 = vmatpush1.bf16.msra.mxu0 0
    %2314 = vmatprep.subr.bf16.mxu0 0
    %2315 = vmatpush1.bf16.msra.mxu0 0
    %2316 = vmatprep.mubr.bf16.mxu0 0
    %2317 = vmatmul.mubr.bf16.gmra.mrb[0].mxu0 %v2279
    %v2318 = vpop.f32.mrb[0].mxu0
    %v2319 = vadd.f32 0.0, %v2318
    %v2320 = vpop.f32.mrb[0].mxu0
    %v2321 = vpop.f32.mrb[0].mxu0
    %v2322 = vpop.f32.mrb[0].mxu0
    %2323 = vdwg.mxu0
    %v2325 = vsel %vm688, %v1632, 0
    %v2328 = vsel %vm1636, %v687, 0
    %2330 = vmatprep.subr.bf16.mxu0 0
    %2331 = vmatpush1.bf16.msra.mxu0 %v2328
    %2332 = vmatprep.subr.bf16.mxu0 0
    %2333 = vmatpush1.bf16.msra.mxu0 0
    %2334 = vmatprep.subr.bf16.mxu0 0
    %2335 = vmatpush1.bf16.msra.mxu0 0
    %2336 = vmatprep.subr.bf16.mxu0 0
    %2337 = vmatpush1.bf16.msra.mxu0 0
    %2338 = vmatprep.subr.bf16.mxu0 0
    %2339 = vmatpush1.bf16.msra.mxu0 0
    %2340 = vmatprep.subr.bf16.mxu0 0
    %2341 = vmatpush1.bf16.msra.mxu0 0
    %2342 = vmatprep.subr.bf16.mxu0 0
    %2343 = vmatpush1.bf16.msra.mxu0 0
    %2344 = vmatprep.subr.bf16.mxu0 0
    %2345 = vmatpush1.bf16.msra.mxu0 0
    %2346 = vmatprep.subr.bf16.mxu0 0
    %2347 = vmatpush1.bf16.msra.mxu0 0
    %2348 = vmatprep.subr.bf16.mxu0 0
    %2349 = vmatpush1.bf16.msra.mxu0 0
    %2350 = vmatprep.subr.bf16.mxu0 0
    %2351 = vmatpush1.bf16.msra.mxu0 0
    %2352 = vmatprep.subr.bf16.mxu0 0
    %2353 = vmatpush1.bf16.msra.mxu0 0
    %2354 = vmatprep.subr.bf16.mxu0 0
    %2355 = vmatpush1.bf16.msra.mxu0 0
    %2356 = vmatprep.subr.bf16.mxu0 0
    %2357 = vmatpush1.bf16.msra.mxu0 0
    %2358 = vmatprep.subr.bf16.mxu0 0
    %2359 = vmatpush1.bf16.msra.mxu0 0
    %2360 = vmatprep.subr.bf16.mxu0 0
    %2361 = vmatpush1.bf16.msra.mxu0 0
    %2362 = vmatprep.mubr.bf16.mxu0 0
    %2363 = vmatmul.mubr.bf16.gmra.mrb[0].mxu0 %v2325
    %v2364 = vpop.f32.mrb[0].mxu0
    %v2365 = vadd.f32 0.0, %v2364
    %v2366 = vpop.f32.mrb[0].mxu0
    %v2367 = vpop.f32.mrb[0].mxu0
    %v2368 = vpop.f32.mrb[0].mxu0
    %2369 = vdwg.mxu0
    %v2370 = vpack.c.bf16 %v1675, %v1675
    %v2371 = vpack.c.bf16 %v1721, %v1721
    %v2372 = vpack.c.bf16 %v1767, %v1767
    %v2373 = vpack.c.bf16 %v1813, %v1813
    %v2374 = vpack.c.bf16 %v1859, %v1859
    %v2375 = vpack.c.bf16 %v1905, %v1905
    %v2376 = vpack.c.bf16 %v1951, %v1951
    %v2377 = vpack.c.bf16 %v1997, %v1997
    %v2378 = vpack.c.bf16 %v2043, %v2043
    %v2379 = vpack.c.bf16 %v2089, %v2089
    %v2380 = vpack.c.bf16 %v2135, %v2135
    %v2381 = vpack.c.bf16 %v2181, %v2181
    %v2382 = vpack.c.bf16 %v2227, %v2227
    %v2383 = vpack.c.bf16 %v2273, %v2273
    %v2384 = vpack.c.bf16 %v2319, %v2319
    %v2385 = vpack.c.bf16 %v2365, %v2365
    %v2390 = vunpack.c.l.b16 %v2370
    %v2391 = vunpack.c.l.b16 %v2371
    %v2392 = vunpack.c.l.b16 %v2372
    %v2393 = vunpack.c.l.b16 %v2373
    %v2394 = vpack.c.b16 %v2391, %v2390
    %v2395 = vpack.c.b16 %v2393, %v2392
    %v2400 = vunpack.c.l.b16 %v2374
    %v2401 = vunpack.c.l.b16 %v2375
    %v2402 = vunpack.c.l.b16 %v2376
    %v2403 = vunpack.c.l.b16 %v2377
    %v2404 = vpack.c.b16 %v2401, %v2400
    %v2405 = vpack.c.b16 %v2403, %v2402
    %2406 = vrot.lane.b32.xlu0 %v2404, 8
    %v2407 = vpop.permute.xlu0 %2406
    %2408 = vrot.lane.b32.xlu0 %v2405, 8
    %v2409 = vpop.permute.xlu0 %2408
    %v2414 = vunpack.c.l.b16 %v2378
    %v2415 = vunpack.c.l.b16 %v2379
    %v2416 = vunpack.c.l.b16 %v2380
    %v2417 = vunpack.c.l.b16 %v2381
    %v2418 = vpack.c.b16 %v2415, %v2414
    %v2419 = vpack.c.b16 %v2417, %v2416
    %2420 = vrot.lane.b32.xlu0 %v2418, 16
    %v2421 = vpop.permute.xlu0 %2420
    %2422 = vrot.lane.b32.xlu0 %v2419, 16
    %v2423 = vpop.permute.xlu0 %2422
    %v2428 = vunpack.c.l.b16 %v2382
    %v2429 = vunpack.c.l.b16 %v2383
    %v2430 = vunpack.c.l.b16 %v2384
    %v2431 = vunpack.c.l.b16 %v2385
    %v2432 = vpack.c.b16 %v2429, %v2428
    %v2433 = vpack.c.b16 %v2431, %v2430
    %2434 = vrot.lane.b32.xlu0 %v2432, 24
    %v2435 = vpop.permute.xlu0 %2434
    %2436 = vrot.lane.b32.xlu0 %v2433, 24
    %v2437 = vpop.permute.xlu0 %2436
    %v2440 = vsel %vm688, %v2394, %v2407
    %v2443 = vsel %vm688, %v2395, %v2409
    %vm2444 = vcmask 130048
    %v2446 = vsel %vm2444, %v2440, %v2421
    %v2448 = vsel %vm2444, %v2443, %v2423
    %vm2449 = vcmask 195584
    %v2451 = vsel %vm2449, %v2446, %v2435
    %v2453 = vsel %vm2449, %v2448, %v2437
    %v2455 = vlaneseq
    %v2456 = vshrl.u32 %v2455, 7
    %v2457 = vsub.s32 0, %v2456
    %v2458 = vrot.slane %v357, %v2457
    %v2464 = vunpack.c.l.b16 %v353
    %v2465 = vunpack.c.l.b16 %v354
    %v2466 = vunpack.c.l.b16 %v355
    %v2467 = vunpack.c.l.b16 %v356
    %v2468 = vpack.c.b16 %v2465, %v2464
    %v2469 = vpack.c.b16 %v2467, %v2466
    %v2472 = vsel %vm386, %v2451, 0
    %v2474 = vsel %vm386, %v2453, 0
    %2476 = vmatprep.subr.bf16.mxu0 0
    %2477 = vmatpush1.bf16.msra.mxu0 %v2468
    %2478 = vmatprep.subr.bf16.mxu0 0
    %2479 = vmatpush1.bf16.msra.mxu0 %v2469
    %2480 = vmatprep.subr.bf16.mxu0 0
    %2481 = vmatpush1.bf16.msra.mxu0 0
    %2482 = vmatprep.subr.bf16.mxu0 0
    %2483 = vmatpush1.bf16.msra.mxu0 0
    %2484 = vmatprep.subr.bf16.mxu0 0
    %2485 = vmatpush1.bf16.msra.mxu0 0
    %2486 = vmatprep.subr.bf16.mxu0 0
    %2487 = vmatpush1.bf16.msra.mxu0 0
    %2488 = vmatprep.subr.bf16.mxu0 0
    %2489 = vmatpush1.bf16.msra.mxu0 0
    %2490 = vmatprep.subr.bf16.mxu0 0
    %2491 = vmatpush1.bf16.msra.mxu0 0
    %2492 = vmatprep.subr.bf16.mxu0 0
    %2493 = vmatpush1.bf16.msra.mxu0 0
    %2494 = vmatprep.subr.bf16.mxu0 0
    %2495 = vmatpush1.bf16.msra.mxu0 0
    %2496 = vmatprep.subr.bf16.mxu0 0
    %2497 = vmatpush1.bf16.msra.mxu0 0
    %2498 = vmatprep.subr.bf16.mxu0 0
    %2499 = vmatpush1.bf16.msra.mxu0 0
    %2500 = vmatprep.subr.bf16.mxu0 0
    %2501 = vmatpush1.bf16.msra.mxu0 0
    %2502 = vmatprep.subr.bf16.mxu0 0
    %2503 = vmatpush1.bf16.msra.mxu0 0
    %2504 = vmatprep.subr.bf16.mxu0 0
    %2505 = vmatpush1.bf16.msra.mxu0 0
    %2506 = vmatprep.subr.bf16.mxu0 0
    %2507 = vmatpush1.bf16.msra.mxu0 0
    %2508 = vmatprep.mubr.bf16.mxu0 0
    %2509 = vmatmul.mubr.bf16.gmra.mrb[0].mxu0 %v2472
    %v2510 = vpop.f32.mrb[0].mxu0
    %v2511 = vadd.f32 %v2458, %v2510
    %v2512 = vpop.f32.mrb[0].mxu0
    %v2513 = vpop.f32.mrb[0].mxu0
    %v2514 = vadd.f32 %v2458, %v2513
    %v2515 = vpop.f32.mrb[0].mxu0
    %2516 = vmatprep.mubr.bf16.mxu0 0
    %2517 = vmatmul.mubr.bf16.gmra.mrb[0].mxu0 %v2474
    %v2518 = vpop.f32.mrb[0].mxu0
    %v2519 = vadd.f32 %v2458, %v2518
    %v2520 = vpop.f32.mrb[0].mxu0
    %v2521 = vpop.f32.mrb[0].mxu0
    %v2522 = vadd.f32 %v2458, %v2521
    %v2523 = vpop.f32.mrb[0].mxu0
    %2524 = vdwg.mxu0
    %v2525 = vadd.f32 %v2511, %v275
    %v2526 = vadd.f32 %v2514, %v276
    %v2527 = vadd.f32 %v2519, %v277
    %v2528 = vadd.f32 %v2522, %v278
    %v2529 = vld [vmem:[%s24] sm:$0x1]
    %v2530 = vld [vmem:[%s25] sm:$0x1]
    %v2531 = vsel %vm386, %v2525, 0.0
    %2532 = vadd.xlane.f32.xlu0 %v2531
    %v2533 = vpop.xlane.xlu0 %2532
    %v2534 = vsel %vm386, %v2526, 0.0
    %2535 = vadd.xlane.f32.xlu0 %v2534
    %v2536 = vpop.xlane.xlu0 %2535
    %v2537 = vsel %vm386, %v2527, 0.0
    %2538 = vadd.xlane.f32.xlu0 %v2537
    %v2539 = vpop.xlane.xlu0 %2538
    %v2540 = vsel %vm386, %v2528, 0.0
    %2541 = vadd.xlane.f32.xlu0 %v2540
    %v2542 = vpop.xlane.xlu0 %2541
    %v2543 = vrcp.pop 32.0
    %v2544 = vmul.f32 %v2533, %v2543
    %v2545 = vmul.f32 %v2536, %v2543
    %v2546 = vmul.f32 %v2539, %v2543
    %v2547 = vmul.f32 %v2542, %v2543
    %v2548 = vsub.f32 %v2525, %v2544
    %v2549 = vsub.f32 %v2526, %v2545
    %v2550 = vsub.f32 %v2527, %v2546
    %v2551 = vsub.f32 %v2528, %v2547
    %v2552 = vmul.f32 %v2548, %v2548
    %v2553 = vmul.f32 %v2549, %v2549
    %v2554 = vmul.f32 %v2550, %v2550
    %v2555 = vmul.f32 %v2551, %v2551
    %v2556 = vsel %vm386, %v2552, 0.0
    %2557 = vadd.xlane.f32.xlu0 %v2556
    %v2558 = vpop.xlane.xlu0 %2557
    %v2559 = vsel %vm386, %v2553, 0.0
    %2560 = vadd.xlane.f32.xlu0 %v2559
    %v2561 = vpop.xlane.xlu0 %2560
    %v2562 = vsel %vm386, %v2554, 0.0
    %2563 = vadd.xlane.f32.xlu0 %v2562
    %v2564 = vpop.xlane.xlu0 %2563
    %v2565 = vsel %vm386, %v2555, 0.0
    %2566 = vadd.xlane.f32.xlu0 %v2565
    %v2567 = vpop.xlane.xlu0 %2566
    %v2568 = vmul.f32 %v2558, %v2543
    %v2569 = vmul.f32 %v2561, %v2543
    %v2570 = vmul.f32 %v2564, %v2543
    %v2571 = vmul.f32 %v2567, %v2543
    %v2572 = vadd.f32 %v2568, 1e-05
    %v2573 = vadd.f32 %v2569, 1e-05
    %v2574 = vadd.f32 %v2570, 1e-05
    %v2575 = vadd.f32 %v2571, 1e-05
    %v2576 = vrsqrt.pop %v2572
    %v2577 = vrsqrt.pop %v2573
    %v2578 = vrsqrt.pop %v2574
    %v2579 = vrsqrt.pop %v2575
    %v2580 = vmul.f32 %v2548, %v2576
    %v2581 = vmul.f32 %v2549, %v2577
    %v2582 = vmul.f32 %v2550, %v2578
    %v2583 = vmul.f32 %v2551, %v2579
    %v2585 = vlaneseq
    %v2586 = vshrl.u32 %v2585, 7
    %v2587 = vsub.s32 0, %v2586
    %v2588 = vrot.slane %v2529, %v2587
    %v2590 = vmul.f32 %v2580, %v2588
    %v2591 = vmul.f32 %v2581, %v2588
    %v2592 = vmul.f32 %v2582, %v2588
    %v2593 = vmul.f32 %v2583, %v2588
    %v2595 = vlaneseq
    %v2596 = vshrl.u32 %v2595, 7
    %v2597 = vsub.s32 0, %v2596
    %v2598 = vrot.slane %v2530, %v2597
    %v2600 = vadd.f32 %v2590, %v2598
    %v2601 = vadd.f32 %v2591, %v2598
    %v2602 = vadd.f32 %v2592, %v2598
    %v2603 = vadd.f32 %v2593, %v2598
    %v2604 = vpack.c.bf16 %v2601, %v2600
    %v2605 = vpack.c.bf16 %v2603, %v2602
    %v2606 = vld [vmem:[#allocation16] sm:$0xf]
    %v2607 = vld [vmem:[#allocation16 + $0x4] sm:$0xf]
    %v2608 = vld [vmem:[#allocation16 + $0x8] sm:$0xf]
    %v2609 = vld [vmem:[#allocation16 + $0xc] sm:$0xf]
    %v2610 = vld [vmem:[#allocation17] sm:$0x1]
    %v2611 = vld [vmem:[%s14] sm:$0xf]
    %v2612 = vld [vmem:[%s14 + $0x4] sm:$0xf]
    %v2613 = vld [vmem:[%s14 + $0x8] sm:$0xf]
    %v2614 = vld [vmem:[%s14 + $0xc] sm:$0xf]
    %v2615 = vld [vmem:[#allocation19] sm:$0x1]
    %v2616 = vld [vmem:[#allocation20] sm:$0xf]
    %v2617 = vld [vmem:[#allocation20 + $0x4] sm:$0xf]
    %v2618 = vld [vmem:[#allocation20 + $0x8] sm:$0xf]
    %v2619 = vld [vmem:[#allocation20 + $0xc] sm:$0xf]
    %v2620 = vld [vmem:[#allocation22] sm:$0x1]
    %v2621 = vld [vmem:[%s18] sm:$0xf]
    %v2622 = vld [vmem:[%s18 + $0x4] sm:$0xf]
    %v2623 = vld [vmem:[%s18 + $0x8] sm:$0xf]
    %v2624 = vld [vmem:[%s18 + $0xc] sm:$0xf]
    %v2625 = vld [vmem:[%s19] sm:$0x1]
    %v2627 = vlaneseq
    %v2628 = vshrl.u32 %v2627, 7
    %v2629 = vsub.s32 0, %v2628
    %v2630 = vrot.slane %v2610, %v2629
    %v2636 = vunpack.c.l.b16 %v2606
    %v2637 = vunpack.c.l.b16 %v2607
    %v2638 = vunpack.c.l.b16 %v2608
    %v2639 = vunpack.c.l.b16 %v2609
    %v2640 = vpack.c.b16 %v2637, %v2636
    %v2641 = vpack.c.b16 %v2639, %v2638
    %v2645 = vsel %vm386, %v2604, 0
    %v2648 = vsel %vm386, %v2605, 0
    %2650 = vmatprep.subr.bf16.mxu0 0
    %2651 = vmatpush1.bf16.msra.mxu0 %v2640
    %2652 = vmatprep.subr.bf16.mxu0 0
    %2653 = vmatpush1.bf16.msra.mxu0 %v2641
    %2654 = vmatprep.subr.bf16.mxu0 0
    %2655 = vmatpush1.bf16.msra.mxu0 0
    %2656 = vmatprep.subr.bf16.mxu0 0
    %2657 = vmatpush1.bf16.msra.mxu0 0
    %2658 = vmatprep.subr.bf16.mxu0 0
    %2659 = vmatpush1.bf16.msra.mxu0 0
    %2660 = vmatprep.subr.bf16.mxu0 0
    %2661 = vmatpush1.bf16.msra.mxu0 0
    %2662 = vmatprep.subr.bf16.mxu0 0
    %2663 = vmatpush1.bf16.msra.mxu0 0
    %2664 = vmatprep.subr.bf16.mxu0 0
    %2665 = vmatpush1.bf16.msra.mxu0 0
    %2666 = vmatprep.subr.bf16.mxu0 0
    %2667 = vmatpush1.bf16.msra.mxu0 0
    %2668 = vmatprep.subr.bf16.mxu0 0
    %2669 = vmatpush1.bf16.msra.mxu0 0
    %2670 = vmatprep.subr.bf16.mxu0 0
    %2671 = vmatpush1.bf16.msra.mxu0 0
    %2672 = vmatprep.subr.bf16.mxu0 0
    %2673 = vmatpush1.bf16.msra.mxu0 0
    %2674 = vmatprep.subr.bf16.mxu0 0
    %2675 = vmatpush1.bf16.msra.mxu0 0
    %2676 = vmatprep.subr.bf16.mxu0 0
    %2677 = vmatpush1.bf16.msra.mxu0 0
    %2678 = vmatprep.subr.bf16.mxu0 0
    %2679 = vmatpush1.bf16.msra.mxu0 0
    %2680 = vmatprep.subr.bf16.mxu0 0
    %2681 = vmatpush1.bf16.msra.mxu0 0
    %2682 = vmatprep.mubr.bf16.mxu0 0
    %2683 = vmatmul.mubr.bf16.gmra.mrb[0].mxu0 %v2645
    %v2684 = vpop.f32.mrb[0].mxu0
    %v2685 = vadd.f32 %v2630, %v2684
    %v2686 = vpop.f32.mrb[0].mxu0
    %v2687 = vpop.f32.mrb[0].mxu0
    %v2688 = vadd.f32 %v2630, %v2687
    %v2689 = vpop.f32.mrb[0].mxu0
    %2690 = vmatprep.mubr.bf16.mxu0 0
    %2691 = vmatmul.mubr.bf16.gmra.mrb[0].mxu0 %v2648
    %v2692 = vpop.f32.mrb[0].mxu0
    %v2693 = vadd.f32 %v2630, %v2692
    %v2694 = vpop.f32.mrb[0].mxu0
    %v2695 = vpop.f32.mrb[0].mxu0
    %v2696 = vadd.f32 %v2630, %v2695
    %v2697 = vpop.f32.mrb[0].mxu0
    %2698 = vdwg.mxu0
    %v2699 = vmul.f32 %v2685, 0.35355338
    %v2700 = vmul.f32 %v2688, 0.35355338
    %v2701 = vmul.f32 %v2693, 0.35355338
    %v2702 = vmul.f32 %v2696, 0.35355338
    %v2704 = vlaneseq
    %v2705 = vshrl.u32 %v2704, 7
    %v2706 = vsub.s32 0, %v2705
    %v2707 = vrot.slane %v2615, %v2706
    %v2713 = vunpack.c.l.b16 %v271
    %v2714 = vunpack.c.l.b16 %v272
    %v2715 = vunpack.c.l.b16 %v273
    %v2716 = vunpack.c.l.b16 %v274
    %v2717 = vpack.c.b16 %v2714, %v2713
    %v2718 = vpack.c.b16 %v2716, %v2715
    %v2723 = vunpack.c.l.b16 %v2611
    %v2724 = vunpack.c.l.b16 %v2612
    %v2725 = vunpack.c.l.b16 %v2613
    %v2726 = vunpack.c.l.b16 %v2614
    %v2727 = vpack.c.b16 %v2724, %v2723
    %v2728 = vpack.c.b16 %v2726, %v2725
    %v2732 = vsel %vm386, %v2717, 0
    %v2735 = vsel %vm386, %v2718, 0
    %2737 = vmatprep.subr.bf16.mxu0 0
    %2738 = vmatpush1.bf16.msra.mxu0 %v2727
    %2739 = vmatprep.subr.bf16.mxu0 0
    %2740 = vmatpush1.bf16.msra.mxu0 %v2728
    %2741 = vmatprep.subr.bf16.mxu0 0
    %2742 = vmatpush1.bf16.msra.mxu0 0
    %2743 = vmatprep.subr.bf16.mxu0 0
    %2744 = vmatpush1.bf16.msra.mxu0 0
    %2745 = vmatprep.subr.bf16.mxu0 0
    %2746 = vmatpush1.bf16.msra.mxu0 0
    %2747 = vmatprep.subr.bf16.mxu0 0
    %2748 = vmatpush1.bf16.msra.mxu0 0
    %2749 = vmatprep.subr.bf16.mxu0 0
    %2750 = vmatpush1.bf16.msra.mxu0 0
    %2751 = vmatprep.subr.bf16.mxu0 0
    %2752 = vmatpush1.bf16.msra.mxu0 0
    %2753 = vmatprep.subr.bf16.mxu0 0
    %2754 = vmatpush1.bf16.msra.mxu0 0
    %2755 = vmatprep.subr.bf16.mxu0 0
    %2756 = vmatpush1.bf16.msra.mxu0 0
    %2757 = vmatprep.subr.bf16.mxu0 0
    %2758 = vmatpush1.bf16.msra.mxu0 0
    %2759 = vmatprep.subr.bf16.mxu0 0
    %2760 = vmatpush1.bf16.msra.mxu0 0
    %2761 = vmatprep.subr.bf16.mxu0 0
    %2762 = vmatpush1.bf16.msra.mxu0 0
    %2763 = vmatprep.subr.bf16.mxu0 0
    %2764 = vmatpush1.bf16.msra.mxu0 0
    %2765 = vmatprep.subr.bf16.mxu0 0
    %2766 = vmatpush1.bf16.msra.mxu0 0
    %2767 = vmatprep.subr.bf16.mxu0 0
    %2768 = vmatpush1.bf16.msra.mxu0 0
    %2769 = vmatprep.mubr.bf16.mxu0 0
    %2770 = vmatmul.mubr.bf16.gmra.mrb[0].mxu0 %v2732
    %v2771 = vpop.f32.mrb[0].mxu0
    %v2772 = vadd.f32 %v2707, %v2771
    %v2773 = vpop.f32.mrb[0].mxu0
    %v2774 = vpop.f32.mrb[0].mxu0
    %v2775 = vadd.f32 %v2707, %v2774
    %v2776 = vpop.f32.mrb[0].mxu0
    %2777 = vmatprep.mubr.bf16.mxu0 0
    %2778 = vmatmul.mubr.bf16.gmra.mrb[0].mxu0 %v2735
    %v2779 = vpop.f32.mrb[0].mxu0
    %v2780 = vadd.f32 %v2707, %v2779
    %v2781 = vpop.f32.mrb[0].mxu0
    %v2782 = vpop.f32.mrb[0].mxu0
    %v2783 = vadd.f32 %v2707, %v2782
    %v2784 = vpop.f32.mrb[0].mxu0
    %2785 = vdwg.mxu0
    %v2787 = vlaneseq
    %v2788 = vshrl.u32 %v2787, 7
    %v2789 = vsub.s32 0, %v2788
    %v2790 = vrot.slane %v2620, %v2789
    %v2796 = vunpack.c.l.b16 %v2616
    %v2797 = vunpack.c.l.b16 %v2617
    %v2798 = vunpack.c.l.b16 %v2618
    %v2799 = vunpack.c.l.b16 %v2619
    %v2800 = vpack.c.b16 %v2797, %v2796
    %v2801 = vpack.c.b16 %v2799, %v2798
    %2804 = vmatprep.subr.bf16.mxu0 0
    %2805 = vmatpush1.bf16.msra.mxu0 %v2800
    %2806 = vmatprep.subr.bf16.mxu0 0
    %2807 = vmatpush1.bf16.msra.mxu0 %v2801
    %2808 = vmatprep.subr.bf16.mxu0 0
    %2809 = vmatpush1.bf16.msra.mxu0 0
    %2810 = vmatprep.subr.bf16.mxu0 0
    %2811 = vmatpush1.bf16.msra.mxu0 0
    %2812 = vmatprep.subr.bf16.mxu0 0
    %2813 = vmatpush1.bf16.msra.mxu0 0
    %2814 = vmatprep.subr.bf16.mxu0 0
    %2815 = vmatpush1.bf16.msra.mxu0 0
    %2816 = vmatprep.subr.bf16.mxu0 0
    %2817 = vmatpush1.bf16.msra.mxu0 0
    %2818 = vmatprep.subr.bf16.mxu0 0
    %2819 = vmatpush1.bf16.msra.mxu0 0
    %2820 = vmatprep.subr.bf16.mxu0 0
    %2821 = vmatpush1.bf16.msra.mxu0 0
    %2822 = vmatprep.subr.bf16.mxu0 0
    %2823 = vmatpush1.bf16.msra.mxu0 0
    %2824 = vmatprep.subr.bf16.mxu0 0
    %2825 = vmatpush1.bf16.msra.mxu0 0
    %2826 = vmatprep.subr.bf16.mxu0 0
    %2827 = vmatpush1.bf16.msra.mxu0 0
    %2828 = vmatprep.subr.bf16.mxu0 0
    %2829 = vmatpush1.bf16.msra.mxu0 0
    %2830 = vmatprep.subr.bf16.mxu0 0
    %2831 = vmatpush1.bf16.msra.mxu0 0
    %2832 = vmatprep.subr.bf16.mxu0 0
    %2833 = vmatpush1.bf16.msra.mxu0 0
    %2834 = vmatprep.subr.bf16.mxu0 0
    %2835 = vmatpush1.bf16.msra.mxu0 0
    %2836 = vmatprep.mubr.bf16.mxu0 0
    %2837 = vmatmul.mubr.bf16.gmra.mrb[0].mxu0 %v2732
    %v2838 = vpop.f32.mrb[0].mxu0
    %v2839 = vadd.f32 %v2790, %v2838
    %v2840 = vpop.f32.mrb[0].mxu0
    %v2841 = vpop.f32.mrb[0].mxu0
    %v2842 = vadd.f32 %v2790, %v2841
    %v2843 = vpop.f32.mrb[0].mxu0
    %2844 = vmatprep.mubr.bf16.mxu0 0
    %2845 = vmatmul.mubr.bf16.gmra.mrb[0].mxu0 %v2735
    %v2846 = vpop.f32.mrb[0].mxu0
    %v2847 = vadd.f32 %v2790, %v2846
    %v2848 = vpop.f32.mrb[0].mxu0
    %v2849 = vpop.f32.mrb[0].mxu0
    %v2850 = vadd.f32 %v2790, %v2849
    %v2851 = vpop.f32.mrb[0].mxu0
    %2852 = vdwg.mxu0
    %v2853 = vpack.c.bf16 %v2700, %v2699
    %v2854 = vpack.c.bf16 %v2702, %v2701
    %v2857 = vunpack.c.l.b16 %v2853
    %v2858 = vunpack.c.h.b16 %v2853
    %v2859 = vunpack.c.l.b16 %v2854
    %v2860 = vunpack.c.h.b16 %v2854
    %v2861 = vpack.c.b16 %v2857, %v2857
    %v2862 = vpack.c.b16 %v2858, %v2858
    %v2863 = vpack.c.b16 %v2859, %v2859
    %v2864 = vpack.c.b16 %v2860, %v2860
    %2865 = vrot.lane.b32.xlu0 %v2861, 120
    %v2866 = vpop.permute.xlu0 %2865
    %2867 = vrot.lane.b32.xlu0 %v2862, 120
    %v2868 = vpop.permute.xlu0 %2867
    %2869 = vrot.lane.b32.xlu0 %v2863, 120
    %v2870 = vpop.permute.xlu0 %2869
    %2871 = vrot.lane.b32.xlu0 %v2864, 120
    %v2872 = vpop.permute.xlu0 %2871
    %2873 = vrot.lane.b32.xlu0 %v2861, 112
    %v2874 = vpop.permute.xlu0 %2873
    %2875 = vrot.lane.b32.xlu0 %v2862, 112
    %v2876 = vpop.permute.xlu0 %2875
    %2877 = vrot.lane.b32.xlu0 %v2863, 112
    %v2878 = vpop.permute.xlu0 %2877
    %2879 = vrot.lane.b32.xlu0 %v2864, 112
    %v2880 = vpop.permute.xlu0 %2879
    %2881 = vrot.lane.b32.xlu0 %v2861, 104
    %v2882 = vpop.permute.xlu0 %2881
    %2883 = vrot.lane.b32.xlu0 %v2862, 104
    %v2884 = vpop.permute.xlu0 %2883
    %2885 = vrot.lane.b32.xlu0 %v2863, 104
    %v2886 = vpop.permute.xlu0 %2885
    %2887 = vrot.lane.b32.xlu0 %v2864, 104
    %v2888 = vpop.permute.xlu0 %2887
    %v2889 = vpack.c.bf16 %v2775, %v2772
    %v2890 = vpack.c.bf16 %v2783, %v2780
    %v2893 = vunpack.c.l.b16 %v2889
    %v2894 = vunpack.c.h.b16 %v2889
    %v2895 = vunpack.c.l.b16 %v2890
    %v2896 = vunpack.c.h.b16 %v2890
    %v2897 = vpack.c.b16 %v2893, %v2893
    %v2898 = vpack.c.b16 %v2894, %v2894
    %v2899 = vpack.c.b16 %v2895, %v2895
    %v2900 = vpack.c.b16 %v2896, %v2896
    %2901 = vrot.lane.b32.xlu0 %v2897, 120
    %v2902 = vpop.permute.xlu0 %2901
    %2903 = vrot.lane.b32.xlu0 %v2898, 120
    %v2904 = vpop.permute.xlu0 %2903
    %2905 = vrot.lane.b32.xlu0 %v2899, 120
    %v2906 = vpop.permute.xlu0 %2905
    %2907 = vrot.lane.b32.xlu0 %v2900, 120
    %v2908 = vpop.permute.xlu0 %2907
    %2909 = vrot.lane.b32.xlu0 %v2897, 112
    %v2910 = vpop.permute.xlu0 %2909
    %2911 = vrot.lane.b32.xlu0 %v2898, 112
    %v2912 = vpop.permute.xlu0 %2911
    %2913 = vrot.lane.b32.xlu0 %v2899, 112
    %v2914 = vpop.permute.xlu0 %2913
    %2915 = vrot.lane.b32.xlu0 %v2900, 112
    %v2916 = vpop.permute.xlu0 %2915
    %2917 = vrot.lane.b32.xlu0 %v2897, 104
    %v2918 = vpop.permute.xlu0 %2917
    %2919 = vrot.lane.b32.xlu0 %v2898, 104
    %v2920 = vpop.permute.xlu0 %2919
    %2921 = vrot.lane.b32.xlu0 %v2899, 104
    %v2922 = vpop.permute.xlu0 %2921
    %2923 = vrot.lane.b32.xlu0 %v2900, 104
    %v2924 = vpop.permute.xlu0 %2923
    %v2925 = vpack.c.bf16 %v2842, %v2839
    %v2926 = vpack.c.bf16 %v2850, %v2847
    %v2929 = vunpack.c.l.b16 %v2925
    %v2930 = vunpack.c.h.b16 %v2925
    %v2931 = vunpack.c.l.b16 %v2926
    %v2932 = vunpack.c.h.b16 %v2926
    %v2933 = vpack.c.b16 %v2929, %v2929
    %v2934 = vpack.c.b16 %v2930, %v2930
    %v2935 = vpack.c.b16 %v2931, %v2931
    %v2936 = vpack.c.b16 %v2932, %v2932
    %2937 = vrot.lane.b32.xlu0 %v2933, 120
    %v2938 = vpop.permute.xlu0 %2937
    %2939 = vrot.lane.b32.xlu0 %v2934, 120
    %v2940 = vpop.permute.xlu0 %2939
    %2941 = vrot.lane.b32.xlu0 %v2935, 120
    %v2942 = vpop.permute.xlu0 %2941
    %2943 = vrot.lane.b32.xlu0 %v2936, 120
    %v2944 = vpop.permute.xlu0 %2943
    %2945 = vrot.lane.b32.xlu0 %v2933, 112
    %v2946 = vpop.permute.xlu0 %2945
    %2947 = vrot.lane.b32.xlu0 %v2934, 112
    %v2948 = vpop.permute.xlu0 %2947
    %2949 = vrot.lane.b32.xlu0 %v2935, 112
    %v2950 = vpop.permute.xlu0 %2949
    %2951 = vrot.lane.b32.xlu0 %v2936, 112
    %v2952 = vpop.permute.xlu0 %2951
    %2953 = vrot.lane.b32.xlu0 %v2933, 104
    %v2954 = vpop.permute.xlu0 %2953
    %2955 = vrot.lane.b32.xlu0 %v2934, 104
    %v2956 = vpop.permute.xlu0 %2955
    %2957 = vrot.lane.b32.xlu0 %v2935, 104
    %v2958 = vpop.permute.xlu0 %2957
    %2959 = vrot.lane.b32.xlu0 %v2936, 104
    %v2960 = vpop.permute.xlu0 %2959
    %v2962 = vsel %vm688, %v2861, 0
    %v2965 = vsel %vm688, %v2897, 0
    %2967 = vmatprep.subr.bf16.mxu0 0
    %2968 = vmatpush1.bf16.xpose.msra.mxu0 %v2965
    %2969 = vmatprep.subr.bf16.mxu0 0
    %2970 = vmatpush1.bf16.xpose.msra.mxu0 0
    %2971 = vmatprep.subr.bf16.mxu0 0
    %2972 = vmatpush1.bf16.xpose.msra.mxu0 0
    %2973 = vmatprep.subr.bf16.mxu0 0
    %2974 = vmatpush1.bf16.xpose.msra.mxu0 0
    %2975 = vmatprep.subr.bf16.mxu0 0
    %2976 = vmatpush1.bf16.xpose.msra.mxu0 0
    %2977 = vmatprep.subr.bf16.mxu0 0
    %2978 = vmatpush1.bf16.xpose.msra.mxu0 0
    %2979 = vmatprep.subr.bf16.mxu0 0
    %2980 = vmatpush1.bf16.xpose.msra.mxu0 0
    %2981 = vmatprep.subr.bf16.mxu0 0
    %2982 = vmatpush1.bf16.xpose.msra.mxu0 0
    %2983 = vmatprep.subr.bf16.mxu0 0
    %2984 = vmatpush1.bf16.xpose.msra.mxu0 0
    %2985 = vmatprep.subr.bf16.mxu0 0
    %2986 = vmatpush1.bf16.xpose.msra.mxu0 0
    %2987 = vmatprep.subr.bf16.mxu0 0
    %2988 = vmatpush1.bf16.xpose.msra.mxu0 0
    %2989 = vmatprep.subr.bf16.mxu0 0
    %2990 = vmatpush1.bf16.xpose.msra.mxu0 0
    %2991 = vmatprep.subr.bf16.mxu0 0
    %2992 = vmatpush1.bf16.xpose.msra.mxu0 0
    %2993 = vmatprep.subr.bf16.mxu0 0
    %2994 = vmatpush1.bf16.xpose.msra.mxu0 0
    %2995 = vmatprep.subr.bf16.mxu0 0
    %2996 = vmatpush1.bf16.xpose.msra.mxu0 0
    %2997 = vmatprep.subr.bf16.mxu0 0
    %2998 = vmatpush1.bf16.xpose.msra.mxu0 0
    %2999 = vmatprep.mubr.bf16.mxu0 0
    %3000 = vmatmul.mubr.bf16.gmra.mrb[0].mxu0 %v2962
    %v3001 = vpop.f32.mrb[0].mxu0
    %v3002 = vadd.f32 0.0, %v3001
    %v3003 = vpop.f32.mrb[0].mxu0
    %v3004 = vpop.f32.mrb[0].mxu0
    %v3005 = vpop.f32.mrb[0].mxu0
    %3006 = vdwg.mxu0
    %v3008 = vsel %vm688, %v2862, 0
    %v3011 = vsel %vm688, %v2898, 0
    %3013 = vmatprep.subr.bf16.mxu0 0
    %3014 = vmatpush1.bf16.xpose.msra.mxu0 %v3011
    %3015 = vmatprep.subr.bf16.mxu0 0
    %3016 = vmatpush1.bf16.xpose.msra.mxu0 0
    %3017 = vmatprep.subr.bf16.mxu0 0
    %3018 = vmatpush1.bf16.xpose.msra.mxu0 0
    %3019 = vmatprep.subr.bf16.mxu0 0
    %3020 = vmatpush1.bf16.xpose.msra.mxu0 0
    %3021 = vmatprep.subr.bf16.mxu0 0
    %3022 = vmatpush1.bf16.xpose.msra.mxu0 0
    %3023 = vmatprep.subr.bf16.mxu0 0
    %3024 = vmatpush1.bf16.xpose.msra.mxu0 0
    %3025 = vmatprep.subr.bf16.mxu0 0
    %3026 = vmatpush1.bf16.xpose.msra.mxu0 0
    %3027 = vmatprep.subr.bf16.mxu0 0
    %3028 = vmatpush1.bf16.xpose.msra.mxu0 0
    %3029 = vmatprep.subr.bf16.mxu0 0
    %3030 = vmatpush1.bf16.xpose.msra.mxu0 0
    %3031 = vmatprep.subr.bf16.mxu0 0
    %3032 = vmatpush1.bf16.xpose.msra.mxu0 0
    %3033 = vmatprep.subr.bf16.mxu0 0
    %3034 = vmatpush1.bf16.xpose.msra.mxu0 0
    %3035 = vmatprep.subr.bf16.mxu0 0
    %3036 = vmatpush1.bf16.xpose.msra.mxu0 0
    %3037 = vmatprep.subr.bf16.mxu0 0
    %3038 = vmatpush1.bf16.xpose.msra.mxu0 0
    %3039 = vmatprep.subr.bf16.mxu0 0
    %3040 = vmatpush1.bf16.xpose.msra.mxu0 0
    %3041 = vmatprep.subr.bf16.mxu0 0
    %3042 = vmatpush1.bf16.xpose.msra.mxu0 0
    %3043 = vmatprep.subr.bf16.mxu0 0
    %3044 = vmatpush1.bf16.xpose.msra.mxu0 0
    %3045 = vmatprep.mubr.bf16.mxu0 0
    %3046 = vmatmul.mubr.bf16.gmra.mrb[0].mxu0 %v3008
    %v3047 = vpop.f32.mrb[0].mxu0
    %v3048 = vadd.f32 0.0, %v3047
    %v3049 = vpop.f32.mrb[0].mxu0
    %v3050 = vpop.f32.mrb[0].mxu0
    %v3051 = vpop.f32.mrb[0].mxu0
    %3052 = vdwg.mxu0
    %v3054 = vsel %vm688, %v2863, 0
    %v3057 = vsel %vm688, %v2899, 0
    %3059 = vmatprep.subr.bf16.mxu0 0
    %3060 = vmatpush1.bf16.xpose.msra.mxu0 %v3057
    %3061 = vmatprep.subr.bf16.mxu0 0
    %3062 = vmatpush1.bf16.xpose.msra.mxu0 0
    %3063 = vmatprep.subr.bf16.mxu0 0
    %3064 = vmatpush1.bf16.xpose.msra.mxu0 0
    %3065 = vmatprep.subr.bf16.mxu0 0
    %3066 = vmatpush1.bf16.xpose.msra.mxu0 0
    %3067 = vmatprep.subr.bf16.mxu0 0
    %3068 = vmatpush1.bf16.xpose.msra.mxu0 0
    %3069 = vmatprep.subr.bf16.mxu0 0
    %3070 = vmatpush1.bf16.xpose.msra.mxu0 0
    %3071 = vmatprep.subr.bf16.mxu0 0
    %3072 = vmatpush1.bf16.xpose.msra.mxu0 0
    %3073 = vmatprep.subr.bf16.mxu0 0
    %3074 = vmatpush1.bf16.xpose.msra.mxu0 0
    %3075 = vmatprep.subr.bf16.mxu0 0
    %3076 = vmatpush1.bf16.xpose.msra.mxu0 0
    %3077 = vmatprep.subr.bf16.mxu0 0
    %3078 = vmatpush1.bf16.xpose.msra.mxu0 0
    %3079 = vmatprep.subr.bf16.mxu0 0
    %3080 = vmatpush1.bf16.xpose.msra.mxu0 0
    %3081 = vmatprep.subr.bf16.mxu0 0
    %3082 = vmatpush1.bf16.xpose.msra.mxu0 0
    %3083 = vmatprep.subr.bf16.mxu0 0
    %3084 = vmatpush1.bf16.xpose.msra.mxu0 0
    %3085 = vmatprep.subr.bf16.mxu0 0
    %3086 = vmatpush1.bf16.xpose.msra.mxu0 0
    %3087 = vmatprep.subr.bf16.mxu0 0
    %3088 = vmatpush1.bf16.xpose.msra.mxu0 0
    %3089 = vmatprep.subr.bf16.mxu0 0
    %3090 = vmatpush1.bf16.xpose.msra.mxu0 0
    %3091 = vmatprep.mubr.bf16.mxu0 0
    %3092 = vmatmul.mubr.bf16.gmra.mrb[0].mxu0 %v3054
    %v3093 = vpop.f32.mrb[0].mxu0
    %v3094 = vadd.f32 0.0, %v3093
    %v3095 = vpop.f32.mrb[0].mxu0
    %v3096 = vpop.f32.mrb[0].mxu0
    %v3097 = vpop.f32.mrb[0].mxu0
    %3098 = vdwg.mxu0
    %v3100 = vsel %vm688, %v2864, 0
    %v3103 = vsel %vm688, %v2900, 0
    %3105 = vmatprep.subr.bf16.mxu0 0
    %3106 = vmatpush1.bf16.xpose.msra.mxu0 %v3103
    %3107 = vmatprep.subr.bf16.mxu0 0
    %3108 = vmatpush1.bf16.xpose.msra.mxu0 0
    %3109 = vmatprep.subr.bf16.mxu0 0
    %3110 = vmatpush1.bf16.xpose.msra.mxu0 0
    %3111 = vmatprep.subr.bf16.mxu0 0
    %3112 = vmatpush1.bf16.xpose.msra.mxu0 0
    %3113 = vmatprep.subr.bf16.mxu0 0
    %3114 = vmatpush1.bf16.xpose.msra.mxu0 0
    %3115 = vmatprep.subr.bf16.mxu0 0
    %3116 = vmatpush1.bf16.xpose.msra.mxu0 0
    %3117 = vmatprep.subr.bf16.mxu0 0
    %3118 = vmatpush1.bf16.xpose.msra.mxu0 0
    %3119 = vmatprep.subr.bf16.mxu0 0
    %3120 = vmatpush1.bf16.xpose.msra.mxu0 0
    %3121 = vmatprep.subr.bf16.mxu0 0
    %3122 = vmatpush1.bf16.xpose.msra.mxu0 0
    %3123 = vmatprep.subr.bf16.mxu0 0
    %3124 = vmatpush1.bf16.xpose.msra.mxu0 0
    %3125 = vmatprep.subr.bf16.mxu0 0
    %3126 = vmatpush1.bf16.xpose.msra.mxu0 0
    %3127 = vmatprep.subr.bf16.mxu0 0
    %3128 = vmatpush1.bf16.xpose.msra.mxu0 0
    %3129 = vmatprep.subr.bf16.mxu0 0
    %3130 = vmatpush1.bf16.xpose.msra.mxu0 0
    %3131 = vmatprep.subr.bf16.mxu0 0
    %3132 = vmatpush1.bf16.xpose.msra.mxu0 0
    %3133 = vmatprep.subr.bf16.mxu0 0
    %3134 = vmatpush1.bf16.xpose.msra.mxu0 0
    %3135 = vmatprep.subr.bf16.mxu0 0
    %3136 = vmatpush1.bf16.xpose.msra.mxu0 0
    %3137 = vmatprep.mubr.bf16.mxu0 0
    %3138 = vmatmul.mubr.bf16.gmra.mrb[0].mxu0 %v3100
    %v3139 = vpop.f32.mrb[0].mxu0
    %v3140 = vadd.f32 0.0, %v3139
    %v3141 = vpop.f32.mrb[0].mxu0
    %v3142 = vpop.f32.mrb[0].mxu0
    %v3143 = vpop.f32.mrb[0].mxu0
    %3144 = vdwg.mxu0
    %v3146 = vsel %vm688, %v2866, 0
    %v3149 = vsel %vm688, %v2902, 0
    %3151 = vmatprep.subr.bf16.mxu0 0
    %3152 = vmatpush1.bf16.xpose.msra.mxu0 %v3149
    %3153 = vmatprep.subr.bf16.mxu0 0
    %3154 = vmatpush1.bf16.xpose.msra.mxu0 0
    %3155 = vmatprep.subr.bf16.mxu0 0
    %3156 = vmatpush1.bf16.xpose.msra.mxu0 0
    %3157 = vmatprep.subr.bf16.mxu0 0
    %3158 = vmatpush1.bf16.xpose.msra.mxu0 0
    %3159 = vmatprep.subr.bf16.mxu0 0
    %3160 = vmatpush1.bf16.xpose.msra.mxu0 0
    %3161 = vmatprep.subr.bf16.mxu0 0
    %3162 = vmatpush1.bf16.xpose.msra.mxu0 0
    %3163 = vmatprep.subr.bf16.mxu0 0
    %3164 = vmatpush1.bf16.xpose.msra.mxu0 0
    %3165 = vmatprep.subr.bf16.mxu0 0
    %3166 = vmatpush1.bf16.xpose.msra.mxu0 0
    %3167 = vmatprep.subr.bf16.mxu0 0
    %3168 = vmatpush1.bf16.xpose.msra.mxu0 0
    %3169 = vmatprep.subr.bf16.mxu0 0
    %3170 = vmatpush1.bf16.xpose.msra.mxu0 0
    %3171 = vmatprep.subr.bf16.mxu0 0
    %3172 = vmatpush1.bf16.xpose.msra.mxu0 0
    %3173 = vmatprep.subr.bf16.mxu0 0
    %3174 = vmatpush1.bf16.xpose.msra.mxu0 0
    %3175 = vmatprep.subr.bf16.mxu0 0
    %3176 = vmatpush1.bf16.xpose.msra.mxu0 0
    %3177 = vmatprep.subr.bf16.mxu0 0
    %3178 = vmatpush1.bf16.xpose.msra.mxu0 0
    %3179 = vmatprep.subr.bf16.mxu0 0
    %3180 = vmatpush1.bf16.xpose.msra.mxu0 0
    %3181 = vmatprep.subr.bf16.mxu0 0
    %3182 = vmatpush1.bf16.xpose.msra.mxu0 0
    %3183 = vmatprep.mubr.bf16.mxu0 0
    %3184 = vmatmul.mubr.bf16.gmra.mrb[0].mxu0 %v3146
    %v3185 = vpop.f32.mrb[0].mxu0
    %v3186 = vadd.f32 0.0, %v3185
    %v3187 = vpop.f32.mrb[0].mxu0
    %v3188 = vpop.f32.mrb[0].mxu0
    %v3189 = vpop.f32.mrb[0].mxu0
    %3190 = vdwg.mxu0
    %v3192 = vsel %vm688, %v2868, 0
    %v3195 = vsel %vm688, %v2904, 0
    %3197 = vmatprep.subr.bf16.mxu0 0
    %3198 = vmatpush1.bf16.xpose.msra.mxu0 %v3195
    %3199 = vmatprep.subr.bf16.mxu0 0
    %3200 = vmatpush1.bf16.xpose.msra.mxu0 0
    %3201 = vmatprep.subr.bf16.mxu0 0
    %3202 = vmatpush1.bf16.xpose.msra.mxu0 0
    %3203 = vmatprep.subr.bf16.mxu0 0
    %3204 = vmatpush1.bf16.xpose.msra.mxu0 0
    %3205 = vmatprep.subr.bf16.mxu0 0
    %3206 = vmatpush1.bf16.xpose.msra.mxu0 0
    %3207 = vmatprep.subr.bf16.mxu0 0
    %3208 = vmatpush1.bf16.xpose.msra.mxu0 0
    %3209 = vmatprep.subr.bf16.mxu0 0
    %3210 = vmatpush1.bf16.xpose.msra.mxu0 0
    %3211 = vmatprep.subr.bf16.mxu0 0
    %3212 = vmatpush1.bf16.xpose.msra.mxu0 0
    %3213 = vmatprep.subr.bf16.mxu0 0
    %3214 = vmatpush1.bf16.xpose.msra.mxu0 0
    %3215 = vmatprep.subr.bf16.mxu0 0
    %3216 = vmatpush1.bf16.xpose.msra.mxu0 0
    %3217 = vmatprep.subr.bf16.mxu0 0
    %3218 = vmatpush1.bf16.xpose.msra.mxu0 0
    %3219 = vmatprep.subr.bf16.mxu0 0
    %3220 = vmatpush1.bf16.xpose.msra.mxu0 0
    %3221 = vmatprep.subr.bf16.mxu0 0
    %3222 = vmatpush1.bf16.xpose.msra.mxu0 0
    %3223 = vmatprep.subr.bf16.mxu0 0
    %3224 = vmatpush1.bf16.xpose.msra.mxu0 0
    %3225 = vmatprep.subr.bf16.mxu0 0
    %3226 = vmatpush1.bf16.xpose.msra.mxu0 0
    %3227 = vmatprep.subr.bf16.mxu0 0
    %3228 = vmatpush1.bf16.xpose.msra.mxu0 0
    %3229 = vmatprep.mubr.bf16.mxu0 0
    %3230 = vmatmul.mubr.bf16.gmra.mrb[0].mxu0 %v3192
    %v3231 = vpop.f32.mrb[0].mxu0
    %v3232 = vadd.f32 0.0, %v3231
    %v3233 = vpop.f32.mrb[0].mxu0
    %v3234 = vpop.f32.mrb[0].mxu0
    %v3235 = vpop.f32.mrb[0].mxu0
    %3236 = vdwg.mxu0
    %v3238 = vsel %vm688, %v2870, 0
    %v3241 = vsel %vm688, %v2906, 0
    %3243 = vmatprep.subr.bf16.mxu0 0
    %3244 = vmatpush1.bf16.xpose.msra.mxu0 %v3241
    %3245 = vmatprep.subr.bf16.mxu0 0
    %3246 = vmatpush1.bf16.xpose.msra.mxu0 0
    %3247 = vmatprep.subr.bf16.mxu0 0
    %3248 = vmatpush1.bf16.xpose.msra.mxu0 0
    %3249 = vmatprep.subr.bf16.mxu0 0
    %3250 = vmatpush1.bf16.xpose.msra.mxu0 0
    %3251 = vmatprep.subr.bf16.mxu0 0
    %3252 = vmatpush1.bf16.xpose.msra.mxu0 0
    %3253 = vmatprep.subr.bf16.mxu0 0
    %3254 = vmatpush1.bf16.xpose.msra.mxu0 0
    %3255 = vmatprep.subr.bf16.mxu0 0
    %3256 = vmatpush1.bf16.xpose.msra.mxu0 0
    %3257 = vmatprep.subr.bf16.mxu0 0
    %3258 = vmatpush1.bf16.xpose.msra.mxu0 0
    %3259 = vmatprep.subr.bf16.mxu0 0
    %3260 = vmatpush1.bf16.xpose.msra.mxu0 0
    %3261 = vmatprep.subr.bf16.mxu0 0
    %3262 = vmatpush1.bf16.xpose.msra.mxu0 0
    %3263 = vmatprep.subr.bf16.mxu0 0
    %3264 = vmatpush1.bf16.xpose.msra.mxu0 0
    %3265 = vmatprep.subr.bf16.mxu0 0
    %3266 = vmatpush1.bf16.xpose.msra.mxu0 0
    %3267 = vmatprep.subr.bf16.mxu0 0
    %3268 = vmatpush1.bf16.xpose.msra.mxu0 0
    %3269 = vmatprep.subr.bf16.mxu0 0
    %3270 = vmatpush1.bf16.xpose.msra.mxu0 0
    %3271 = vmatprep.subr.bf16.mxu0 0
    %3272 = vmatpush1.bf16.xpose.msra.mxu0 0
    %3273 = vmatprep.subr.bf16.mxu0 0
    %3274 = vmatpush1.bf16.xpose.msra.mxu0 0
    %3275 = vmatprep.mubr.bf16.mxu0 0
    %3276 = vmatmul.mubr.bf16.gmra.mrb[0].mxu0 %v3238
    %v3277 = vpop.f32.mrb[0].mxu0
    %v3278 = vadd.f32 0.0, %v3277
    %v3279 = vpop.f32.mrb[0].mxu0
    %v3280 = vpop.f32.mrb[0].mxu0
    %v3281 = vpop.f32.mrb[0].mxu0
    %3282 = vdwg.mxu0
    %v3284 = vsel %vm688, %v2872, 0
    %v3287 = vsel %vm688, %v2908, 0
    %3289 = vmatprep.subr.bf16.mxu0 0
    %3290 = vmatpush1.bf16.xpose.msra.mxu0 %v3287
    %3291 = vmatprep.subr.bf16.mxu0 0
    %3292 = vmatpush1.bf16.xpose.msra.mxu0 0
    %3293 = vmatprep.subr.bf16.mxu0 0
    %3294 = vmatpush1.bf16.xpose.msra.mxu0 0
    %3295 = vmatprep.subr.bf16.mxu0 0
    %3296 = vmatpush1.bf16.xpose.msra.mxu0 0
    %3297 = vmatprep.subr.bf16.mxu0 0
    %3298 = vmatpush1.bf16.xpose.msra.mxu0 0
    %3299 = vmatprep.subr.bf16.mxu0 0
    %3300 = vmatpush1.bf16.xpose.msra.mxu0 0
    %3301 = vmatprep.subr.bf16.mxu0 0
    %3302 = vmatpush1.bf16.xpose.msra.mxu0 0
    %3303 = vmatprep.subr.bf16.mxu0 0
    %3304 = vmatpush1.bf16.xpose.msra.mxu0 0
    %3305 = vmatprep.subr.bf16.mxu0 0
    %3306 = vmatpush1.bf16.xpose.msra.mxu0 0
    %3307 = vmatprep.subr.bf16.mxu0 0
    %3308 = vmatpush1.bf16.xpose.msra.mxu0 0
    %3309 = vmatprep.subr.bf16.mxu0 0
    %3310 = vmatpush1.bf16.xpose.msra.mxu0 0
    %3311 = vmatprep.subr.bf16.mxu0 0
    %3312 = vmatpush1.bf16.xpose.msra.mxu0 0
    %3313 = vmatprep.subr.bf16.mxu0 0
    %3314 = vmatpush1.bf16.xpose.msra.mxu0 0
    %3315 = vmatprep.subr.bf16.mxu0 0
    %3316 = vmatpush1.bf16.xpose.msra.mxu0 0
    %3317 = vmatprep.subr.bf16.mxu0 0
    %3318 = vmatpush1.bf16.xpose.msra.mxu0 0
    %3319 = vmatprep.subr.bf16.mxu0 0
    %3320 = vmatpush1.bf16.xpose.msra.mxu0 0
    %3321 = vmatprep.mubr.bf16.mxu0 0
    %3322 = vmatmul.mubr.bf16.gmra.mrb[0].mxu0 %v3284
    %v3323 = vpop.f32.mrb[0].mxu0
    %v3324 = vadd.f32 0.0, %v3323
    %v3325 = vpop.f32.mrb[0].mxu0
    %v3326 = vpop.f32.mrb[0].mxu0
    %v3327 = vpop.f32.mrb[0].mxu0
    %3328 = vdwg.mxu0
    %v3330 = vsel %vm688, %v2874, 0
    %v3333 = vsel %vm688, %v2910, 0
    %3335 = vmatprep.subr.bf16.mxu0 0
    %3336 = vmatpush1.bf16.xpose.msra.mxu0 %v3333
    %3337 = vmatprep.subr.bf16.mxu0 0
    %3338 = vmatpush1.bf16.xpose.msra.mxu0 0
    %3339 = vmatprep.subr.bf16.mxu0 0
    %3340 = vmatpush1.bf16.xpose.msra.mxu0 0
    %3341 = vmatprep.subr.bf16.mxu0 0
    %3342 = vmatpush1.bf16.xpose.msra.mxu0 0
    %3343 = vmatprep.subr.bf16.mxu0 0
    %3344 = vmatpush1.bf16.xpose.msra.mxu0 0
    %3345 = vmatprep.subr.bf16.mxu0 0
    %3346 = vmatpush1.bf16.xpose.msra.mxu0 0
    %3347 = vmatprep.subr.bf16.mxu0 0
    %3348 = vmatpush1.bf16.xpose.msra.mxu0 0
    %3349 = vmatprep.subr.bf16.mxu0 0
    %3350 = vmatpush1.bf16.xpose.msra.mxu0 0
    %3351 = vmatprep.subr.bf16.mxu0 0
    %3352 = vmatpush1.bf16.xpose.msra.mxu0 0
    %3353 = vmatprep.subr.bf16.mxu0 0
    %3354 = vmatpush1.bf16.xpose.msra.mxu0 0
    %3355 = vmatprep.subr.bf16.mxu0 0
    %3356 = vmatpush1.bf16.xpose.msra.mxu0 0
    %3357 = vmatprep.subr.bf16.mxu0 0
    %3358 = vmatpush1.bf16.xpose.msra.mxu0 0
    %3359 = vmatprep.subr.bf16.mxu0 0
    %3360 = vmatpush1.bf16.xpose.msra.mxu0 0
    %3361 = vmatprep.subr.bf16.mxu0 0
    %3362 = vmatpush1.bf16.xpose.msra.mxu0 0
    %3363 = vmatprep.subr.bf16.mxu0 0
    %3364 = vmatpush1.bf16.xpose.msra.mxu0 0
    %3365 = vmatprep.subr.bf16.mxu0 0
    %3366 = vmatpush1.bf16.xpose.msra.mxu0 0
    %3367 = vmatprep.mubr.bf16.mxu0 0
    %3368 = vmatmul.mubr.bf16.gmra.mrb[0].mxu0 %v3330
    %v3369 = vpop.f32.mrb[0].mxu0
    %v3370 = vadd.f32 0.0, %v3369
    %v3371 = vpop.f32.mrb[0].mxu0
    %v3372 = vpop.f32.mrb[0].mxu0
    %v3373 = vpop.f32.mrb[0].mxu0
    %3374 = vdwg.mxu0
    %v3376 = vsel %vm688, %v2876, 0
    %v3379 = vsel %vm688, %v2912, 0
    %3381 = vmatprep.subr.bf16.mxu0 0
    %3382 = vmatpush1.bf16.xpose.msra.mxu0 %v3379
    %3383 = vmatprep.subr.bf16.mxu0 0
    %3384 = vmatpush1.bf16.xpose.msra.mxu0 0
    %3385 = vmatprep.subr.bf16.mxu0 0
    %3386 = vmatpush1.bf16.xpose.msra.mxu0 0
    %3387 = vmatprep.subr.bf16.mxu0 0
    %3388 = vmatpush1.bf16.xpose.msra.mxu0 0
    %3389 = vmatprep.subr.bf16.mxu0 0
    %3390 = vmatpush1.bf16.xpose.msra.mxu0 0
    %3391 = vmatprep.subr.bf16.mxu0 0
    %3392 = vmatpush1.bf16.xpose.msra.mxu0 0
    %3393 = vmatprep.subr.bf16.mxu0 0
    %3394 = vmatpush1.bf16.xpose.msra.mxu0 0
    %3395 = vmatprep.subr.bf16.mxu0 0
    %3396 = vmatpush1.bf16.xpose.msra.mxu0 0
    %3397 = vmatprep.subr.bf16.mxu0 0
    %3398 = vmatpush1.bf16.xpose.msra.mxu0 0
    %3399 = vmatprep.subr.bf16.mxu0 0
    %3400 = vmatpush1.bf16.xpose.msra.mxu0 0
    %3401 = vmatprep.subr.bf16.mxu0 0
    %3402 = vmatpush1.bf16.xpose.msra.mxu0 0
    %3403 = vmatprep.subr.bf16.mxu0 0
    %3404 = vmatpush1.bf16.xpose.msra.mxu0 0
    %3405 = vmatprep.subr.bf16.mxu0 0
    %3406 = vmatpush1.bf16.xpose.msra.mxu0 0
    %3407 = vmatprep.subr.bf16.mxu0 0
    %3408 = vmatpush1.bf16.xpose.msra.mxu0 0
    %3409 = vmatprep.subr.bf16.mxu0 0
    %3410 = vmatpush1.bf16.xpose.msra.mxu0 0
    %3411 = vmatprep.subr.bf16.mxu0 0
    %3412 = vmatpush1.bf16.xpose.msra.mxu0 0
    %3413 = vmatprep.mubr.bf16.mxu0 0
    %3414 = vmatmul.mubr.bf16.gmra.mrb[0].mxu0 %v3376
    %v3415 = vpop.f32.mrb[0].mxu0
    %v3416 = vadd.f32 0.0, %v3415
    %v3417 = vpop.f32.mrb[0].mxu0
    %v3418 = vpop.f32.mrb[0].mxu0
    %v3419 = vpop.f32.mrb[0].mxu0
    %3420 = vdwg.mxu0
    %v3422 = vsel %vm688, %v2878, 0
    %v3425 = vsel %vm688, %v2914, 0
    %3427 = vmatprep.subr.bf16.mxu0 0
    %3428 = vmatpush1.bf16.xpose.msra.mxu0 %v3425
    %3429 = vmatprep.subr.bf16.mxu0 0
    %3430 = vmatpush1.bf16.xpose.msra.mxu0 0
    %3431 = vmatprep.subr.bf16.mxu0 0
    %3432 = vmatpush1.bf16.xpose.msra.mxu0 0
    %3433 = vmatprep.subr.bf16.mxu0 0
    %3434 = vmatpush1.bf16.xpose.msra.mxu0 0
    %3435 = vmatprep.subr.bf16.mxu0 0
    %3436 = vmatpush1.bf16.xpose.msra.mxu0 0
    %3437 = vmatprep.subr.bf16.mxu0 0
    %3438 = vmatpush1.bf16.xpose.msra.mxu0 0
    %3439 = vmatprep.subr.bf16.mxu0 0
    %3440 = vmatpush1.bf16.xpose.msra.mxu0 0
    %3441 = vmatprep.subr.bf16.mxu0 0
    %3442 = vmatpush1.bf16.xpose.msra.mxu0 0
    %3443 = vmatprep.subr.bf16.mxu0 0
    %3444 = vmatpush1.bf16.xpose.msra.mxu0 0
    %3445 = vmatprep.subr.bf16.mxu0 0
    %3446 = vmatpush1.bf16.xpose.msra.mxu0 0
    %3447 = vmatprep.subr.bf16.mxu0 0
    %3448 = vmatpush1.bf16.xpose.msra.mxu0 0
    %3449 = vmatprep.subr.bf16.mxu0 0
    %3450 = vmatpush1.bf16.xpose.msra.mxu0 0
    %3451 = vmatprep.subr.bf16.mxu0 0
    %3452 = vmatpush1.bf16.xpose.msra.mxu0 0
    %3453 = vmatprep.subr.bf16.mxu0 0
    %3454 = vmatpush1.bf16.xpose.msra.mxu0 0
    %3455 = vmatprep.subr.bf16.mxu0 0
    %3456 = vmatpush1.bf16.xpose.msra.mxu0 0
    %3457 = vmatprep.subr.bf16.mxu0 0
    %3458 = vmatpush1.bf16.xpose.msra.mxu0 0
    %3459 = vmatprep.mubr.bf16.mxu0 0
    %3460 = vmatmul.mubr.bf16.gmra.mrb[0].mxu0 %v3422
    %v3461 = vpop.f32.mrb[0].mxu0
    %v3462 = vadd.f32 0.0, %v3461
    %v3463 = vpop.f32.mrb[0].mxu0
    %v3464 = vpop.f32.mrb[0].mxu0
    %v3465 = vpop.f32.mrb[0].mxu0
    %3466 = vdwg.mxu0
    %v3468 = vsel %vm688, %v2880, 0
    %v3471 = vsel %vm688, %v2916, 0
    %3473 = vmatprep.subr.bf16.mxu0 0
    %3474 = vmatpush1.bf16.xpose.msra.mxu0 %v3471
    %3475 = vmatprep.subr.bf16.mxu0 0
    %3476 = vmatpush1.bf16.xpose.msra.mxu0 0
    %3477 = vmatprep.subr.bf16.mxu0 0
    %3478 = vmatpush1.bf16.xpose.msra.mxu0 0
    %3479 = vmatprep.subr.bf16.mxu0 0
    %3480 = vmatpush1.bf16.xpose.msra.mxu0 0
    %3481 = vmatprep.subr.bf16.mxu0 0
    %3482 = vmatpush1.bf16.xpose.msra.mxu0 0
    %3483 = vmatprep.subr.bf16.mxu0 0
    %3484 = vmatpush1.bf16.xpose.msra.mxu0 0
    %3485 = vmatprep.subr.bf16.mxu0 0
    %3486 = vmatpush1.bf16.xpose.msra.mxu0 0
    %3487 = vmatprep.subr.bf16.mxu0 0
    %3488 = vmatpush1.bf16.xpose.msra.mxu0 0
    %3489 = vmatprep.subr.bf16.mxu0 0
    %3490 = vmatpush1.bf16.xpose.msra.mxu0 0
    %3491 = vmatprep.subr.bf16.mxu0 0
    %3492 = vmatpush1.bf16.xpose.msra.mxu0 0
    %3493 = vmatprep.subr.bf16.mxu0 0
    %3494 = vmatpush1.bf16.xpose.msra.mxu0 0
    %3495 = vmatprep.subr.bf16.mxu0 0
    %3496 = vmatpush1.bf16.xpose.msra.mxu0 0
    %3497 = vmatprep.subr.bf16.mxu0 0
    %3498 = vmatpush1.bf16.xpose.msra.mxu0 0
    %3499 = vmatprep.subr.bf16.mxu0 0
    %3500 = vmatpush1.bf16.xpose.msra.mxu0 0
    %3501 = vmatprep.subr.bf16.mxu0 0
    %3502 = vmatpush1.bf16.xpose.msra.mxu0 0
    %3503 = vmatprep.subr.bf16.mxu0 0
    %3504 = vmatpush1.bf16.xpose.msra.mxu0 0
    %3505 = vmatprep.mubr.bf16.mxu0 0
    %3506 = vmatmul.mubr.bf16.gmra.mrb[0].mxu0 %v3468
    %v3507 = vpop.f32.mrb[0].mxu0
    %v3508 = vadd.f32 0.0, %v3507
    %v3509 = vpop.f32.mrb[0].mxu0
    %v3510 = vpop.f32.mrb[0].mxu0
    %v3511 = vpop.f32.mrb[0].mxu0
    %3512 = vdwg.mxu0
    %v3514 = vsel %vm688, %v2882, 0
    %v3517 = vsel %vm688, %v2918, 0
    %3519 = vmatprep.subr.bf16.mxu0 0
    %3520 = vmatpush1.bf16.xpose.msra.mxu0 %v3517
    %3521 = vmatprep.subr.bf16.mxu0 0
    %3522 = vmatpush1.bf16.xpose.msra.mxu0 0
    %3523 = vmatprep.subr.bf16.mxu0 0
    %3524 = vmatpush1.bf16.xpose.msra.mxu0 0
    %3525 = vmatprep.subr.bf16.mxu0 0
    %3526 = vmatpush1.bf16.xpose.msra.mxu0 0
    %3527 = vmatprep.subr.bf16.mxu0 0
    %3528 = vmatpush1.bf16.xpose.msra.mxu0 0
    %3529 = vmatprep.subr.bf16.mxu0 0
    %3530 = vmatpush1.bf16.xpose.msra.mxu0 0
    %3531 = vmatprep.subr.bf16.mxu0 0
    %3532 = vmatpush1.bf16.xpose.msra.mxu0 0
    %3533 = vmatprep.subr.bf16.mxu0 0
    %3534 = vmatpush1.bf16.xpose.msra.mxu0 0
    %3535 = vmatprep.subr.bf16.mxu0 0
    %3536 = vmatpush1.bf16.xpose.msra.mxu0 0
    %3537 = vmatprep.subr.bf16.mxu0 0
    %3538 = vmatpush1.bf16.xpose.msra.mxu0 0
    %3539 = vmatprep.subr.bf16.mxu0 0
    %3540 = vmatpush1.bf16.xpose.msra.mxu0 0
    %3541 = vmatprep.subr.bf16.mxu0 0
    %3542 = vmatpush1.bf16.xpose.msra.mxu0 0
    %3543 = vmatprep.subr.bf16.mxu0 0
    %3544 = vmatpush1.bf16.xpose.msra.mxu0 0
    %3545 = vmatprep.subr.bf16.mxu0 0
    %3546 = vmatpush1.bf16.xpose.msra.mxu0 0
    %3547 = vmatprep.subr.bf16.mxu0 0
    %3548 = vmatpush1.bf16.xpose.msra.mxu0 0
    %3549 = vmatprep.subr.bf16.mxu0 0
    %3550 = vmatpush1.bf16.xpose.msra.mxu0 0
    %3551 = vmatprep.mubr.bf16.mxu0 0
    %3552 = vmatmul.mubr.bf16.gmra.mrb[0].mxu0 %v3514
    %v3553 = vpop.f32.mrb[0].mxu0
    %v3554 = vadd.f32 0.0, %v3553
    %v3555 = vpop.f32.mrb[0].mxu0
    %v3556 = vpop.f32.mrb[0].mxu0
    %v3557 = vpop.f32.mrb[0].mxu0
    %3558 = vdwg.mxu0
    %v3560 = vsel %vm688, %v2884, 0
    %v3563 = vsel %vm688, %v2920, 0
    %3565 = vmatprep.subr.bf16.mxu0 0
    %3566 = vmatpush1.bf16.xpose.msra.mxu0 %v3563
    %3567 = vmatprep.subr.bf16.mxu0 0
    %3568 = vmatpush1.bf16.xpose.msra.mxu0 0
    %3569 = vmatprep.subr.bf16.mxu0 0
    %3570 = vmatpush1.bf16.xpose.msra.mxu0 0
    %3571 = vmatprep.subr.bf16.mxu0 0
    %3572 = vmatpush1.bf16.xpose.msra.mxu0 0
    %3573 = vmatprep.subr.bf16.mxu0 0
    %3574 = vmatpush1.bf16.xpose.msra.mxu0 0
    %3575 = vmatprep.subr.bf16.mxu0 0
    %3576 = vmatpush1.bf16.xpose.msra.mxu0 0
    %3577 = vmatprep.subr.bf16.mxu0 0
    %3578 = vmatpush1.bf16.xpose.msra.mxu0 0
    %3579 = vmatprep.subr.bf16.mxu0 0
    %3580 = vmatpush1.bf16.xpose.msra.mxu0 0
    %3581 = vmatprep.subr.bf16.mxu0 0
    %3582 = vmatpush1.bf16.xpose.msra.mxu0 0
    %3583 = vmatprep.subr.bf16.mxu0 0
    %3584 = vmatpush1.bf16.xpose.msra.mxu0 0
    %3585 = vmatprep.subr.bf16.mxu0 0
    %3586 = vmatpush1.bf16.xpose.msra.mxu0 0
    %3587 = vmatprep.subr.bf16.mxu0 0
    %3588 = vmatpush1.bf16.xpose.msra.mxu0 0
    %3589 = vmatprep.subr.bf16.mxu0 0
    %3590 = vmatpush1.bf16.xpose.msra.mxu0 0
    %3591 = vmatprep.subr.bf16.mxu0 0
    %3592 = vmatpush1.bf16.xpose.msra.mxu0 0
    %3593 = vmatprep.subr.bf16.mxu0 0
    %3594 = vmatpush1.bf16.xpose.msra.mxu0 0
    %3595 = vmatprep.subr.bf16.mxu0 0
    %3596 = vmatpush1.bf16.xpose.msra.mxu0 0
    %3597 = vmatprep.mubr.bf16.mxu0 0
    %3598 = vmatmul.mubr.bf16.gmra.mrb[0].mxu0 %v3560
    %v3599 = vpop.f32.mrb[0].mxu0
    %v3600 = vadd.f32 0.0, %v3599
    %v3601 = vpop.f32.mrb[0].mxu0
    %v3602 = vpop.f32.mrb[0].mxu0
    %v3603 = vpop.f32.mrb[0].mxu0
    %3604 = vdwg.mxu0
    %v3606 = vsel %vm688, %v2886, 0
    %v3609 = vsel %vm688, %v2922, 0
    %3611 = vmatprep.subr.bf16.mxu0 0
    %3612 = vmatpush1.bf16.xpose.msra.mxu0 %v3609
    %3613 = vmatprep.subr.bf16.mxu0 0
    %3614 = vmatpush1.bf16.xpose.msra.mxu0 0
    %3615 = vmatprep.subr.bf16.mxu0 0
    %3616 = vmatpush1.bf16.xpose.msra.mxu0 0
    %3617 = vmatprep.subr.bf16.mxu0 0
    %3618 = vmatpush1.bf16.xpose.msra.mxu0 0
    %3619 = vmatprep.subr.bf16.mxu0 0
    %3620 = vmatpush1.bf16.xpose.msra.mxu0 0
    %3621 = vmatprep.subr.bf16.mxu0 0
    %3622 = vmatpush1.bf16.xpose.msra.mxu0 0
    %3623 = vmatprep.subr.bf16.mxu0 0
    %3624 = vmatpush1.bf16.xpose.msra.mxu0 0
    %3625 = vmatprep.subr.bf16.mxu0 0
    %3626 = vmatpush1.bf16.xpose.msra.mxu0 0
    %3627 = vmatprep.subr.bf16.mxu0 0
    %3628 = vmatpush1.bf16.xpose.msra.mxu0 0
    %3629 = vmatprep.subr.bf16.mxu0 0
    %3630 = vmatpush1.bf16.xpose.msra.mxu0 0
    %3631 = vmatprep.subr.bf16.mxu0 0
    %3632 = vmatpush1.bf16.xpose.msra.mxu0 0
    %3633 = vmatprep.subr.bf16.mxu0 0
    %3634 = vmatpush1.bf16.xpose.msra.mxu0 0
    %3635 = vmatprep.subr.bf16.mxu0 0
    %3636 = vmatpush1.bf16.xpose.msra.mxu0 0
    %3637 = vmatprep.subr.bf16.mxu0 0
    %3638 = vmatpush1.bf16.xpose.msra.mxu0 0
    %3639 = vmatprep.subr.bf16.mxu0 0
    %3640 = vmatpush1.bf16.xpose.msra.mxu0 0
    %3641 = vmatprep.subr.bf16.mxu0 0
    %3642 = vmatpush1.bf16.xpose.msra.mxu0 0
    %3643 = vmatprep.mubr.bf16.mxu0 0
    %3644 = vmatmul.mubr.bf16.gmra.mrb[0].mxu0 %v3606
    %v3645 = vpop.f32.mrb[0].mxu0
    %v3646 = vadd.f32 0.0, %v3645
    %v3647 = vpop.f32.mrb[0].mxu0
    %v3648 = vpop.f32.mrb[0].mxu0
    %v3649 = vpop.f32.mrb[0].mxu0
    %3650 = vdwg.mxu0
    %v3652 = vsel %vm688, %v2888, 0
    %v3655 = vsel %vm688, %v2924, 0
    %3657 = vmatprep.subr.bf16.mxu0 0
    %3658 = vmatpush1.bf16.xpose.msra.mxu0 %v3655
    %3659 = vmatprep.subr.bf16.mxu0 0
    %3660 = vmatpush1.bf16.xpose.msra.mxu0 0
    %3661 = vmatprep.subr.bf16.mxu0 0
    %3662 = vmatpush1.bf16.xpose.msra.mxu0 0
    %3663 = vmatprep.subr.bf16.mxu0 0
    %3664 = vmatpush1.bf16.xpose.msra.mxu0 0
    %3665 = vmatprep.subr.bf16.mxu0 0
    %3666 = vmatpush1.bf16.xpose.msra.mxu0 0
    %3667 = vmatprep.subr.bf16.mxu0 0
    %3668 = vmatpush1.bf16.xpose.msra.mxu0 0
    %3669 = vmatprep.subr.bf16.mxu0 0
    %3670 = vmatpush1.bf16.xpose.msra.mxu0 0
    %3671 = vmatprep.subr.bf16.mxu0 0
    %3672 = vmatpush1.bf16.xpose.msra.mxu0 0
    %3673 = vmatprep.subr.bf16.mxu0 0
    %3674 = vmatpush1.bf16.xpose.msra.mxu0 0
    %3675 = vmatprep.subr.bf16.mxu0 0
    %3676 = vmatpush1.bf16.xpose.msra.mxu0 0
    %3677 = vmatprep.subr.bf16.mxu0 0
    %3678 = vmatpush1.bf16.xpose.msra.mxu0 0
    %3679 = vmatprep.subr.bf16.mxu0 0
    %3680 = vmatpush1.bf16.xpose.msra.mxu0 0
    %3681 = vmatprep.subr.bf16.mxu0 0
    %3682 = vmatpush1.bf16.xpose.msra.mxu0 0
    %3683 = vmatprep.subr.bf16.mxu0 0
    %3684 = vmatpush1.bf16.xpose.msra.mxu0 0
    %3685 = vmatprep.subr.bf16.mxu0 0
    %3686 = vmatpush1.bf16.xpose.msra.mxu0 0
    %3687 = vmatprep.subr.bf16.mxu0 0
    %3688 = vmatpush1.bf16.xpose.msra.mxu0 0
    %3689 = vmatprep.mubr.bf16.mxu0 0
    %3690 = vmatmul.mubr.bf16.gmra.mrb[0].mxu0 %v3652
    %v3691 = vpop.f32.mrb[0].mxu0
    %v3692 = vadd.f32 0.0, %v3691
    %v3693 = vpop.f32.mrb[0].mxu0
    %v3694 = vpop.f32.mrb[0].mxu0
    %v3695 = vpop.f32.mrb[0].mxu0
    %3696 = vdwg.mxu0
    %v3701 = vlaneseq
    %v3702 = vshrl.u32 %v3701, 7
    %v3703 = vsub.s32 0, %v3702
    %v3704 = vrot.slane %v334, %v3703
    %v3705 = vlaneseq
    %v3706 = vshrl.u32 %v3705, 7
    %v3707 = vsub.s32 0, %v3706
    %v3708 = vrot.slane %v335, %v3707
    %v3709 = vlaneseq
    %v3710 = vshrl.u32 %v3709, 7
    %v3711 = vsub.s32 0, %v3710
    %v3712 = vrot.slane %v336, %v3711
    %v3713 = vlaneseq
    %v3714 = vshrl.u32 %v3713, 7
    %v3715 = vsub.s32 0, %v3714
    %v3716 = vrot.slane %v337, %v3715
    %v3721 = vadd.f32 %v3002, %v3704
    %v3722 = vadd.f32 %v3048, %v3708
    %v3723 = vadd.f32 %v3094, %v3712
    %v3724 = vadd.f32 %v3140, %v3716
    %v3725 = vadd.f32 %v3186, %v3704
    %v3726 = vadd.f32 %v3232, %v3708
    %v3727 = vadd.f32 %v3278, %v3712
    %v3728 = vadd.f32 %v3324, %v3716
    %v3729 = vadd.f32 %v3370, %v3704
    %v3730 = vadd.f32 %v3416, %v3708
    %v3731 = vadd.f32 %v3462, %v3712
    %v3732 = vadd.f32 %v3508, %v3716
    %v3733 = vadd.f32 %v3554, %v3704
    %v3734 = vadd.f32 %v3600, %v3708
    %v3735 = vadd.f32 %v3646, %v3712
    %v3736 = vadd.f32 %v3692, %v3716
    %v3737 = vsel %vm688, %v3721, -inf
    %3738 = vmax.xlane.f32.xlu0 %v3737
    %v3739 = vpop.xlane.xlu0 %3738
    %v3740 = vsel %vm688, %v3722, -inf
    %3741 = vmax.xlane.f32.xlu0 %v3740
    %v3742 = vpop.xlane.xlu0 %3741
    %v3743 = vsel %vm688, %v3723, -inf
    %3744 = vmax.xlane.f32.xlu0 %v3743
    %v3745 = vpop.xlane.xlu0 %3744
    %v3746 = vsel %vm688, %v3724, -inf
    %3747 = vmax.xlane.f32.xlu0 %v3746
    %v3748 = vpop.xlane.xlu0 %3747
    %v3749 = vsel %vm688, %v3725, -inf
    %3750 = vmax.xlane.f32.xlu0 %v3749
    %v3751 = vpop.xlane.xlu0 %3750
    %v3752 = vsel %vm688, %v3726, -inf
    %3753 = vmax.xlane.f32.xlu0 %v3752
    %v3754 = vpop.xlane.xlu0 %3753
    %v3755 = vsel %vm688, %v3727, -inf
    %3756 = vmax.xlane.f32.xlu0 %v3755
    %v3757 = vpop.xlane.xlu0 %3756
    %v3758 = vsel %vm688, %v3728, -inf
    %3759 = vmax.xlane.f32.xlu0 %v3758
    %v3760 = vpop.xlane.xlu0 %3759
    %v3761 = vsel %vm688, %v3729, -inf
    %3762 = vmax.xlane.f32.xlu0 %v3761
    %v3763 = vpop.xlane.xlu0 %3762
    %v3764 = vsel %vm688, %v3730, -inf
    %3765 = vmax.xlane.f32.xlu0 %v3764
    %v3766 = vpop.xlane.xlu0 %3765
    %v3767 = vsel %vm688, %v3731, -inf
    %3768 = vmax.xlane.f32.xlu0 %v3767
    %v3769 = vpop.xlane.xlu0 %3768
    %v3770 = vsel %vm688, %v3732, -inf
    %3771 = vmax.xlane.f32.xlu0 %v3770
    %v3772 = vpop.xlane.xlu0 %3771
    %v3773 = vsel %vm688, %v3733, -inf
    %3774 = vmax.xlane.f32.xlu0 %v3773
    %v3775 = vpop.xlane.xlu0 %3774
    %v3776 = vsel %vm688, %v3734, -inf
    %3777 = vmax.xlane.f32.xlu0 %v3776
    %v3778 = vpop.xlane.xlu0 %3777
    %v3779 = vsel %vm688, %v3735, -inf
    %3780 = vmax.xlane.f32.xlu0 %v3779
    %v3781 = vpop.xlane.xlu0 %3780
    %v3782 = vsel %vm688, %v3736, -inf
    %3783 = vmax.xlane.f32.xlu0 %v3782
    %v3784 = vpop.xlane.xlu0 %3783
    %v3785 = vsub.f32 %v3721, %v3739
    %v3786 = vsub.f32 %v3722, %v3742
    %v3787 = vsub.f32 %v3723, %v3745
    %v3788 = vsub.f32 %v3724, %v3748
    %v3789 = vsub.f32 %v3725, %v3751
    %v3790 = vsub.f32 %v3726, %v3754
    %v3791 = vsub.f32 %v3727, %v3757
    %v3792 = vsub.f32 %v3728, %v3760
    %v3793 = vsub.f32 %v3729, %v3763
    %v3794 = vsub.f32 %v3730, %v3766
    %v3795 = vsub.f32 %v3731, %v3769
    %v3796 = vsub.f32 %v3732, %v3772
    %v3797 = vsub.f32 %v3733, %v3775
    %v3798 = vsub.f32 %v3734, %v3778
    %v3799 = vsub.f32 %v3735, %v3781
    %v3800 = vsub.f32 %v3736, %v3784
    %v3801 = vmul.f32 %v3785, 1.442695
    %v3802 = vpow.pop %v3801
    %v3803 = vmul.f32 %v3786, 1.442695
    %v3804 = vpow.pop %v3803
    %v3805 = vmul.f32 %v3787, 1.442695
    %v3806 = vpow.pop %v3805
    %v3807 = vmul.f32 %v3788, 1.442695
    %v3808 = vpow.pop %v3807
    %v3809 = vmul.f32 %v3789, 1.442695
    %v3810 = vpow.pop %v3809
    %v3811 = vmul.f32 %v3790, 1.442695
    %v3812 = vpow.pop %v3811
    %v3813 = vmul.f32 %v3791, 1.442695
    %v3814 = vpow.pop %v3813
    %v3815 = vmul.f32 %v3792, 1.442695
    %v3816 = vpow.pop %v3815
    %v3817 = vmul.f32 %v3793, 1.442695
    %v3818 = vpow.pop %v3817
    %v3819 = vmul.f32 %v3794, 1.442695
    %v3820 = vpow.pop %v3819
    %v3821 = vmul.f32 %v3795, 1.442695
    %v3822 = vpow.pop %v3821
    %v3823 = vmul.f32 %v3796, 1.442695
    %v3824 = vpow.pop %v3823
    %v3825 = vmul.f32 %v3797, 1.442695
    %v3826 = vpow.pop %v3825
    %v3827 = vmul.f32 %v3798, 1.442695
    %v3828 = vpow.pop %v3827
    %v3829 = vmul.f32 %v3799, 1.442695
    %v3830 = vpow.pop %v3829
    %v3831 = vmul.f32 %v3800, 1.442695
    %v3832 = vpow.pop %v3831
    %v3833 = vsel %vm688, %v3802, 0.0
    %3834 = vadd.xlane.f32.xlu0 %v3833
    %v3835 = vpop.xlane.xlu0 %3834
    %v3836 = vsel %vm688, %v3804, 0.0
    %3837 = vadd.xlane.f32.xlu0 %v3836
    %v3838 = vpop.xlane.xlu0 %3837
    %v3839 = vsel %vm688, %v3806, 0.0
    %3840 = vadd.xlane.f32.xlu0 %v3839
    %v3841 = vpop.xlane.xlu0 %3840
    %v3842 = vsel %vm688, %v3808, 0.0
    %3843 = vadd.xlane.f32.xlu0 %v3842
    %v3844 = vpop.xlane.xlu0 %3843
    %v3845 = vsel %vm688, %v3810, 0.0
    %3846 = vadd.xlane.f32.xlu0 %v3845
    %v3847 = vpop.xlane.xlu0 %3846
    %v3848 = vsel %vm688, %v3812, 0.0
    %3849 = vadd.xlane.f32.xlu0 %v3848
    %v3850 = vpop.xlane.xlu0 %3849
    %v3851 = vsel %vm688, %v3814, 0.0
    %3852 = vadd.xlane.f32.xlu0 %v3851
    %v3853 = vpop.xlane.xlu0 %3852
    %v3854 = vsel %vm688, %v3816, 0.0
    %3855 = vadd.xlane.f32.xlu0 %v3854
    %v3856 = vpop.xlane.xlu0 %3855
    %v3857 = vsel %vm688, %v3818, 0.0
    %3858 = vadd.xlane.f32.xlu0 %v3857
    %v3859 = vpop.xlane.xlu0 %3858
    %v3860 = vsel %vm688, %v3820, 0.0
    %3861 = vadd.xlane.f32.xlu0 %v3860
    %v3862 = vpop.xlane.xlu0 %3861
    %v3863 = vsel %vm688, %v3822, 0.0
    %3864 = vadd.xlane.f32.xlu0 %v3863
    %v3865 = vpop.xlane.xlu0 %3864
    %v3866 = vsel %vm688, %v3824, 0.0
    %3867 = vadd.xlane.f32.xlu0 %v3866
    %v3868 = vpop.xlane.xlu0 %3867
    %v3869 = vsel %vm688, %v3826, 0.0
    %3870 = vadd.xlane.f32.xlu0 %v3869
    %v3871 = vpop.xlane.xlu0 %3870
    %v3872 = vsel %vm688, %v3828, 0.0
    %3873 = vadd.xlane.f32.xlu0 %v3872
    %v3874 = vpop.xlane.xlu0 %3873
    %v3875 = vsel %vm688, %v3830, 0.0
    %3876 = vadd.xlane.f32.xlu0 %v3875
    %v3877 = vpop.xlane.xlu0 %3876
    %v3878 = vsel %vm688, %v3832, 0.0
    %3879 = vadd.xlane.f32.xlu0 %v3878
    %v3880 = vpop.xlane.xlu0 %3879
    %v3881 = vrcp.pop %v3835
    %v3882 = vrcp.pop %v3838
    %v3883 = vrcp.pop %v3841
    %v3884 = vrcp.pop %v3844
    %v3885 = vrcp.pop %v3847
    %v3886 = vrcp.pop %v3850
    %v3887 = vrcp.pop %v3853
    %v3888 = vrcp.pop %v3856
    %v3889 = vrcp.pop %v3859
    %v3890 = vrcp.pop %v3862
    %v3891 = vrcp.pop %v3865
    %v3892 = vrcp.pop %v3868
    %v3893 = vrcp.pop %v3871
    %v3894 = vrcp.pop %v3874
    %v3895 = vrcp.pop %v3877
    %v3896 = vrcp.pop %v3880
    %v3897 = vmul.f32 %v3802, %v3881
    %v3898 = vmul.f32 %v3804, %v3882
    %v3899 = vmul.f32 %v3806, %v3883
    %v3900 = vmul.f32 %v3808, %v3884
    %v3901 = vmul.f32 %v3810, %v3885
    %v3902 = vmul.f32 %v3812, %v3886
    %v3903 = vmul.f32 %v3814, %v3887
    %v3904 = vmul.f32 %v3816, %v3888
    %v3905 = vmul.f32 %v3818, %v3889
    %v3906 = vmul.f32 %v3820, %v3890
    %v3907 = vmul.f32 %v3822, %v3891
    %v3908 = vmul.f32 %v3824, %v3892
    %v3909 = vmul.f32 %v3826, %v3893
    %v3910 = vmul.f32 %v3828, %v3894
    %v3911 = vmul.f32 %v3830, %v3895
    %v3912 = vmul.f32 %v3832, %v3896
    %v3913 = vpack.c.bf16 %v3897, %v3897
    %v3914 = vpack.c.bf16 %v3898, %v3898
    %v3915 = vpack.c.bf16 %v3899, %v3899
    %v3916 = vpack.c.bf16 %v3900, %v3900
    %v3917 = vpack.c.bf16 %v3901, %v3901
    %v3918 = vpack.c.bf16 %v3902, %v3902
    %v3919 = vpack.c.bf16 %v3903, %v3903
    %v3920 = vpack.c.bf16 %v3904, %v3904
    %v3921 = vpack.c.bf16 %v3905, %v3905
    %v3922 = vpack.c.bf16 %v3906, %v3906
    %v3923 = vpack.c.bf16 %v3907, %v3907
    %v3924 = vpack.c.bf16 %v3908, %v3908
    %v3925 = vpack.c.bf16 %v3909, %v3909
    %v3926 = vpack.c.bf16 %v3910, %v3910
    %v3927 = vpack.c.bf16 %v3911, %v3911
    %v3928 = vpack.c.bf16 %v3912, %v3912
    %v3930 = vsel %vm688, %v3913, 0
    %v3933 = vsel %vm1636, %v2933, 0
    %3935 = vmatprep.subr.bf16.mxu0 0
    %3936 = vmatpush1.bf16.msra.mxu0 %v3933
    %3937 = vmatprep.subr.bf16.mxu0 0
    %3938 = vmatpush1.bf16.msra.mxu0 0
    %3939 = vmatprep.subr.bf16.mxu0 0
    %3940 = vmatpush1.bf16.msra.mxu0 0
    %3941 = vmatprep.subr.bf16.mxu0 0
    %3942 = vmatpush1.bf16.msra.mxu0 0
    %3943 = vmatprep.subr.bf16.mxu0 0
    %3944 = vmatpush1.bf16.msra.mxu0 0
    %3945 = vmatprep.subr.bf16.mxu0 0
    %3946 = vmatpush1.bf16.msra.mxu0 0
    %3947 = vmatprep.subr.bf16.mxu0 0
    %3948 = vmatpush1.bf16.msra.mxu0 0
    %3949 = vmatprep.subr.bf16.mxu0 0
    %3950 = vmatpush1.bf16.msra.mxu0 0
    %3951 = vmatprep.subr.bf16.mxu0 0
    %3952 = vmatpush1.bf16.msra.mxu0 0
    %3953 = vmatprep.subr.bf16.mxu0 0
    %3954 = vmatpush1.bf16.msra.mxu0 0
    %3955 = vmatprep.subr.bf16.mxu0 0
    %3956 = vmatpush1.bf16.msra.mxu0 0
    %3957 = vmatprep.subr.bf16.mxu0 0
    %3958 = vmatpush1.bf16.msra.mxu0 0
    %3959 = vmatprep.subr.bf16.mxu0 0
    %3960 = vmatpush1.bf16.msra.mxu0 0
    %3961 = vmatprep.subr.bf16.mxu0 0
    %3962 = vmatpush1.bf16.msra.mxu0 0
    %3963 = vmatprep.subr.bf16.mxu0 0
    %3964 = vmatpush1.bf16.msra.mxu0 0
    %3965 = vmatprep.subr.bf16.mxu0 0
    %3966 = vmatpush1.bf16.msra.mxu0 0
    %3967 = vmatprep.mubr.bf16.mxu0 0
    %3968 = vmatmul.mubr.bf16.gmra.mrb[0].mxu0 %v3930
    %v3969 = vpop.f32.mrb[0].mxu0
    %v3970 = vadd.f32 0.0, %v3969
    %v3971 = vpop.f32.mrb[0].mxu0
    %v3972 = vpop.f32.mrb[0].mxu0
    %v3973 = vpop.f32.mrb[0].mxu0
    %3974 = vdwg.mxu0
    %v3976 = vsel %vm688, %v3914, 0
    %v3979 = vsel %vm1636, %v2934, 0
    %3981 = vmatprep.subr.bf16.mxu0 0
    %3982 = vmatpush1.bf16.msra.mxu0 %v3979
    %3983 = vmatprep.subr.bf16.mxu0 0
    %3984 = vmatpush1.bf16.msra.mxu0 0
    %3985 = vmatprep.subr.bf16.mxu0 0
    %3986 = vmatpush1.bf16.msra.mxu0 0
    %3987 = vmatprep.subr.bf16.mxu0 0
    %3988 = vmatpush1.bf16.msra.mxu0 0
    %3989 = vmatprep.subr.bf16.mxu0 0
    %3990 = vmatpush1.bf16.msra.mxu0 0
    %3991 = vmatprep.subr.bf16.mxu0 0
    %3992 = vmatpush1.bf16.msra.mxu0 0
    %3993 = vmatprep.subr.bf16.mxu0 0
    %3994 = vmatpush1.bf16.msra.mxu0 0
    %3995 = vmatprep.subr.bf16.mxu0 0
    %3996 = vmatpush1.bf16.msra.mxu0 0
    %3997 = vmatprep.subr.bf16.mxu0 0
    %3998 = vmatpush1.bf16.msra.mxu0 0
    %3999 = vmatprep.subr.bf16.mxu0 0
    %4000 = vmatpush1.bf16.msra.mxu0 0
    %4001 = vmatprep.subr.bf16.mxu0 0
    %4002 = vmatpush1.bf16.msra.mxu0 0
    %4003 = vmatprep.subr.bf16.mxu0 0
    %4004 = vmatpush1.bf16.msra.mxu0 0
    %4005 = vmatprep.subr.bf16.mxu0 0
    %4006 = vmatpush1.bf16.msra.mxu0 0
    %4007 = vmatprep.subr.bf16.mxu0 0
    %4008 = vmatpush1.bf16.msra.mxu0 0
    %4009 = vmatprep.subr.bf16.mxu0 0
    %4010 = vmatpush1.bf16.msra.mxu0 0
    %4011 = vmatprep.subr.bf16.mxu0 0
    %4012 = vmatpush1.bf16.msra.mxu0 0
    %4013 = vmatprep.mubr.bf16.mxu0 0
    %4014 = vmatmul.mubr.bf16.gmra.mrb[0].mxu0 %v3976
    %v4015 = vpop.f32.mrb[0].mxu0
    %v4016 = vadd.f32 0.0, %v4015
    %v4017 = vpop.f32.mrb[0].mxu0
    %v4018 = vpop.f32.mrb[0].mxu0
    %v4019 = vpop.f32.mrb[0].mxu0
    %4020 = vdwg.mxu0
    %v4022 = vsel %vm688, %v3915, 0
    %v4025 = vsel %vm1636, %v2935, 0
    %4027 = vmatprep.subr.bf16.mxu0 0
    %4028 = vmatpush1.bf16.msra.mxu0 %v4025
    %4029 = vmatprep.subr.bf16.mxu0 0
    %4030 = vmatpush1.bf16.msra.mxu0 0
    %4031 = vmatprep.subr.bf16.mxu0 0
    %4032 = vmatpush1.bf16.msra.mxu0 0
    %4033 = vmatprep.subr.bf16.mxu0 0
    %4034 = vmatpush1.bf16.msra.mxu0 0
    %4035 = vmatprep.subr.bf16.mxu0 0
    %4036 = vmatpush1.bf16.msra.mxu0 0
    %4037 = vmatprep.subr.bf16.mxu0 0
    %4038 = vmatpush1.bf16.msra.mxu0 0
    %4039 = vmatprep.subr.bf16.mxu0 0
    %4040 = vmatpush1.bf16.msra.mxu0 0
    %4041 = vmatprep.subr.bf16.mxu0 0
    %4042 = vmatpush1.bf16.msra.mxu0 0
    %4043 = vmatprep.subr.bf16.mxu0 0
    %4044 = vmatpush1.bf16.msra.mxu0 0
    %4045 = vmatprep.subr.bf16.mxu0 0
    %4046 = vmatpush1.bf16.msra.mxu0 0
    %4047 = vmatprep.subr.bf16.mxu0 0
    %4048 = vmatpush1.bf16.msra.mxu0 0
    %4049 = vmatprep.subr.bf16.mxu0 0
    %4050 = vmatpush1.bf16.msra.mxu0 0
    %4051 = vmatprep.subr.bf16.mxu0 0
    %4052 = vmatpush1.bf16.msra.mxu0 0
    %4053 = vmatprep.subr.bf16.mxu0 0
    %4054 = vmatpush1.bf16.msra.mxu0 0
    %4055 = vmatprep.subr.bf16.mxu0 0
    %4056 = vmatpush1.bf16.msra.mxu0 0
    %4057 = vmatprep.subr.bf16.mxu0 0
    %4058 = vmatpush1.bf16.msra.mxu0 0
    %4059 = vmatprep.mubr.bf16.mxu0 0
    %4060 = vmatmul.mubr.bf16.gmra.mrb[0].mxu0 %v4022
    %v4061 = vpop.f32.mrb[0].mxu0
    %v4062 = vadd.f32 0.0, %v4061
    %v4063 = vpop.f32.mrb[0].mxu0
    %v4064 = vpop.f32.mrb[0].mxu0
    %v4065 = vpop.f32.mrb[0].mxu0
    %4066 = vdwg.mxu0
    %v4068 = vsel %vm688, %v3916, 0
    %v4071 = vsel %vm1636, %v2936, 0
    %4073 = vmatprep.subr.bf16.mxu0 0
    %4074 = vmatpush1.bf16.msra.mxu0 %v4071
    %4075 = vmatprep.subr.bf16.mxu0 0
    %4076 = vmatpush1.bf16.msra.mxu0 0
    %4077 = vmatprep.subr.bf16.mxu0 0
    %4078 = vmatpush1.bf16.msra.mxu0 0
    %4079 = vmatprep.subr.bf16.mxu0 0
    %4080 = vmatpush1.bf16.msra.mxu0 0
    %4081 = vmatprep.subr.bf16.mxu0 0
    %4082 = vmatpush1.bf16.msra.mxu0 0
    %4083 = vmatprep.subr.bf16.mxu0 0
    %4084 = vmatpush1.bf16.msra.mxu0 0
    %4085 = vmatprep.subr.bf16.mxu0 0
    %4086 = vmatpush1.bf16.msra.mxu0 0
    %4087 = vmatprep.subr.bf16.mxu0 0
    %4088 = vmatpush1.bf16.msra.mxu0 0
    %4089 = vmatprep.subr.bf16.mxu0 0
    %4090 = vmatpush1.bf16.msra.mxu0 0
    %4091 = vmatprep.subr.bf16.mxu0 0
    %4092 = vmatpush1.bf16.msra.mxu0 0
    %4093 = vmatprep.subr.bf16.mxu0 0
    %4094 = vmatpush1.bf16.msra.mxu0 0
    %4095 = vmatprep.subr.bf16.mxu0 0
    %4096 = vmatpush1.bf16.msra.mxu0 0
    %4097 = vmatprep.subr.bf16.mxu0 0
    %4098 = vmatpush1.bf16.msra.mxu0 0
    %4099 = vmatprep.subr.bf16.mxu0 0
    %4100 = vmatpush1.bf16.msra.mxu0 0
    %4101 = vmatprep.subr.bf16.mxu0 0
    %4102 = vmatpush1.bf16.msra.mxu0 0
    %4103 = vmatprep.subr.bf16.mxu0 0
    %4104 = vmatpush1.bf16.msra.mxu0 0
    %4105 = vmatprep.mubr.bf16.mxu0 0
    %4106 = vmatmul.mubr.bf16.gmra.mrb[0].mxu0 %v4068
    %v4107 = vpop.f32.mrb[0].mxu0
    %v4108 = vadd.f32 0.0, %v4107
    %v4109 = vpop.f32.mrb[0].mxu0
    %v4110 = vpop.f32.mrb[0].mxu0
    %v4111 = vpop.f32.mrb[0].mxu0
    %4112 = vdwg.mxu0
    %v4114 = vsel %vm688, %v3917, 0
    %v4117 = vsel %vm1636, %v2938, 0
    %4119 = vmatprep.subr.bf16.mxu0 0
    %4120 = vmatpush1.bf16.msra.mxu0 %v4117
    %4121 = vmatprep.subr.bf16.mxu0 0
    %4122 = vmatpush1.bf16.msra.mxu0 0
    %4123 = vmatprep.subr.bf16.mxu0 0
    %4124 = vmatpush1.bf16.msra.mxu0 0
    %4125 = vmatprep.subr.bf16.mxu0 0
    %4126 = vmatpush1.bf16.msra.mxu0 0
    %4127 = vmatprep.subr.bf16.mxu0 0
    %4128 = vmatpush1.bf16.msra.mxu0 0
    %4129 = vmatprep.subr.bf16.mxu0 0
    %4130 = vmatpush1.bf16.msra.mxu0 0
    %4131 = vmatprep.subr.bf16.mxu0 0
    %4132 = vmatpush1.bf16.msra.mxu0 0
    %4133 = vmatprep.subr.bf16.mxu0 0
    %4134 = vmatpush1.bf16.msra.mxu0 0
    %4135 = vmatprep.subr.bf16.mxu0 0
    %4136 = vmatpush1.bf16.msra.mxu0 0
    %4137 = vmatprep.subr.bf16.mxu0 0
    %4138 = vmatpush1.bf16.msra.mxu0 0
    %4139 = vmatprep.subr.bf16.mxu0 0
    %4140 = vmatpush1.bf16.msra.mxu0 0
    %4141 = vmatprep.subr.bf16.mxu0 0
    %4142 = vmatpush1.bf16.msra.mxu0 0
    %4143 = vmatprep.subr.bf16.mxu0 0
    %4144 = vmatpush1.bf16.msra.mxu0 0
    %4145 = vmatprep.subr.bf16.mxu0 0
    %4146 = vmatpush1.bf16.msra.mxu0 0
    %4147 = vmatprep.subr.bf16.mxu0 0
    %4148 = vmatpush1.bf16.msra.mxu0 0
    %4149 = vmatprep.subr.bf16.mxu0 0
    %4150 = vmatpush1.bf16.msra.mxu0 0
    %4151 = vmatprep.mubr.bf16.mxu0 0
    %4152 = vmatmul.mubr.bf16.gmra.mrb[0].mxu0 %v4114
    %v4153 = vpop.f32.mrb[0].mxu0
    %v4154 = vadd.f32 0.0, %v4153
    %v4155 = vpop.f32.mrb[0].mxu0
    %v4156 = vpop.f32.mrb[0].mxu0
    %v4157 = vpop.f32.mrb[0].mxu0
    %4158 = vdwg.mxu0
    %v4160 = vsel %vm688, %v3918, 0
    %v4163 = vsel %vm1636, %v2940, 0
    %4165 = vmatprep.subr.bf16.mxu0 0
    %4166 = vmatpush1.bf16.msra.mxu0 %v4163
    %4167 = vmatprep.subr.bf16.mxu0 0
    %4168 = vmatpush1.bf16.msra.mxu0 0
    %4169 = vmatprep.subr.bf16.mxu0 0
    %4170 = vmatpush1.bf16.msra.mxu0 0
    %4171 = vmatprep.subr.bf16.mxu0 0
    %4172 = vmatpush1.bf16.msra.mxu0 0
    %4173 = vmatprep.subr.bf16.mxu0 0
    %4174 = vmatpush1.bf16.msra.mxu0 0
    %4175 = vmatprep.subr.bf16.mxu0 0
    %4176 = vmatpush1.bf16.msra.mxu0 0
    %4177 = vmatprep.subr.bf16.mxu0 0
    %4178 = vmatpush1.bf16.msra.mxu0 0
    %4179 = vmatprep.subr.bf16.mxu0 0
    %4180 = vmatpush1.bf16.msra.mxu0 0
    %4181 = vmatprep.subr.bf16.mxu0 0
    %4182 = vmatpush1.bf16.msra.mxu0 0
    %4183 = vmatprep.subr.bf16.mxu0 0
    %4184 = vmatpush1.bf16.msra.mxu0 0
    %4185 = vmatprep.subr.bf16.mxu0 0
    %4186 = vmatpush1.bf16.msra.mxu0 0
    %4187 = vmatprep.subr.bf16.mxu0 0
    %4188 = vmatpush1.bf16.msra.mxu0 0
    %4189 = vmatprep.subr.bf16.mxu0 0
    %4190 = vmatpush1.bf16.msra.mxu0 0
    %4191 = vmatprep.subr.bf16.mxu0 0
    %4192 = vmatpush1.bf16.msra.mxu0 0
    %4193 = vmatprep.subr.bf16.mxu0 0
    %4194 = vmatpush1.bf16.msra.mxu0 0
    %4195 = vmatprep.subr.bf16.mxu0 0
    %4196 = vmatpush1.bf16.msra.mxu0 0
    %4197 = vmatprep.mubr.bf16.mxu0 0
    %4198 = vmatmul.mubr.bf16.gmra.mrb[0].mxu0 %v4160
    %v4199 = vpop.f32.mrb[0].mxu0
    %v4200 = vadd.f32 0.0, %v4199
    %v4201 = vpop.f32.mrb[0].mxu0
    %v4202 = vpop.f32.mrb[0].mxu0
    %v4203 = vpop.f32.mrb[0].mxu0
    %4204 = vdwg.mxu0
    %v4206 = vsel %vm688, %v3919, 0
    %v4209 = vsel %vm1636, %v2942, 0
    %4211 = vmatprep.subr.bf16.mxu0 0
    %4212 = vmatpush1.bf16.msra.mxu0 %v4209
    %4213 = vmatprep.subr.bf16.mxu0 0
    %4214 = vmatpush1.bf16.msra.mxu0 0
    %4215 = vmatprep.subr.bf16.mxu0 0
    %4216 = vmatpush1.bf16.msra.mxu0 0
    %4217 = vmatprep.subr.bf16.mxu0 0
    %4218 = vmatpush1.bf16.msra.mxu0 0
    %4219 = vmatprep.subr.bf16.mxu0 0
    %4220 = vmatpush1.bf16.msra.mxu0 0
    %4221 = vmatprep.subr.bf16.mxu0 0
    %4222 = vmatpush1.bf16.msra.mxu0 0
    %4223 = vmatprep.subr.bf16.mxu0 0
    %4224 = vmatpush1.bf16.msra.mxu0 0
    %4225 = vmatprep.subr.bf16.mxu0 0
    %4226 = vmatpush1.bf16.msra.mxu0 0
    %4227 = vmatprep.subr.bf16.mxu0 0
    %4228 = vmatpush1.bf16.msra.mxu0 0
    %4229 = vmatprep.subr.bf16.mxu0 0
    %4230 = vmatpush1.bf16.msra.mxu0 0
    %4231 = vmatprep.subr.bf16.mxu0 0
    %4232 = vmatpush1.bf16.msra.mxu0 0
    %4233 = vmatprep.subr.bf16.mxu0 0
    %4234 = vmatpush1.bf16.msra.mxu0 0
    %4235 = vmatprep.subr.bf16.mxu0 0
    %4236 = vmatpush1.bf16.msra.mxu0 0
    %4237 = vmatprep.subr.bf16.mxu0 0
    %4238 = vmatpush1.bf16.msra.mxu0 0
    %4239 = vmatprep.subr.bf16.mxu0 0
    %4240 = vmatpush1.bf16.msra.mxu0 0
    %4241 = vmatprep.subr.bf16.mxu0 0
    %4242 = vmatpush1.bf16.msra.mxu0 0
    %4243 = vmatprep.mubr.bf16.mxu0 0
    %4244 = vmatmul.mubr.bf16.gmra.mrb[0].mxu0 %v4206
    %v4245 = vpop.f32.mrb[0].mxu0
    %v4246 = vadd.f32 0.0, %v4245
    %v4247 = vpop.f32.mrb[0].mxu0
    %v4248 = vpop.f32.mrb[0].mxu0
    %v4249 = vpop.f32.mrb[0].mxu0
    %4250 = vdwg.mxu0
    %v4252 = vsel %vm688, %v3920, 0
    %v4255 = vsel %vm1636, %v2944, 0
    %4257 = vmatprep.subr.bf16.mxu0 0
    %4258 = vmatpush1.bf16.msra.mxu0 %v4255
    %4259 = vmatprep.subr.bf16.mxu0 0
    %4260 = vmatpush1.bf16.msra.mxu0 0
    %4261 = vmatprep.subr.bf16.mxu0 0
    %4262 = vmatpush1.bf16.msra.mxu0 0
    %4263 = vmatprep.subr.bf16.mxu0 0
    %4264 = vmatpush1.bf16.msra.mxu0 0
    %4265 = vmatprep.subr.bf16.mxu0 0
    %4266 = vmatpush1.bf16.msra.mxu0 0
    %4267 = vmatprep.subr.bf16.mxu0 0
    %4268 = vmatpush1.bf16.msra.mxu0 0
    %4269 = vmatprep.subr.bf16.mxu0 0
    %4270 = vmatpush1.bf16.msra.mxu0 0
    %4271 = vmatprep.subr.bf16.mxu0 0
    %4272 = vmatpush1.bf16.msra.mxu0 0
    %4273 = vmatprep.subr.bf16.mxu0 0
    %4274 = vmatpush1.bf16.msra.mxu0 0
    %4275 = vmatprep.subr.bf16.mxu0 0
    %4276 = vmatpush1.bf16.msra.mxu0 0
    %4277 = vmatprep.subr.bf16.mxu0 0
    %4278 = vmatpush1.bf16.msra.mxu0 0
    %4279 = vmatprep.subr.bf16.mxu0 0
    %4280 = vmatpush1.bf16.msra.mxu0 0
    %4281 = vmatprep.subr.bf16.mxu0 0
    %4282 = vmatpush1.bf16.msra.mxu0 0
    %4283 = vmatprep.subr.bf16.mxu0 0
    %4284 = vmatpush1.bf16.msra.mxu0 0
    %4285 = vmatprep.subr.bf16.mxu0 0
    %4286 = vmatpush1.bf16.msra.mxu0 0
    %4287 = vmatprep.subr.bf16.mxu0 0
    %4288 = vmatpush1.bf16.msra.mxu0 0
    %4289 = vmatprep.mubr.bf16.mxu0 0
    %4290 = vmatmul.mubr.bf16.gmra.mrb[0].mxu0 %v4252
    %v4291 = vpop.f32.mrb[0].mxu0
    %v4292 = vadd.f32 0.0, %v4291
    %v4293 = vpop.f32.mrb[0].mxu0
    %v4294 = vpop.f32.mrb[0].mxu0
    %v4295 = vpop.f32.mrb[0].mxu0
    %4296 = vdwg.mxu0
    %v4298 = vsel %vm688, %v3921, 0
    %v4301 = vsel %vm1636, %v2946, 0
    %4303 = vmatprep.subr.bf16.mxu0 0
    %4304 = vmatpush1.bf16.msra.mxu0 %v4301
    %4305 = vmatprep.subr.bf16.mxu0 0
    %4306 = vmatpush1.bf16.msra.mxu0 0
    %4307 = vmatprep.subr.bf16.mxu0 0
    %4308 = vmatpush1.bf16.msra.mxu0 0
    %4309 = vmatprep.subr.bf16.mxu0 0
    %4310 = vmatpush1.bf16.msra.mxu0 0
    %4311 = vmatprep.subr.bf16.mxu0 0
    %4312 = vmatpush1.bf16.msra.mxu0 0
    %4313 = vmatprep.subr.bf16.mxu0 0
    %4314 = vmatpush1.bf16.msra.mxu0 0
    %4315 = vmatprep.subr.bf16.mxu0 0
    %4316 = vmatpush1.bf16.msra.mxu0 0
    %4317 = vmatprep.subr.bf16.mxu0 0
    %4318 = vmatpush1.bf16.msra.mxu0 0
    %4319 = vmatprep.subr.bf16.mxu0 0
    %4320 = vmatpush1.bf16.msra.mxu0 0
    %4321 = vmatprep.subr.bf16.mxu0 0
    %4322 = vmatpush1.bf16.msra.mxu0 0
    %4323 = vmatprep.subr.bf16.mxu0 0
    %4324 = vmatpush1.bf16.msra.mxu0 0
    %4325 = vmatprep.subr.bf16.mxu0 0
    %4326 = vmatpush1.bf16.msra.mxu0 0
    %4327 = vmatprep.subr.bf16.mxu0 0
    %4328 = vmatpush1.bf16.msra.mxu0 0
    %4329 = vmatprep.subr.bf16.mxu0 0
    %4330 = vmatpush1.bf16.msra.mxu0 0
    %4331 = vmatprep.subr.bf16.mxu0 0
    %4332 = vmatpush1.bf16.msra.mxu0 0
    %4333 = vmatprep.subr.bf16.mxu0 0
    %4334 = vmatpush1.bf16.msra.mxu0 0
    %4335 = vmatprep.mubr.bf16.mxu0 0
    %4336 = vmatmul.mubr.bf16.gmra.mrb[0].mxu0 %v4298
    %v4337 = vpop.f32.mrb[0].mxu0
    %v4338 = vadd.f32 0.0, %v4337
    %v4339 = vpop.f32.mrb[0].mxu0
    %v4340 = vpop.f32.mrb[0].mxu0
    %v4341 = vpop.f32.mrb[0].mxu0
    %4342 = vdwg.mxu0
    %v4344 = vsel %vm688, %v3922, 0
    %v4347 = vsel %vm1636, %v2948, 0
    %4349 = vmatprep.subr.bf16.mxu0 0
    %4350 = vmatpush1.bf16.msra.mxu0 %v4347
    %4351 = vmatprep.subr.bf16.mxu0 0
    %4352 = vmatpush1.bf16.msra.mxu0 0
    %4353 = vmatprep.subr.bf16.mxu0 0
    %4354 = vmatpush1.bf16.msra.mxu0 0
    %4355 = vmatprep.subr.bf16.mxu0 0
    %4356 = vmatpush1.bf16.msra.mxu0 0
    %4357 = vmatprep.subr.bf16.mxu0 0
    %4358 = vmatpush1.bf16.msra.mxu0 0
    %4359 = vmatprep.subr.bf16.mxu0 0
    %4360 = vmatpush1.bf16.msra.mxu0 0
    %4361 = vmatprep.subr.bf16.mxu0 0
    %4362 = vmatpush1.bf16.msra.mxu0 0
    %4363 = vmatprep.subr.bf16.mxu0 0
    %4364 = vmatpush1.bf16.msra.mxu0 0
    %4365 = vmatprep.subr.bf16.mxu0 0
    %4366 = vmatpush1.bf16.msra.mxu0 0
    %4367 = vmatprep.subr.bf16.mxu0 0
    %4368 = vmatpush1.bf16.msra.mxu0 0
    %4369 = vmatprep.subr.bf16.mxu0 0
    %4370 = vmatpush1.bf16.msra.mxu0 0
    %4371 = vmatprep.subr.bf16.mxu0 0
    %4372 = vmatpush1.bf16.msra.mxu0 0
    %4373 = vmatprep.subr.bf16.mxu0 0
    %4374 = vmatpush1.bf16.msra.mxu0 0
    %4375 = vmatprep.subr.bf16.mxu0 0
    %4376 = vmatpush1.bf16.msra.mxu0 0
    %4377 = vmatprep.subr.bf16.mxu0 0
    %4378 = vmatpush1.bf16.msra.mxu0 0
    %4379 = vmatprep.subr.bf16.mxu0 0
    %4380 = vmatpush1.bf16.msra.mxu0 0
    %4381 = vmatprep.mubr.bf16.mxu0 0
    %4382 = vmatmul.mubr.bf16.gmra.mrb[0].mxu0 %v4344
    %v4383 = vpop.f32.mrb[0].mxu0
    %v4384 = vadd.f32 0.0, %v4383
    %v4385 = vpop.f32.mrb[0].mxu0
    %v4386 = vpop.f32.mrb[0].mxu0
    %v4387 = vpop.f32.mrb[0].mxu0
    %4388 = vdwg.mxu0
    %v4390 = vsel %vm688, %v3923, 0
    %v4393 = vsel %vm1636, %v2950, 0
    %4395 = vmatprep.subr.bf16.mxu0 0
    %4396 = vmatpush1.bf16.msra.mxu0 %v4393
    %4397 = vmatprep.subr.bf16.mxu0 0
    %4398 = vmatpush1.bf16.msra.mxu0 0
    %4399 = vmatprep.subr.bf16.mxu0 0
    %4400 = vmatpush1.bf16.msra.mxu0 0
    %4401 = vmatprep.subr.bf16.mxu0 0
    %4402 = vmatpush1.bf16.msra.mxu0 0
    %4403 = vmatprep.subr.bf16.mxu0 0
    %4404 = vmatpush1.bf16.msra.mxu0 0
    %4405 = vmatprep.subr.bf16.mxu0 0
    %4406 = vmatpush1.bf16.msra.mxu0 0
    %4407 = vmatprep.subr.bf16.mxu0 0
    %4408 = vmatpush1.bf16.msra.mxu0 0
    %4409 = vmatprep.subr.bf16.mxu0 0
    %4410 = vmatpush1.bf16.msra.mxu0 0
    %4411 = vmatprep.subr.bf16.mxu0 0
    %4412 = vmatpush1.bf16.msra.mxu0 0
    %4413 = vmatprep.subr.bf16.mxu0 0
    %4414 = vmatpush1.bf16.msra.mxu0 0
    %4415 = vmatprep.subr.bf16.mxu0 0
    %4416 = vmatpush1.bf16.msra.mxu0 0
    %4417 = vmatprep.subr.bf16.mxu0 0
    %4418 = vmatpush1.bf16.msra.mxu0 0
    %4419 = vmatprep.subr.bf16.mxu0 0
    %4420 = vmatpush1.bf16.msra.mxu0 0
    %4421 = vmatprep.subr.bf16.mxu0 0
    %4422 = vmatpush1.bf16.msra.mxu0 0
    %4423 = vmatprep.subr.bf16.mxu0 0
    %4424 = vmatpush1.bf16.msra.mxu0 0
    %4425 = vmatprep.subr.bf16.mxu0 0
    %4426 = vmatpush1.bf16.msra.mxu0 0
    %4427 = vmatprep.mubr.bf16.mxu0 0
    %4428 = vmatmul.mubr.bf16.gmra.mrb[0].mxu0 %v4390
    %v4429 = vpop.f32.mrb[0].mxu0
    %v4430 = vadd.f32 0.0, %v4429
    %v4431 = vpop.f32.mrb[0].mxu0
    %v4432 = vpop.f32.mrb[0].mxu0
    %v4433 = vpop.f32.mrb[0].mxu0
    %4434 = vdwg.mxu0
    %v4436 = vsel %vm688, %v3924, 0
    %v4439 = vsel %vm1636, %v2952, 0
    %4441 = vmatprep.subr.bf16.mxu0 0
    %4442 = vmatpush1.bf16.msra.mxu0 %v4439
    %4443 = vmatprep.subr.bf16.mxu0 0
    %4444 = vmatpush1.bf16.msra.mxu0 0
    %4445 = vmatprep.subr.bf16.mxu0 0
    %4446 = vmatpush1.bf16.msra.mxu0 0
    %4447 = vmatprep.subr.bf16.mxu0 0
    %4448 = vmatpush1.bf16.msra.mxu0 0
    %4449 = vmatprep.subr.bf16.mxu0 0
    %4450 = vmatpush1.bf16.msra.mxu0 0
    %4451 = vmatprep.subr.bf16.mxu0 0
    %4452 = vmatpush1.bf16.msra.mxu0 0
    %4453 = vmatprep.subr.bf16.mxu0 0
    %4454 = vmatpush1.bf16.msra.mxu0 0
    %4455 = vmatprep.subr.bf16.mxu0 0
    %4456 = vmatpush1.bf16.msra.mxu0 0
    %4457 = vmatprep.subr.bf16.mxu0 0
    %4458 = vmatpush1.bf16.msra.mxu0 0
    %4459 = vmatprep.subr.bf16.mxu0 0
    %4460 = vmatpush1.bf16.msra.mxu0 0
    %4461 = vmatprep.subr.bf16.mxu0 0
    %4462 = vmatpush1.bf16.msra.mxu0 0
    %4463 = vmatprep.subr.bf16.mxu0 0
    %4464 = vmatpush1.bf16.msra.mxu0 0
    %4465 = vmatprep.subr.bf16.mxu0 0
    %4466 = vmatpush1.bf16.msra.mxu0 0
    %4467 = vmatprep.subr.bf16.mxu0 0
    %4468 = vmatpush1.bf16.msra.mxu0 0
    %4469 = vmatprep.subr.bf16.mxu0 0
    %4470 = vmatpush1.bf16.msra.mxu0 0
    %4471 = vmatprep.subr.bf16.mxu0 0
    %4472 = vmatpush1.bf16.msra.mxu0 0
    %4473 = vmatprep.mubr.bf16.mxu0 0
    %4474 = vmatmul.mubr.bf16.gmra.mrb[0].mxu0 %v4436
    %v4475 = vpop.f32.mrb[0].mxu0
    %v4476 = vadd.f32 0.0, %v4475
    %v4477 = vpop.f32.mrb[0].mxu0
    %v4478 = vpop.f32.mrb[0].mxu0
    %v4479 = vpop.f32.mrb[0].mxu0
    %4480 = vdwg.mxu0
    %v4482 = vsel %vm688, %v3925, 0
    %v4485 = vsel %vm1636, %v2954, 0
    %4487 = vmatprep.subr.bf16.mxu0 0
    %4488 = vmatpush1.bf16.msra.mxu0 %v4485
    %4489 = vmatprep.subr.bf16.mxu0 0
    %4490 = vmatpush1.bf16.msra.mxu0 0
    %4491 = vmatprep.subr.bf16.mxu0 0
    %4492 = vmatpush1.bf16.msra.mxu0 0
    %4493 = vmatprep.subr.bf16.mxu0 0
    %4494 = vmatpush1.bf16.msra.mxu0 0
    %4495 = vmatprep.subr.bf16.mxu0 0
    %4496 = vmatpush1.bf16.msra.mxu0 0
    %4497 = vmatprep.subr.bf16.mxu0 0
    %4498 = vmatpush1.bf16.msra.mxu0 0
    %4499 = vmatprep.subr.bf16.mxu0 0
    %4500 = vmatpush1.bf16.msra.mxu0 0
    %4501 = vmatprep.subr.bf16.mxu0 0
    %4502 = vmatpush1.bf16.msra.mxu0 0
    %4503 = vmatprep.subr.bf16.mxu0 0
    %4504 = vmatpush1.bf16.msra.mxu0 0
    %4505 = vmatprep.subr.bf16.mxu0 0
    %4506 = vmatpush1.bf16.msra.mxu0 0
    %4507 = vmatprep.subr.bf16.mxu0 0
    %4508 = vmatpush1.bf16.msra.mxu0 0
    %4509 = vmatprep.subr.bf16.mxu0 0
    %4510 = vmatpush1.bf16.msra.mxu0 0
    %4511 = vmatprep.subr.bf16.mxu0 0
    %4512 = vmatpush1.bf16.msra.mxu0 0
    %4513 = vmatprep.subr.bf16.mxu0 0
    %4514 = vmatpush1.bf16.msra.mxu0 0
    %4515 = vmatprep.subr.bf16.mxu0 0
    %4516 = vmatpush1.bf16.msra.mxu0 0
    %4517 = vmatprep.subr.bf16.mxu0 0
    %4518 = vmatpush1.bf16.msra.mxu0 0
    %4519 = vmatprep.mubr.bf16.mxu0 0
    %4520 = vmatmul.mubr.bf16.gmra.mrb[0].mxu0 %v4482
    %v4521 = vpop.f32.mrb[0].mxu0
    %v4522 = vadd.f32 0.0, %v4521
    %v4523 = vpop.f32.mrb[0].mxu0
    %v4524 = vpop.f32.mrb[0].mxu0
    %v4525 = vpop.f32.mrb[0].mxu0
    %4526 = vdwg.mxu0
    %v4528 = vsel %vm688, %v3926, 0
    %v4531 = vsel %vm1636, %v2956, 0
    %4533 = vmatprep.subr.bf16.mxu0 0
    %4534 = vmatpush1.bf16.msra.mxu0 %v4531
    %4535 = vmatprep.subr.bf16.mxu0 0
    %4536 = vmatpush1.bf16.msra.mxu0 0
    %4537 = vmatprep.subr.bf16.mxu0 0
    %4538 = vmatpush1.bf16.msra.mxu0 0
    %4539 = vmatprep.subr.bf16.mxu0 0
    %4540 = vmatpush1.bf16.msra.mxu0 0
    %4541 = vmatprep.subr.bf16.mxu0 0
    %4542 = vmatpush1.bf16.msra.mxu0 0
    %4543 = vmatprep.subr.bf16.mxu0 0
    %4544 = vmatpush1.bf16.msra.mxu0 0
    %4545 = vmatprep.subr.bf16.mxu0 0
    %4546 = vmatpush1.bf16.msra.mxu0 0
    %4547 = vmatprep.subr.bf16.mxu0 0
    %4548 = vmatpush1.bf16.msra.mxu0 0
    %4549 = vmatprep.subr.bf16.mxu0 0
    %4550 = vmatpush1.bf16.msra.mxu0 0
    %4551 = vmatprep.subr.bf16.mxu0 0
    %4552 = vmatpush1.bf16.msra.mxu0 0
    %4553 = vmatprep.subr.bf16.mxu0 0
    %4554 = vmatpush1.bf16.msra.mxu0 0
    %4555 = vmatprep.subr.bf16.mxu0 0
    %4556 = vmatpush1.bf16.msra.mxu0 0
    %4557 = vmatprep.subr.bf16.mxu0 0
    %4558 = vmatpush1.bf16.msra.mxu0 0
    %4559 = vmatprep.subr.bf16.mxu0 0
    %4560 = vmatpush1.bf16.msra.mxu0 0
    %4561 = vmatprep.subr.bf16.mxu0 0
    %4562 = vmatpush1.bf16.msra.mxu0 0
    %4563 = vmatprep.subr.bf16.mxu0 0
    %4564 = vmatpush1.bf16.msra.mxu0 0
    %4565 = vmatprep.mubr.bf16.mxu0 0
    %4566 = vmatmul.mubr.bf16.gmra.mrb[0].mxu0 %v4528
    %v4567 = vpop.f32.mrb[0].mxu0
    %v4568 = vadd.f32 0.0, %v4567
    %v4569 = vpop.f32.mrb[0].mxu0
    %v4570 = vpop.f32.mrb[0].mxu0
    %v4571 = vpop.f32.mrb[0].mxu0
    %4572 = vdwg.mxu0
    %v4574 = vsel %vm688, %v3927, 0
    %v4577 = vsel %vm1636, %v2958, 0
    %4579 = vmatprep.subr.bf16.mxu0 0
    %4580 = vmatpush1.bf16.msra.mxu0 %v4577
    %4581 = vmatprep.subr.bf16.mxu0 0
    %4582 = vmatpush1.bf16.msra.mxu0 0
    %4583 = vmatprep.subr.bf16.mxu0 0
    %4584 = vmatpush1.bf16.msra.mxu0 0
    %4585 = vmatprep.subr.bf16.mxu0 0
    %4586 = vmatpush1.bf16.msra.mxu0 0
    %4587 = vmatprep.subr.bf16.mxu0 0
    %4588 = vmatpush1.bf16.msra.mxu0 0
    %4589 = vmatprep.subr.bf16.mxu0 0
    %4590 = vmatpush1.bf16.msra.mxu0 0
    %4591 = vmatprep.subr.bf16.mxu0 0
    %4592 = vmatpush1.bf16.msra.mxu0 0
    %4593 = vmatprep.subr.bf16.mxu0 0
    %4594 = vmatpush1.bf16.msra.mxu0 0
    %4595 = vmatprep.subr.bf16.mxu0 0
    %4596 = vmatpush1.bf16.msra.mxu0 0
    %4597 = vmatprep.subr.bf16.mxu0 0
    %4598 = vmatpush1.bf16.msra.mxu0 0
    %4599 = vmatprep.subr.bf16.mxu0 0
    %4600 = vmatpush1.bf16.msra.mxu0 0
    %4601 = vmatprep.subr.bf16.mxu0 0
    %4602 = vmatpush1.bf16.msra.mxu0 0
    %4603 = vmatprep.subr.bf16.mxu0 0
    %4604 = vmatpush1.bf16.msra.mxu0 0
    %4605 = vmatprep.subr.bf16.mxu0 0
    %4606 = vmatpush1.bf16.msra.mxu0 0
    %4607 = vmatprep.subr.bf16.mxu0 0
    %4608 = vmatpush1.bf16.msra.mxu0 0
    %4609 = vmatprep.subr.bf16.mxu0 0
    %4610 = vmatpush1.bf16.msra.mxu0 0
    %4611 = vmatprep.mubr.bf16.mxu0 0
    %4612 = vmatmul.mubr.bf16.gmra.mrb[0].mxu0 %v4574
    %v4613 = vpop.f32.mrb[0].mxu0
    %v4614 = vadd.f32 0.0, %v4613
    %v4615 = vpop.f32.mrb[0].mxu0
    %v4616 = vpop.f32.mrb[0].mxu0
    %v4617 = vpop.f32.mrb[0].mxu0
    %4618 = vdwg.mxu0
    %v4620 = vsel %vm688, %v3928, 0
    %v4623 = vsel %vm1636, %v2960, 0
    %4625 = vmatprep.subr.bf16.mxu0 0
    %4626 = vmatpush1.bf16.msra.mxu0 %v4623
    %4627 = vmatprep.subr.bf16.mxu0 0
    %4628 = vmatpush1.bf16.msra.mxu0 0
    %4629 = vmatprep.subr.bf16.mxu0 0
    %4630 = vmatpush1.bf16.msra.mxu0 0
    %4631 = vmatprep.subr.bf16.mxu0 0
    %4632 = vmatpush1.bf16.msra.mxu0 0
    %4633 = vmatprep.subr.bf16.mxu0 0
    %4634 = vmatpush1.bf16.msra.mxu0 0
    %4635 = vmatprep.subr.bf16.mxu0 0
    %4636 = vmatpush1.bf16.msra.mxu0 0
    %4637 = vmatprep.subr.bf16.mxu0 0
    %4638 = vmatpush1.bf16.msra.mxu0 0
    %4639 = vmatprep.subr.bf16.mxu0 0
    %4640 = vmatpush1.bf16.msra.mxu0 0
    %4641 = vmatprep.subr.bf16.mxu0 0
    %4642 = vmatpush1.bf16.msra.mxu0 0
    %4643 = vmatprep.subr.bf16.mxu0 0
    %4644 = vmatpush1.bf16.msra.mxu0 0
    %4645 = vmatprep.subr.bf16.mxu0 0
    %4646 = vmatpush1.bf16.msra.mxu0 0
    %4647 = vmatprep.subr.bf16.mxu0 0
    %4648 = vmatpush1.bf16.msra.mxu0 0
    %4649 = vmatprep.subr.bf16.mxu0 0
    %4650 = vmatpush1.bf16.msra.mxu0 0
    %4651 = vmatprep.subr.bf16.mxu0 0
    %4652 = vmatpush1.bf16.msra.mxu0 0
    %4653 = vmatprep.subr.bf16.mxu0 0
    %4654 = vmatpush1.bf16.msra.mxu0 0
    %4655 = vmatprep.subr.bf16.mxu0 0
    %4656 = vmatpush1.bf16.msra.mxu0 0
    %4657 = vmatprep.mubr.bf16.mxu0 0
    %4658 = vmatmul.mubr.bf16.gmra.mrb[0].mxu0 %v4620
    %v4659 = vpop.f32.mrb[0].mxu0
    %v4660 = vadd.f32 0.0, %v4659
    %v4661 = vpop.f32.mrb[0].mxu0
    %v4662 = vpop.f32.mrb[0].mxu0
    %v4663 = vpop.f32.mrb[0].mxu0
    %4664 = vdwg.mxu0
    %v4665 = vpack.c.bf16 %v3970, %v3970
    %v4666 = vpack.c.bf16 %v4016, %v4016
    %v4667 = vpack.c.bf16 %v4062, %v4062
    %v4668 = vpack.c.bf16 %v4108, %v4108
    %v4669 = vpack.c.bf16 %v4154, %v4154
    %v4670 = vpack.c.bf16 %v4200, %v4200
    %v4671 = vpack.c.bf16 %v4246, %v4246
    %v4672 = vpack.c.bf16 %v4292, %v4292
    %v4673 = vpack.c.bf16 %v4338, %v4338
    %v4674 = vpack.c.bf16 %v4384, %v4384
    %v4675 = vpack.c.bf16 %v4430, %v4430
    %v4676 = vpack.c.bf16 %v4476, %v4476
    %v4677 = vpack.c.bf16 %v4522, %v4522
    %v4678 = vpack.c.bf16 %v4568, %v4568
    %v4679 = vpack.c.bf16 %v4614, %v4614
    %v4680 = vpack.c.bf16 %v4660, %v4660
    %v4685 = vunpack.c.l.b16 %v4665
    %v4686 = vunpack.c.l.b16 %v4666
    %v4687 = vunpack.c.l.b16 %v4667
    %v4688 = vunpack.c.l.b16 %v4668
    %v4689 = vpack.c.b16 %v4686, %v4685
    %v4690 = vpack.c.b16 %v4688, %v4687
    %v4695 = vunpack.c.l.b16 %v4669
    %v4696 = vunpack.c.l.b16 %v4670
    %v4697 = vunpack.c.l.b16 %v4671
    %v4698 = vunpack.c.l.b16 %v4672
    %v4699 = vpack.c.b16 %v4696, %v4695
    %v4700 = vpack.c.b16 %v4698, %v4697
    %4701 = vrot.lane.b32.xlu0 %v4699, 8
    %v4702 = vpop.permute.xlu0 %4701
    %4703 = vrot.lane.b32.xlu0 %v4700, 8
    %v4704 = vpop.permute.xlu0 %4703
    %v4709 = vunpack.c.l.b16 %v4673
    %v4710 = vunpack.c.l.b16 %v4674
    %v4711 = vunpack.c.l.b16 %v4675
    %v4712 = vunpack.c.l.b16 %v4676
    %v4713 = vpack.c.b16 %v4710, %v4709
    %v4714 = vpack.c.b16 %v4712, %v4711
    %4715 = vrot.lane.b32.xlu0 %v4713, 16
    %v4716 = vpop.permute.xlu0 %4715
    %4717 = vrot.lane.b32.xlu0 %v4714, 16
    %v4718 = vpop.permute.xlu0 %4717
    %v4723 = vunpack.c.l.b16 %v4677
    %v4724 = vunpack.c.l.b16 %v4678
    %v4725 = vunpack.c.l.b16 %v4679
    %v4726 = vunpack.c.l.b16 %v4680
    %v4727 = vpack.c.b16 %v4724, %v4723
    %v4728 = vpack.c.b16 %v4726, %v4725
    %4729 = vrot.lane.b32.xlu0 %v4727, 24
    %v4730 = vpop.permute.xlu0 %4729
    %4731 = vrot.lane.b32.xlu0 %v4728, 24
    %v4732 = vpop.permute.xlu0 %4731
    %v4735 = vsel %vm688, %v4689, %v4702
    %v4738 = vsel %vm688, %v4690, %v4704
    %v4740 = vsel %vm2444, %v4735, %v4716
    %v4742 = vsel %vm2444, %v4738, %v4718
    %v4744 = vsel %vm2449, %v4740, %v4730
    %v4746 = vsel %vm2449, %v4742, %v4732
    %v4748 = vlaneseq
    %v4749 = vshrl.u32 %v4748, 7
    %v4750 = vsub.s32 0, %v4749
    %v4751 = vrot.slane %v2625, %v4750
    %v4757 = vunpack.c.l.b16 %v2621
    %v4758 = vunpack.c.l.b16 %v2622
    %v4759 = vunpack.c.l.b16 %v2623
    %v4760 = vunpack.c.l.b16 %v2624
    %v4761 = vpack.c.b16 %v4758, %v4757
    %v4762 = vpack.c.b16 %v4760, %v4759
    %v4765 = vsel %vm386, %v4744, 0
    %v4767 = vsel %vm386, %v4746, 0
    %4769 = vmatprep.subr.bf16.mxu0 0
    %4770 = vmatpush1.bf16.msra.mxu0 %v4761
    %4771 = vmatprep.subr.bf16.mxu0 0
    %4772 = vmatpush1.bf16.msra.mxu0 %v4762
    %4773 = vmatprep.subr.bf16.mxu0 0
    %4774 = vmatpush1.bf16.msra.mxu0 0
    %4775 = vmatprep.subr.bf16.mxu0 0
    %4776 = vmatpush1.bf16.msra.mxu0 0
    %4777 = vmatprep.subr.bf16.mxu0 0
    %4778 = vmatpush1.bf16.msra.mxu0 0
    %4779 = vmatprep.subr.bf16.mxu0 0
    %4780 = vmatpush1.bf16.msra.mxu0 0
    %4781 = vmatprep.subr.bf16.mxu0 0
    %4782 = vmatpush1.bf16.msra.mxu0 0
    %4783 = vmatprep.subr.bf16.mxu0 0
    %4784 = vmatpush1.bf16.msra.mxu0 0
    %4785 = vmatprep.subr.bf16.mxu0 0
    %4786 = vmatpush1.bf16.msra.mxu0 0
    %4787 = vmatprep.subr.bf16.mxu0 0
    %4788 = vmatpush1.bf16.msra.mxu0 0
    %4789 = vmatprep.subr.bf16.mxu0 0
    %4790 = vmatpush1.bf16.msra.mxu0 0
    %4791 = vmatprep.subr.bf16.mxu0 0
    %4792 = vmatpush1.bf16.msra.mxu0 0
    %4793 = vmatprep.subr.bf16.mxu0 0
    %4794 = vmatpush1.bf16.msra.mxu0 0
    %4795 = vmatprep.subr.bf16.mxu0 0
    %4796 = vmatpush1.bf16.msra.mxu0 0
    %4797 = vmatprep.subr.bf16.mxu0 0
    %4798 = vmatpush1.bf16.msra.mxu0 0
    %4799 = vmatprep.subr.bf16.mxu0 0
    %4800 = vmatpush1.bf16.msra.mxu0 0
    %4801 = vmatprep.mubr.bf16.mxu0 0
    %4802 = vmatmul.mubr.bf16.gmra.mrb[0].mxu0 %v4765
    %v4803 = vpop.f32.mrb[0].mxu0
    %v4804 = vadd.f32 %v4751, %v4803
    %v4805 = vpop.f32.mrb[0].mxu0
    %v4806 = vpop.f32.mrb[0].mxu0
    %v4807 = vadd.f32 %v4751, %v4806
    %v4808 = vpop.f32.mrb[0].mxu0
    %4809 = vmatprep.mubr.bf16.mxu0 0
    %4810 = vmatmul.mubr.bf16.gmra.mrb[0].mxu0 %v4767
    %v4811 = vpop.f32.mrb[0].mxu0
    %v4812 = vadd.f32 %v4751, %v4811
    %v4813 = vpop.f32.mrb[0].mxu0
    %v4814 = vpop.f32.mrb[0].mxu0
    %v4815 = vadd.f32 %v4751, %v4814
    %v4816 = vpop.f32.mrb[0].mxu0
    %4817 = vdwg.mxu0
    %v4818 = vadd.f32 %v4804, %v2600
    %v4819 = vadd.f32 %v4807, %v2601
    %v4820 = vadd.f32 %v4812, %v2602
    %v4821 = vadd.f32 %v4815, %v2603
    %v4822 = vld [vmem:[%s26] sm:$0x1]
    %v4823 = vld [vmem:[%s27] sm:$0x1]
    %v4824 = vsel %vm386, %v4818, 0.0
    %4825 = vadd.xlane.f32.xlu0 %v4824
    %v4826 = vpop.xlane.xlu0 %4825
    %v4827 = vsel %vm386, %v4819, 0.0
    %4828 = vadd.xlane.f32.xlu0 %v4827
    %v4829 = vpop.xlane.xlu0 %4828
    %v4830 = vsel %vm386, %v4820, 0.0
    %4831 = vadd.xlane.f32.xlu0 %v4830
    %v4832 = vpop.xlane.xlu0 %4831
    %v4833 = vsel %vm386, %v4821, 0.0
    %4834 = vadd.xlane.f32.xlu0 %v4833
    %v4835 = vpop.xlane.xlu0 %4834
    %v4836 = vmul.f32 %v4826, %v2543
    %v4837 = vmul.f32 %v4829, %v2543
    %v4838 = vmul.f32 %v4832, %v2543
    %v4839 = vmul.f32 %v4835, %v2543
    %v4840 = vsub.f32 %v4818, %v4836
    %v4841 = vsub.f32 %v4819, %v4837
    %v4842 = vsub.f32 %v4820, %v4838
    %v4843 = vsub.f32 %v4821, %v4839
    %v4844 = vmul.f32 %v4840, %v4840
    %v4845 = vmul.f32 %v4841, %v4841
    %v4846 = vmul.f32 %v4842, %v4842
    %v4847 = vmul.f32 %v4843, %v4843
    %v4848 = vsel %vm386, %v4844, 0.0
    %4849 = vadd.xlane.f32.xlu0 %v4848
    %v4850 = vpop.xlane.xlu0 %4849
    %v4851 = vsel %vm386, %v4845, 0.0
    %4852 = vadd.xlane.f32.xlu0 %v4851
    %v4853 = vpop.xlane.xlu0 %4852
    %v4854 = vsel %vm386, %v4846, 0.0
    %4855 = vadd.xlane.f32.xlu0 %v4854
    %v4856 = vpop.xlane.xlu0 %4855
    %v4857 = vsel %vm386, %v4847, 0.0
    %4858 = vadd.xlane.f32.xlu0 %v4857
    %v4859 = vpop.xlane.xlu0 %4858
    %v4860 = vmul.f32 %v4850, %v2543
    %v4861 = vmul.f32 %v4853, %v2543
    %v4862 = vmul.f32 %v4856, %v2543
    %v4863 = vmul.f32 %v4859, %v2543
    %v4864 = vadd.f32 %v4860, 1e-05
    %v4865 = vadd.f32 %v4861, 1e-05
    %v4866 = vadd.f32 %v4862, 1e-05
    %v4867 = vadd.f32 %v4863, 1e-05
    %v4868 = vrsqrt.pop %v4864
    %v4869 = vrsqrt.pop %v4865
    %v4870 = vrsqrt.pop %v4866
    %v4871 = vrsqrt.pop %v4867
    %v4872 = vmul.f32 %v4840, %v4868
    %v4873 = vmul.f32 %v4841, %v4869
    %v4874 = vmul.f32 %v4842, %v4870
    %v4875 = vmul.f32 %v4843, %v4871
    %v4877 = vlaneseq
    %v4878 = vshrl.u32 %v4877, 7
    %v4879 = vsub.s32 0, %v4878
    %v4880 = vrot.slane %v4822, %v4879
    %v4882 = vmul.f32 %v4872, %v4880
    %v4883 = vmul.f32 %v4873, %v4880
    %v4884 = vmul.f32 %v4874, %v4880
    %v4885 = vmul.f32 %v4875, %v4880
    %v4887 = vlaneseq
    %v4888 = vshrl.u32 %v4887, 7
    %v4889 = vsub.s32 0, %v4888
    %v4890 = vrot.slane %v4823, %v4889
    %v4892 = vadd.f32 %v4882, %v4890
    %v4893 = vadd.f32 %v4883, %v4890
    %v4894 = vadd.f32 %v4884, %v4890
    %v4895 = vadd.f32 %v4885, %v4890
    %v4896 = vpack.c.bf16 %v4893, %v4892
    %v4897 = vpack.c.bf16 %v4895, %v4894
    %v4898 = vld [vmem:[#allocation23] sm:$0xf]
    %v4899 = vld [vmem:[#allocation23 + $0x4] sm:$0xf]
    %v4900 = vld [vmem:[#allocation23 + $0x8] sm:$0xf]
    %v4901 = vld [vmem:[#allocation23 + $0xc] sm:$0xf]
    %v4902 = vld [vmem:[%s21] sm:$0x1]
    %v4904 = vlaneseq
    %v4905 = vshrl.u32 %v4904, 7
    %v4906 = vsub.s32 0, %v4905
    %v4907 = vrot.slane %v4902, %v4906
    %v4913 = vunpack.c.l.b16 %v4898
    %v4914 = vunpack.c.l.b16 %v4899
    %v4915 = vunpack.c.l.b16 %v4900
    %v4916 = vunpack.c.l.b16 %v4901
    %v4917 = vpack.c.b16 %v4914, %v4913
    %v4918 = vpack.c.b16 %v4916, %v4915
    %v4922 = vsel %vm386, %v4896, 0
    %v4925 = vsel %vm386, %v4897, 0
    %4927 = vmatprep.subr.bf16.mxu0 0
    %4928 = vmatpush1.bf16.msra.mxu0 %v4917
    %4929 = vmatprep.subr.bf16.mxu0 0
    %4930 = vmatpush1.bf16.msra.mxu0 %v4918
    %4931 = vmatprep.subr.bf16.mxu0 0
    %4932 = vmatpush1.bf16.msra.mxu0 0
    %4933 = vmatprep.subr.bf16.mxu0 0
    %4934 = vmatpush1.bf16.msra.mxu0 0
    %4935 = vmatprep.subr.bf16.mxu0 0
    %4936 = vmatpush1.bf16.msra.mxu0 0
    %4937 = vmatprep.subr.bf16.mxu0 0
    %4938 = vmatpush1.bf16.msra.mxu0 0
    %4939 = vmatprep.subr.bf16.mxu0 0
    %4940 = vmatpush1.bf16.msra.mxu0 0
    %4941 = vmatprep.subr.bf16.mxu0 0
    %4942 = vmatpush1.bf16.msra.mxu0 0
    %4943 = vmatprep.subr.bf16.mxu0 0
    %4944 = vmatpush1.bf16.msra.mxu0 0
    %4945 = vmatprep.subr.bf16.mxu0 0
    %4946 = vmatpush1.bf16.msra.mxu0 0
    %4947 = vmatprep.subr.bf16.mxu0 0
    %4948 = vmatpush1.bf16.msra.mxu0 0
    %4949 = vmatprep.subr.bf16.mxu0 0
    %4950 = vmatpush1.bf16.msra.mxu0 0
    %4951 = vmatprep.subr.bf16.mxu0 0
    %4952 = vmatpush1.bf16.msra.mxu0 0
    %4953 = vmatprep.subr.bf16.mxu0 0
    %4954 = vmatpush1.bf16.msra.mxu0 0
    %4955 = vmatprep.subr.bf16.mxu0 0
    %4956 = vmatpush1.bf16.msra.mxu0 0
    %4957 = vmatprep.subr.bf16.mxu0 0
    %4958 = vmatpush1.bf16.msra.mxu0 0
    %4959 = vmatprep.mubr.bf16.mxu0 0
    %4960 = vmatmul.mubr.bf16.gmra.mrb[0].mxu0 %v4922
    %v4961 = vpop.f32.mrb[0].mxu0
    %v4962 = vadd.f32 %v4907, %v4961
    %v4963 = vpop.f32.mrb[0].mxu0
    %v4964 = vpop.f32.mrb[0].mxu0
    %v4965 = vadd.f32 %v4907, %v4964
    %v4966 = vpop.f32.mrb[0].mxu0
    %4967 = vmatprep.mubr.bf16.mxu0 0
    %4968 = vmatmul.mubr.bf16.gmra.mrb[0].mxu0 %v4925
    %v4969 = vpop.f32.mrb[0].mxu0
    %v4970 = vadd.f32 %v4907, %v4969
    %v4971 = vpop.f32.mrb[0].mxu0
    %v4972 = vpop.f32.mrb[0].mxu0
    %v4973 = vadd.f32 %v4907, %v4972
    %v4974 = vpop.f32.mrb[0].mxu0
    %4975 = vdwg.mxu0
    %v4976 = vmax.f32 %v4962, 0.0
    %v4977 = vmax.f32 %v4965, 0.0
    %v4978 = vmax.f32 %v4970, 0.0
    %v4979 = vmax.f32 %v4973, 0.0
    %v4980 = vpack.c.bf16 %v4977, %v4976
    %v4981 = vpack.c.bf16 %v4979, %v4978
    %v4982 = vld [vmem:[%s22] sm:$0xf]
    %v4983 = vld [vmem:[%s22 + $0x4] sm:$0xf]
    %v4984 = vld [vmem:[%s22 + $0x8] sm:$0xf]
    %v4985 = vld [vmem:[%s22 + $0xc] sm:$0xf]
    %v4986 = vld [vmem:[%s22 + $0x10] sm:$0xf]
    %v4987 = vld [vmem:[%s22 + $0x14] sm:$0xf]
    %v4988 = vld [vmem:[%s22 + $0x18] sm:$0xf]
    %v4989 = vld [vmem:[%s22 + $0x1c] sm:$0xf]
    %v4990 = vld [vmem:[%s23] sm:$0x1]
    %v4992 = vlaneseq
    %v4993 = vshrl.u32 %v4992, 7
    %v4994 = vsub.s32 0, %v4993
    %v4995 = vrot.slane %v4990, %v4994
    %v5005 = vunpack.c.l.b16 %v4982
    %v5006 = vunpack.c.l.b16 %v4983
    %v5007 = vunpack.c.l.b16 %v4984
    %v5008 = vunpack.c.l.b16 %v4985
    %v5009 = vunpack.c.l.b16 %v4986
    %v5010 = vunpack.c.l.b16 %v4987
    %v5011 = vunpack.c.l.b16 %v4988
    %v5012 = vunpack.c.l.b16 %v4989
    %v5013 = vpack.c.b16 %v5006, %v5005
    %v5014 = vpack.c.b16 %v5008, %v5007
    %v5015 = vpack.c.b16 %v5010, %v5009
    %v5016 = vpack.c.b16 %v5012, %v5011
    %vm5021 = vcmask 523264
    %v5023 = vsel %vm5021, %v4980, 0
    %v5026 = vsel %vm5021, %v4981, 0
    %5028 = vmatprep.subr.bf16.mxu0 0
    %5029 = vmatpush1.bf16.msra.mxu0 %v5013
    %5030 = vmatprep.subr.bf16.mxu0 0
    %5031 = vmatpush1.bf16.msra.mxu0 %v5014
    %5032 = vmatprep.subr.bf16.mxu0 0
    %5033 = vmatpush1.bf16.msra.mxu0 %v5015
    %5034 = vmatprep.subr.bf16.mxu0 0
    %5035 = vmatpush1.bf16.msra.mxu0 %v5016
    %5036 = vmatprep.subr.bf16.mxu0 0
    %5037 = vmatpush1.bf16.msra.mxu0 0
    %5038 = vmatprep.subr.bf16.mxu0 0
    %5039 = vmatpush1.bf16.msra.mxu0 0
    %5040 = vmatprep.subr.bf16.mxu0 0
    %5041 = vmatpush1.bf16.msra.mxu0 0
    %5042 = vmatprep.subr.bf16.mxu0 0
    %5043 = vmatpush1.bf16.msra.mxu0 0
    %5044 = vmatprep.subr.bf16.mxu0 0
    %5045 = vmatpush1.bf16.msra.mxu0 0
    %5046 = vmatprep.subr.bf16.mxu0 0
    %5047 = vmatpush1.bf16.msra.mxu0 0
    %5048 = vmatprep.subr.bf16.mxu0 0
    %5049 = vmatpush1.bf16.msra.mxu0 0
    %5050 = vmatprep.subr.bf16.mxu0 0
    %5051 = vmatpush1.bf16.msra.mxu0 0
    %5052 = vmatprep.subr.bf16.mxu0 0
    %5053 = vmatpush1.bf16.msra.mxu0 0
    %5054 = vmatprep.subr.bf16.mxu0 0
    %5055 = vmatpush1.bf16.msra.mxu0 0
    %5056 = vmatprep.subr.bf16.mxu0 0
    %5057 = vmatpush1.bf16.msra.mxu0 0
    %5058 = vmatprep.subr.bf16.mxu0 0
    %5059 = vmatpush1.bf16.msra.mxu0 0
    %5060 = vmatprep.mubr.bf16.mxu0 0
    %5061 = vmatmul.mubr.bf16.gmra.mrb[0].mxu0 %v5023
    %v5062 = vpop.f32.mrb[0].mxu0
    %v5063 = vadd.f32 %v4995, %v5062
    %v5064 = vpop.f32.mrb[0].mxu0
    %v5065 = vpop.f32.mrb[0].mxu0
    %v5066 = vadd.f32 %v4995, %v5065
    %v5067 = vpop.f32.mrb[0].mxu0
    %5068 = vmatprep.mubr.bf16.mxu0 0
    %5069 = vmatmul.mubr.bf16.gmra.mrb[0].mxu0 %v5026
    %v5070 = vpop.f32.mrb[0].mxu0
    %v5071 = vadd.f32 %v4995, %v5070
    %v5072 = vpop.f32.mrb[0].mxu0
    %v5073 = vpop.f32.mrb[0].mxu0
    %v5074 = vadd.f32 %v4995, %v5073
    %v5075 = vpop.f32.mrb[0].mxu0
    %5076 = vdwg.mxu0
    %v5077 = vadd.f32 %v5063, %v4892
    %v5078 = vadd.f32 %v5066, %v4893
    %v5079 = vadd.f32 %v5071, %v4894
    %v5080 = vadd.f32 %v5074, %v4895
    %v5081 = vsel %vm386, %v5077, 0.0
    %5082 = vadd.xlane.f32.xlu0 %v5081
    %v5083 = vpop.xlane.xlu0 %5082
    %v5084 = vsel %vm386, %v5078, 0.0
    %5085 = vadd.xlane.f32.xlu0 %v5084
    %v5086 = vpop.xlane.xlu0 %5085
    %v5087 = vsel %vm386, %v5079, 0.0
    %5088 = vadd.xlane.f32.xlu0 %v5087
    %v5089 = vpop.xlane.xlu0 %5088
    %v5090 = vsel %vm386, %v5080, 0.0
    %5091 = vadd.xlane.f32.xlu0 %v5090
    %v5092 = vpop.xlane.xlu0 %5091
    %v5093 = vmul.f32 %v5083, %v2543
    %v5094 = vmul.f32 %v5086, %v2543
    %v5095 = vmul.f32 %v5089, %v2543
    %v5096 = vmul.f32 %v5092, %v2543
    %v5097 = vsub.f32 %v5077, %v5093
    %v5098 = vsub.f32 %v5078, %v5094
    %v5099 = vsub.f32 %v5079, %v5095
    %v5100 = vsub.f32 %v5080, %v5096
    %v5101 = vmul.f32 %v5097, %v5097
    %v5102 = vmul.f32 %v5098, %v5098
    %v5103 = vmul.f32 %v5099, %v5099
    %v5104 = vmul.f32 %v5100, %v5100
    %v5105 = vsel %vm386, %v5101, 0.0
    %5106 = vadd.xlane.f32.xlu0 %v5105
    %v5107 = vpop.xlane.xlu0 %5106
    %v5108 = vsel %vm386, %v5102, 0.0
    %5109 = vadd.xlane.f32.xlu0 %v5108
    %v5110 = vpop.xlane.xlu0 %5109
    %v5111 = vsel %vm386, %v5103, 0.0
    %5112 = vadd.xlane.f32.xlu0 %v5111
    %v5113 = vpop.xlane.xlu0 %5112
    %v5114 = vsel %vm386, %v5104, 0.0
    %5115 = vadd.xlane.f32.xlu0 %v5114
    %v5116 = vpop.xlane.xlu0 %5115
    %v5117 = vmul.f32 %v5107, %v2543
    %v5118 = vmul.f32 %v5110, %v2543
    %v5119 = vmul.f32 %v5113, %v2543
    %v5120 = vmul.f32 %v5116, %v2543
    %v5121 = vadd.f32 %v5117, 1e-05
    %v5122 = vadd.f32 %v5118, 1e-05
    %v5123 = vadd.f32 %v5119, 1e-05
    %v5124 = vadd.f32 %v5120, 1e-05
    %v5125 = vrsqrt.pop %v5121
    %v5126 = vrsqrt.pop %v5122
    %v5127 = vrsqrt.pop %v5123
    %v5128 = vrsqrt.pop %v5124
    %v5129 = vmul.f32 %v5097, %v5125
    %v5130 = vmul.f32 %v5098, %v5126
    %v5131 = vmul.f32 %v5099, %v5127
    %v5132 = vmul.f32 %v5100, %v5128
    %v5133 = vmul.f32 %v5129, %v4880
    %v5134 = vmul.f32 %v5130, %v4880
    %v5135 = vmul.f32 %v5131, %v4880
    %v5136 = vmul.f32 %v5132, %v4880
    %v5137 = vadd.f32 %v5133, %v4890
    %v5138 = vadd.f32 %v5134, %v4890
    %v5139 = vadd.f32 %v5135, %v4890
    %v5140 = vadd.f32 %v5136, %v4890
    %5141 = vst.msk [vmem:[#allocation25] sm:$0xff] %vm386, %v5137
    %5142 = vst.msk [vmem:[#allocation25 + $0x8] sm:$0xff] %vm386, %v5138
    %5143 = vst.msk [vmem:[#allocation25 + $0x10] sm:$0xff] %vm386, %v5139
    %5144 = vst.msk [vmem:[#allocation25 + $0x18] sm:$0xff] %vm386, %v5140
    // Predicated region
    $region170: #{tpu_custom_call.1} parent=1 // pred_check
      _
    $region171: #{tpu_custom_call.1} parent=1 // pred_check_branch
      %5146 = sbr.rel (0) target = $region173
    $region172: #{tpu_custom_call.1} parent=1 // pred_region
      %s5148 = ssub.s32 512, 512
      %5149 = vsyncadd [#allocation4], %s5148
      %s5150 = sshll.u32 [#allocation25], 4
      %s5151 = int_to_ptr.vmem [resolvable:$true] %s5150
      %5156 = dma.vmem_to_hbm [thread:$0]  %s5151, 512, %s28, [#allocation4], 128, 128, 8
    $region173: #{tpu_custom_call.1} parent=1 // pred_fallthru
      _
    // Predicated region
    $region174: #{tpu_custom_call.1} parent=1 // pred_check
      _
    $region175: #{tpu_custom_call.1} parent=1 // pred_check_branch
      %5158 = sbr.rel (0) target = $region177
    $region176: #{tpu_custom_call.1} parent=1 // pred_region
      %5159 = dma.done [#allocation4], 512
    $region177: #{tpu_custom_call.1} parent=1 // pred_fallthru
      _
    %5160 = vsyncpa [#allocation3], 1
    %5161 = vsyncpa [#allocation6], 1
    %5162 = vsyncpa [#allocation9], 1
    %5163 = vsyncpa [#allocation12], 1
    %5164 = vsyncpa [#allocation15], 1
    %5165 = vsyncpa [#allocation18], 1
    %5166 = vsyncpa [#allocation21], 1
    %5167 = vsyncpa [#allocation24], 1
    %5168 = vsyncpa [#allocation4], 1

</llo_original>
